<compile_context>
chip_gen: v7x
topology: tpu7x:2x2x1
jax: 0.10.0
libtpu: 0.0.40
codegen_flags: <defaults>
</compile_context>

<pallas_src>
import numpy as np
import jax
import jax.numpy as jnp
from jax.experimental import pallas as pl
from jax.experimental.pallas import tpu as pltpu

NEG_SLOPE = 0.01            # torch.nn.LeakyReLU default negative_slope
LANE = 128                  # TPU lane width
SUBLANE = 8                 # TPU sublane count
VMEM_LIMIT = 64 * 1024 * 1024  # explicit scoped-VMEM budget (fits v5e/v6e/v7x)


def _round_up(x, m):
    return (x + m - 1) // m * m


def _choose_tm(m):
    """Row-tile size: big enough to amortize per-step overhead, VMEM-safe."""
    if m >= 512:
        return 512
    return _round_up(max(m, SUBLANE), SUBLANE)


# ----------------------------- Pallas kernels ------------------------------

def _conv_kernel(taps_ref, w_ref, b_ref, o_ref):
    """One M-tile of: LeakyReLU(taps @ W + b).

    taps_ref: (tm, 9*Cin)   bf16
    w_ref:    (9*Cin, Cp)   bf16 (resident across the grid)
    b_ref:    (1, Cp)       f32
    o_ref:    (tm, Cp)      bf16
    """
    acc = jnp.dot(taps_ref[...], w_ref[...], preferred_element_type=jnp.float32)
    acc = acc + b_ref[...]
    o_ref[...] = jnp.where(acc > 0, acc, NEG_SLOPE * acc).astype(o_ref.dtype)


def _final_kernel(taps_ref, wc_ref, bc_ref, wl_ref, bl_ref, o_ref):
    """Fused last conv (spatial 2x2 -> 1x1) + Linear head.

    taps_ref: (Mp, 9*Cin) bf16   (Mp = batch padded to 8 rows)
    wc_ref:   (9*Cin, Cp) bf16   conv weight
    bc_ref:   (1, Cp)     f32    conv bias
    wl_ref:   (Cp, Cp)    bf16   linear weight, already transposed
    bl_ref:   (1, Cp)     f32    linear bias
    o_ref:    (Mp, Cp)    f32
    """
    h = jnp.dot(taps_ref[...], wc_ref[...], preferred_element_type=jnp.float32)
    h = h + bc_ref[...]
    h = jnp.where(h > 0, h, NEG_SLOPE * h)
    y = jnp.dot(h.astype(jnp.bfloat16), wl_ref[...],
                preferred_element_type=jnp.float32)
    o_ref[...] = (y + bl_ref[...]).astype(o_ref.dtype)


# ------------------------------ layout glue ---------------------------------

def _im2col_3x3_s2(x_nhwc):
    """(N,H,W,C) -> (N*OH*OW, 9*C), taps major / channel minor, lane-dense."""
    n, h, w, c = x_nhwc.shape
    oh, ow = h // 2, w // 2
    xp = jnp.pad(x_nhwc, ((0, 0), (1, 1), (1, 1), (0, 0)))
    cols = [xp[:, kh:kh + 2 * oh:2, kw:kw + 2 * ow:2, :]
            for kh in range(3) for kw in range(3)]           # 9 x (N,OH,OW,C)
    return jnp.concatenate(cols, axis=-1).reshape(n * oh * ow, 9 * c)


def _pack_conv_weight(w_oihw, cin_pad, cout_pad):
    """(Cout,Cin,3,3) -> (9*cin_pad, cout_pad) bf16, matching im2col ordering."""
    cout, cin, kh, kw = w_oihw.shape
    wt = jnp.transpose(w_oihw, (2, 3, 1, 0))                 # (3,3,Cin,Cout)
    wt = jnp.pad(wt, ((0, 0), (0, 0), (0, cin_pad - cin), (0, cout_pad - cout)))
    return wt.reshape(kh * kw * cin_pad, cout_pad).astype(jnp.bfloat16)


def _pad_bias(b, cout_pad):
    return jnp.pad(b.astype(jnp.float32), (0, cout_pad - b.shape[0])).reshape(1, cout_pad)


# ------------------------------ JAX wrappers --------------------------------

def conv3x3_s2_lrelu(x_nhwc, w_oihw, b, cout_pad):
    """Conv2d(k=3, s=2, p=1) + LeakyReLU as one tiled long-K matmul kernel."""
    n, h, w, c = x_nhwc.shape
    assert h % 2 == 0 and w % 2 == 0, "stride-2 conv expects even spatial dims"
    oh, ow = h // 2, w // 2
    m = n * oh * ow
    k = 9 * c

    taps = _im2col_3x3_s2(x_nhwc).astype(jnp.bfloat16)       # (M, 9C)
    w9 = _pack_conv_weight(w_oihw, c, cout_pad)              # (9C, Cp) bf16
    b2 = _pad_bias(b, cout_pad)                              # (1, Cp)  f32

    tm = _choose_tm(m)
    mp = _round_up(m, tm)
    if mp != m:
        taps = jnp.pad(taps, ((0, mp - m), (0, 0)))
    grid_m = mp // tm

    out = pl.pallas_call(
        _conv_kernel,
        out_shape=jax.ShapeDtypeStruct((mp, cout_pad), jnp.bfloat16),
        grid=(grid_m,),
        in_specs=[
            pl.BlockSpec((tm, k), lambda i: (i, 0)),          # taps: tiled over M
            pl.BlockSpec((k, cout_pad), lambda i: (0, 0)),    # weights: resident
            pl.BlockSpec((1, cout_pad), lambda i: (0, 0)),    # bias: resident
        ],
        out_specs=pl.BlockSpec((tm, cout_pad), lambda i: (i, 0)),
        compiler_params=pltpu.CompilerParams(
            dimension_semantics=("parallel",),
            vmem_limit_bytes=VMEM_LIMIT),
    )(taps, w9, b2)
    return out[:m].reshape(n, oh, ow, cout_pad)


def final_conv_linear(x_nhwc, w_oihw, b, lin_w, lin_b, out_c, cout_pad):
    """Fused: last Conv2d(k=3,s=2,p=1) + LeakyReLU + Linear(out_c, out_c)."""
    n, h, w, c = x_nhwc.shape
    assert h == 2 and w == 2, "fused tail expects the last conv's input to be 2x2"
    k = 9 * c

    taps = _im2col_3x3_s2(x_nhwc).astype(jnp.bfloat16)       # (N, 9C)
    wc = _pack_conv_weight(w_oihw, c, cout_pad)              # (9C, Cp) bf16
    bc = _pad_bias(b, cout_pad)
    wl = jnp.pad(jnp.transpose(lin_w),
                 ((0, cout_pad - out_c), (0, cout_pad - out_c))).astype(jnp.bfloat16)
    bl = _pad_bias(lin_b, cout_pad)

    mp = _round_up(max(n, SUBLANE), SUBLANE)                 # pad batch to 8 rows
    taps = jnp.pad(taps, ((0, mp - n), (0, 0)))

    out = pl.pallas_call(
        _final_kernel,
        out_shape=jax.ShapeDtypeStruct((mp, cout_pad), jnp.float32),
        grid=(1,),
        in_specs=[
            pl.BlockSpec((mp, k), lambda i: (0, 0)),
            pl.BlockSpec((k, cout_pad), lambda i: (0, 0)),
            pl.BlockSpec((1, cout_pad), lambda i: (0, 0)),
            pl.BlockSpec((cout_pad, cout_pad), lambda i: (0, 0)),
            pl.BlockSpec((1, cout_pad), lambda i: (0, 0)),
        ],
        out_specs=pl.BlockSpec((mp, cout_pad), lambda i: (0, 0)),
        compiler_params=pltpu.CompilerParams(
            dimension_semantics=("arbitrary",),
            vmem_limit_bytes=VMEM_LIMIT),
    )(taps, wc, bc, wl, bl)
    return out[:n, :out_c]


def gradual_style_block(x_nchw, params, out_c):
    """Forward pass; input is NCHW like PyTorch."""
    n, _, h, w = x_nchw.shape
    assert h == w, "expected square spatial input"
    assert h & (h - 1) == 0, "spatial must be a power of two (reduces to 1x1)"
    num_pools = len(params["convs"])
    assert h == (1 << num_pools), "conv stack must reduce spatial exactly to 1x1"

    cp = _round_up(out_c, LANE)                               # lane-dense channels
    x = jnp.transpose(x_nchw, (0, 2, 3, 1)).astype(jnp.bfloat16)  # NCHW -> NHWC bf16

    for (wc, bc) in params["convs"][:-1]:
        x = conv3x3_s2_lrelu(x, wc, bc, cp)

    w_last, b_last = params["convs"][-1]
    lw, lb = params["linear"]
    return final_conv_linear(x, w_last, b_last, lw, lb, out_c, cp)


# ------------------------------ parameters -----------------------------------

def init_params(key, in_c, out_c, spatial):
    """Deterministic synthetic parameters matching the module's shapes."""
    num_pools = int(np.log2(spatial))
    convs = []
    cin = in_c
    for _ in range(num_pools):
        key, kw, kb = jax.random.split(key, 3)
        fan_in = cin * 9
        w = jax.random.normal(kw, (out_c, cin, 3, 3), jnp.float32) / np.sqrt(fan_in)
        bias = 0.01 * jax.random.normal(kb, (out_c,), jnp.float32)
        convs.append((w, bias))
        cin = out_c
    key, kw, kb = jax.random.split(key, 3)
    lin_w = jax.random.normal(kw, (out_c, out_c), jnp.float32) / np.sqrt(out_c)
    lin_b = 0.01 * jax.random.normal(kb, (out_c,), jnp.float32)
    return {"convs": convs, "linear": (lin_w, lin_b)}


# ----------------------------- pure-JAX reference ---------------------------

def reference(x_nchw, params, out_c):
    x = x_nchw
    for (w, b) in params["convs"]:
        x = jax.lax.conv_general_dilated(
            x, w, window_strides=(2, 2), padding=((1, 1), (1, 1)),
            dimension_numbers=("NCHW", "OIHW", "NCHW"))
        x = x + b.reshape(1, -1, 1, 1)
        x = jnp.where(x > 0, x, NEG_SLOPE * x)
    x = x.reshape(-1, out_c)
    lw, lb = params["linear"]
    return x @ lw.T + lb


# ---------------------------------- main -------------------------------------

if __name__ == "__main__":
    in_c, out_c, spatial, batch = 4, 32, 16, 2   # num_pools = log2(16) = 4 convs

    key = jax.random.PRNGKey(0)
    kx, kp = jax.random.split(key)
    x = jax.random.normal(kx, (batch, in_c, spatial, spatial), jnp.float32)
    params = init_params(kp, in_c, out_c, spatial)

    fwd = jax.jit(lambda xx, pp: gradual_style_block(xx, pp, out_c))
    out = jax.block_until_ready(fwd(x, params))

    ref = np.asarray(reference(x, params, out_c))
    out_np = np.asarray(out)
    assert out_np.shape == (batch, out_c), out_np.shape
    # bf16 inputs/weights with f32 accumulation vs full-f32 reference.
    max_err = float(np.max(np.abs(out_np - ref)))
    assert np.allclose(out_np, ref, atol=3e-2, rtol=3e-2), max_err

    print("KERNEL_OK")
</pallas_src>

<mosaic_0001>
module attributes {stable_mosaic.version = 11 : i64} {
  func.func @_conv_kernel(%arg0: i32, %arg1: memref<128x36xbf16, #tpu.memory_space<vmem>>, %arg2: memref<36x128xbf16, #tpu.memory_space<vmem>>, %arg3: memref<1x128xf32, #tpu.memory_space<vmem>>, %arg4: memref<128x128xbf16, #tpu.memory_space<vmem>>) attributes {dimension_semantics = [#tpu.dimension_semantics<parallel>], iteration_bounds = array<i64: 1>, scalar_prefetch = 0 : i64, scratch_operands = 0 : i64, tpu.core_type = #tpu.core_type<tc>, window_params = [{transform_indices = @transform_0, window_bounds = array<i64: 128, 36>}, {pipeline_mode = #tpu.pipeline_mode<synchronous>, transform_indices = @transform_1, window_bounds = array<i64: 36, 128>}, {pipeline_mode = #tpu.pipeline_mode<synchronous>, transform_indices = @transform_2, window_bounds = array<i64: 1, 128>}, {transform_indices = @transform_3, window_bounds = array<i64: 128, 128>}]} {
    %c0 = arith.constant 0 : index
    %c0_0 = arith.constant 0 : index
    %0 = vector.load %arg1[%c0, %c0_0] : memref<128x36xbf16, #tpu.memory_space<vmem>>, vector<128x36xbf16>
    %c0_1 = arith.constant 0 : index
    %c0_2 = arith.constant 0 : index
    %1 = vector.load %arg2[%c0_1, %c0_2] : memref<36x128xbf16, #tpu.memory_space<vmem>>, vector<36x128xbf16>
    %cst = arith.constant dense<0.000000e+00> : vector<128x128xf32>
    %2 = tpu.matmul %0, %1, %cst {dimension_numbers = #tpu.dot_dimension_numbers<[1], [0], [0], [1], [0, 0, 1, 1], [], []>} : vector<128x36xbf16>, vector<36x128xbf16>, vector<128x128xf32> -> vector<128x128xf32>
    %c0_3 = arith.constant 0 : index
    %c0_4 = arith.constant 0 : index
    %3 = vector.load %arg3[%c0_3, %c0_4] : memref<1x128xf32, #tpu.memory_space<vmem>>, vector<1x128xf32>
    %4 = vector.broadcast %3 : vector<1x128xf32> to vector<128x128xf32>
    %5 = arith.addf %2, %4 : vector<128x128xf32>
    %cst_5 = arith.constant 0.000000e+00 : f32
    %6 = vector.broadcast %cst_5 : f32 to vector<128x128xf32>
    %7 = arith.cmpf ogt, %5, %6 : vector<128x128xf32>
    %cst_6 = arith.constant 0.00999999977 : f32
    %8 = vector.broadcast %cst_6 : f32 to vector<128x128xf32>
    %9 = arith.mulf %8, %5 : vector<128x128xf32>
    %10 = arith.select %7, %5, %9 : vector<128x128xi1>, vector<128x128xf32>
    %11 = arith.truncf %10 : vector<128x128xf32> to vector<128x128xbf16>
    %c0_7 = arith.constant 0 : index
    %c0_8 = arith.constant 0 : index
    %12 = vector.load %arg4[%c0_7, %c0_8] : memref<128x128xbf16, #tpu.memory_space<vmem>>, vector<128x128xbf16>
    tpu.vector_store %arg4[%c0_7, %c0_8], %11 {strides = array<i32>} : memref<128x128xbf16, #tpu.memory_space<vmem>>, vector<128x128xbf16>,
    return
  }
  func.func @transform_0(%arg0: i32) -> (i32, i32) {
    %c0_i32 = arith.constant 0 : i32
    %c0_i32_0 = arith.constant 0 : i32
    return %arg0, %c0_i32 : i32, i32
  }
  func.func @transform_1(%arg0: i32) -> (i32, i32) {
    %c0_i32 = arith.constant 0 : i32
    %c0_i32_0 = arith.constant 0 : i32
    %c0_i32_1 = arith.constant 0 : i32
    return %c0_i32, %c0_i32_0 : i32, i32
  }
  func.func @transform_2(%arg0: i32) -> (i32, i32) {
    %c0_i32 = arith.constant 0 : i32
    %c0_i32_0 = arith.constant 0 : i32
    %c0_i32_1 = arith.constant 0 : i32
    return %c0_i32, %c0_i32_0 : i32, i32
  }
  func.func @transform_3(%arg0: i32) -> (i32, i32) {
    %c0_i32 = arith.constant 0 : i32
    %c0_i32_0 = arith.constant 0 : i32
    return %arg0, %c0_i32 : i32, i32
  }
}

module attributes {stable_mosaic.version = 11 : i64} {
  func.func @_conv_kernel(%arg0: i32, %arg1: memref<32x1152xbf16, #tpu.memory_space<vmem>>, %arg2: memref<1152x128xbf16, #tpu.memory_space<vmem>>, %arg3: memref<1x128xf32, #tpu.memory_space<vmem>>, %arg4: memref<32x128xbf16, #tpu.memory_space<vmem>>) attributes {dimension_semantics = [#tpu.dimension_semantics<parallel>], iteration_bounds = array<i64: 1>, scalar_prefetch = 0 : i64, scratch_operands = 0 : i64, tpu.core_type = #tpu.core_type<tc>, window_params = [{transform_indices = @transform_0, window_bounds = array<i64: 32, 1152>}, {pipeline_mode = #tpu.pipeline_mode<synchronous>, transform_indices = @transform_1, window_bounds = array<i64: 1152, 128>}, {pipeline_mode = #tpu.pipeline_mode<synchronous>, transform_indices = @transform_2, window_bounds = array<i64: 1, 128>}, {transform_indices = @transform_3, window_bounds = array<i64: 32, 128>}]} {
    %c0 = arith.constant 0 : index
    %c0_0 = arith.constant 0 : index
    %0 = vector.load %arg1[%c0, %c0_0] : memref<32x1152xbf16, #tpu.memory_space<vmem>>, vector<32x1152xbf16>
    %c0_1 = arith.constant 0 : index
    %c0_2 = arith.constant 0 : index
    %1 = vector.load %arg2[%c0_1, %c0_2] : memref<1152x128xbf16, #tpu.memory_space<vmem>>, vector<1152x128xbf16>
    %cst = arith.constant dense<0.000000e+00> : vector<32x128xf32>
    %2 = tpu.matmul %0, %1, %cst {dimension_numbers = #tpu.dot_dimension_numbers<[1], [0], [0], [1], [0, 0, 1, 1], [], []>} : vector<32x1152xbf16>, vector<1152x128xbf16>, vector<32x128xf32> -> vector<32x128xf32>
    %c0_3 = arith.constant 0 : index
    %c0_4 = arith.constant 0 : index
    %3 = vector.load %arg3[%c0_3, %c0_4] : memref<1x128xf32, #tpu.memory_space<vmem>>, vector<1x128xf32>
    %4 = vector.broadcast %3 : vector<1x128xf32> to vector<32x128xf32>
    %5 = arith.addf %2, %4 : vector<32x128xf32>
    %cst_5 = arith.constant 0.000000e+00 : f32
    %6 = vector.broadcast %cst_5 : f32 to vector<32x128xf32>
    %7 = arith.cmpf ogt, %5, %6 : vector<32x128xf32>
    %cst_6 = arith.constant 0.00999999977 : f32
    %8 = vector.broadcast %cst_6 : f32 to vector<32x128xf32>
    %9 = arith.mulf %8, %5 : vector<32x128xf32>
    %10 = arith.select %7, %5, %9 : vector<32x128xi1>, vector<32x128xf32>
    %11 = arith.truncf %10 : vector<32x128xf32> to vector<32x128xbf16>
    %c0_7 = arith.constant 0 : index
    %c0_8 = arith.constant 0 : index
    %12 = vector.load %arg4[%c0_7, %c0_8] : memref<32x128xbf16, #tpu.memory_space<vmem>>, vector<32x128xbf16>
    tpu.vector_store %arg4[%c0_7, %c0_8], %11 {strides = array<i32>} : memref<32x128xbf16, #tpu.memory_space<vmem>>, vector<32x128xbf16>,
    return
  }
  func.func @transform_0(%arg0: i32) -> (i32, i32) {
    %c0_i32 = arith.constant 0 : i32
    %c0_i32_0 = arith.constant 0 : i32
    return %arg0, %c0_i32 : i32, i32
  }
  func.func @transform_1(%arg0: i32) -> (i32, i32) {
    %c0_i32 = arith.constant 0 : i32
    %c0_i32_0 = arith.constant 0 : i32
    %c0_i32_1 = arith.constant 0 : i32
    return %c0_i32, %c0_i32_0 : i32, i32
  }
  func.func @transform_2(%arg0: i32) -> (i32, i32) {
    %c0_i32 = arith.constant 0 : i32
    %c0_i32_0 = arith.constant 0 : i32
    %c0_i32_1 = arith.constant 0 : i32
    return %c0_i32, %c0_i32_0 : i32, i32
  }
  func.func @transform_3(%arg0: i32) -> (i32, i32) {
    %c0_i32 = arith.constant 0 : i32
    %c0_i32_0 = arith.constant 0 : i32
    return %arg0, %c0_i32 : i32, i32
  }
}

module attributes {stable_mosaic.version = 11 : i64} {
  func.func @_conv_kernel(%arg0: i32, %arg1: memref<8x1152xbf16, #tpu.memory_space<vmem>>, %arg2: memref<1152x128xbf16, #tpu.memory_space<vmem>>, %arg3: memref<1x128xf32, #tpu.memory_space<vmem>>, %arg4: memref<8x128xbf16, #tpu.memory_space<vmem>>) attributes {dimension_semantics = [#tpu.dimension_semantics<parallel>], iteration_bounds = array<i64: 1>, scalar_prefetch = 0 : i64, scratch_operands = 0 : i64, tpu.core_type = #tpu.core_type<tc>, window_params = [{transform_indices = @transform_0, window_bounds = array<i64: 8, 1152>}, {pipeline_mode = #tpu.pipeline_mode<synchronous>, transform_indices = @transform_1, window_bounds = array<i64: 1152, 128>}, {pipeline_mode = #tpu.pipeline_mode<synchronous>, transform_indices = @transform_2, window_bounds = array<i64: 1, 128>}, {transform_indices = @transform_3, window_bounds = array<i64: 8, 128>}]} {
    %c0 = arith.constant 0 : index
    %c0_0 = arith.constant 0 : index
    %0 = vector.load %arg1[%c0, %c0_0] : memref<8x1152xbf16, #tpu.memory_space<vmem>>, vector<8x1152xbf16>
    %c0_1 = arith.constant 0 : index
    %c0_2 = arith.constant 0 : index
    %1 = vector.load %arg2[%c0_1, %c0_2] : memref<1152x128xbf16, #tpu.memory_space<vmem>>, vector<1152x128xbf16>
    %cst = arith.constant dense<0.000000e+00> : vector<8x128xf32>
    %2 = tpu.matmul %0, %1, %cst {dimension_numbers = #tpu.dot_dimension_numbers<[1], [0], [0], [1], [0, 0, 1, 1], [], []>} : vector<8x1152xbf16>, vector<1152x128xbf16>, vector<8x128xf32> -> vector<8x128xf32>
    %c0_3 = arith.constant 0 : index
    %c0_4 = arith.constant 0 : index
    %3 = vector.load %arg3[%c0_3, %c0_4] : memref<1x128xf32, #tpu.memory_space<vmem>>, vector<1x128xf32>
    %4 = vector.broadcast %3 : vector<1x128xf32> to vector<8x128xf32>
    %5 = arith.addf %2, %4 : vector<8x128xf32>
    %cst_5 = arith.constant 0.000000e+00 : f32
    %6 = vector.broadcast %cst_5 : f32 to vector<8x128xf32>
    %7 = arith.cmpf ogt, %5, %6 : vector<8x128xf32>
    %cst_6 = arith.constant 0.00999999977 : f32
    %8 = vector.broadcast %cst_6 : f32 to vector<8x128xf32>
    %9 = arith.mulf %8, %5 : vector<8x128xf32>
    %10 = arith.select %7, %5, %9 : vector<8x128xi1>, vector<8x128xf32>
    %11 = arith.truncf %10 : vector<8x128xf32> to vector<8x128xbf16>
    %c0_7 = arith.constant 0 : index
    %c0_8 = arith.constant 0 : index
    %12 = vector.load %arg4[%c0_7, %c0_8] : memref<8x128xbf16, #tpu.memory_space<vmem>>, vector<8x128xbf16>
    tpu.vector_store %arg4[%c0_7, %c0_8], %11 {strides = array<i32>} : memref<8x128xbf16, #tpu.memory_space<vmem>>, vector<8x128xbf16>,
    return
  }
  func.func @transform_0(%arg0: i32) -> (i32, i32) {
    %c0_i32 = arith.constant 0 : i32
    %c0_i32_0 = arith.constant 0 : i32
    return %arg0, %c0_i32 : i32, i32
  }
  func.func @transform_1(%arg0: i32) -> (i32, i32) {
    %c0_i32 = arith.constant 0 : i32
    %c0_i32_0 = arith.constant 0 : i32
    %c0_i32_1 = arith.constant 0 : i32
    return %c0_i32, %c0_i32_0 : i32, i32
  }
  func.func @transform_2(%arg0: i32) -> (i32, i32) {
    %c0_i32 = arith.constant 0 : i32
    %c0_i32_0 = arith.constant 0 : i32
    %c0_i32_1 = arith.constant 0 : i32
    return %c0_i32, %c0_i32_0 : i32, i32
  }
  func.func @transform_3(%arg0: i32) -> (i32, i32) {
    %c0_i32 = arith.constant 0 : i32
    %c0_i32_0 = arith.constant 0 : i32
    return %arg0, %c0_i32 : i32, i32
  }
}

module attributes {stable_mosaic.version = 11 : i64} {
  func.func @_final_kernel(%arg0: i32, %arg1: memref<8x1152xbf16, #tpu.memory_space<vmem>>, %arg2: memref<1152x128xbf16, #tpu.memory_space<vmem>>, %arg3: memref<1x128xf32, #tpu.memory_space<vmem>>, %arg4: memref<128x128xbf16, #tpu.memory_space<vmem>>, %arg5: memref<1x128xf32, #tpu.memory_space<vmem>>, %arg6: memref<8x128xf32, #tpu.memory_space<vmem>>) attributes {dimension_semantics = [#tpu.dimension_semantics<arbitrary>], iteration_bounds = array<i64: 1>, scalar_prefetch = 0 : i64, scratch_operands = 0 : i64, tpu.core_type = #tpu.core_type<tc>, window_params = [{pipeline_mode = #tpu.pipeline_mode<synchronous>, transform_indices = @transform_0, window_bounds = array<i64: 8, 1152>}, {pipeline_mode = #tpu.pipeline_mode<synchronous>, transform_indices = @transform_1, window_bounds = array<i64: 1152, 128>}, {pipeline_mode = #tpu.pipeline_mode<synchronous>, transform_indices = @transform_2, window_bounds = array<i64: 1, 128>}, {pipeline_mode = #tpu.pipeline_mode<synchronous>, transform_indices = @transform_3, window_bounds = array<i64: 128, 128>}, {pipeline_mode = #tpu.pipeline_mode<synchronous>, transform_indices = @transform_4, window_bounds = array<i64: 1, 128>}, {pipeline_mode = #tpu.pipeline_mode<synchronous>, transform_indices = @transform_5, window_bounds = array<i64: 8, 128>}]} {
    %c0 = arith.constant 0 : index
    %c0_0 = arith.constant 0 : index
    %0 = vector.load %arg1[%c0, %c0_0] : memref<8x1152xbf16, #tpu.memory_space<vmem>>, vector<8x1152xbf16>
    %c0_1 = arith.constant 0 : index
    %c0_2 = arith.constant 0 : index
    %1 = vector.load %arg2[%c0_1, %c0_2] : memref<1152x128xbf16, #tpu.memory_space<vmem>>, vector<1152x128xbf16>
    %cst = arith.constant dense<0.000000e+00> : vector<8x128xf32>
    %2 = tpu.matmul %0, %1, %cst {dimension_numbers = #tpu.dot_dimension_numbers<[1], [0], [0], [1], [0, 0, 1, 1], [], []>} : vector<8x1152xbf16>, vector<1152x128xbf16>, vector<8x128xf32> -> vector<8x128xf32>
    %c0_3 = arith.constant 0 : index
    %c0_4 = arith.constant 0 : index
    %3 = vector.load %arg3[%c0_3, %c0_4] : memref<1x128xf32, #tpu.memory_space<vmem>>, vector<1x128xf32>
    %4 = vector.broadcast %3 : vector<1x128xf32> to vector<8x128xf32>
    %5 = arith.addf %2, %4 : vector<8x128xf32>
    %cst_5 = arith.constant 0.000000e+00 : f32
    %6 = vector.broadcast %cst_5 : f32 to vector<8x128xf32>
    %7 = arith.cmpf ogt, %5, %6 : vector<8x128xf32>
    %cst_6 = arith.constant 0.00999999977 : f32
    %8 = vector.broadcast %cst_6 : f32 to vector<8x128xf32>
    %9 = arith.mulf %8, %5 : vector<8x128xf32>
    %10 = arith.select %7, %5, %9 : vector<8x128xi1>, vector<8x128xf32>
    %11 = arith.truncf %10 : vector<8x128xf32> to vector<8x128xbf16>
    %c0_7 = arith.constant 0 : index
    %c0_8 = arith.constant 0 : index
    %12 = vector.load %arg4[%c0_7, %c0_8] : memref<128x128xbf16, #tpu.memory_space<vmem>>, vector<128x128xbf16>
    %cst_9 = arith.constant dense<0.000000e+00> : vector<8x128xf32>
    %13 = tpu.matmul %11, %12, %cst_9 {dimension_numbers = #tpu.dot_dimension_numbers<[1], [0], [0], [1], [0, 0, 1, 1], [], []>} : vector<8x128xbf16>, vector<128x128xbf16>, vector<8x128xf32> -> vector<8x128xf32>
    %c0_10 = arith.constant 0 : index
    %c0_11 = arith.constant 0 : index
    %14 = vector.load %arg5[%c0_10, %c0_11] : memref<1x128xf32, #tpu.memory_space<vmem>>, vector<1x128xf32>
    %15 = vector.broadcast %14 : vector<1x128xf32> to vector<8x128xf32>
    %16 = arith.addf %13, %15 : vector<8x128xf32>
    %c0_12 = arith.constant 0 : index
    %c0_13 = arith.constant 0 : index
    %17 = vector.load %arg6[%c0_12, %c0_13] : memref<8x128xf32, #tpu.memory_space<vmem>>, vector<8x128xf32>
    tpu.vector_store %arg6[%c0_12, %c0_13], %16 {strides = array<i32>} : memref<8x128xf32, #tpu.memory_space<vmem>>, vector<8x128xf32>,
    return
  }
  func.func @transform_0(%arg0: i32) -> (i32, i32) {
    %c0_i32 = arith.constant 0 : i32
    %c0_i32_0 = arith.constant 0 : i32
    %c0_i32_1 = arith.constant 0 : i32
    return %c0_i32, %c0_i32_0 : i32, i32
  }
  func.func @transform_1(%arg0: i32) -> (i32, i32) {
    %c0_i32 = arith.constant 0 : i32
    %c0_i32_0 = arith.constant 0 : i32
    %c0_i32_1 = arith.constant 0 : i32
    return %c0_i32, %c0_i32_0 : i32, i32
  }
  func.func @transform_2(%arg0: i32) -> (i32, i32) {
    %c0_i32 = arith.constant 0 : i32
    %c0_i32_0 = arith.constant 0 : i32
    %c0_i32_1 = arith.constant 0 : i32
    return %c0_i32, %c0_i32_0 : i32, i32
  }
  func.func @transform_3(%arg0: i32) -> (i32, i32) {
    %c0_i32 = arith.constant 0 : i32
    %c0_i32_0 = arith.constant 0 : i32
    %c0_i32_1 = arith.constant 0 : i32
    return %c0_i32, %c0_i32_0 : i32, i32
  }
  func.func @transform_4(%arg0: i32) -> (i32, i32) {
    %c0_i32 = arith.constant 0 : i32
    %c0_i32_0 = arith.constant 0 : i32
    %c0_i32_1 = arith.constant 0 : i32
    return %c0_i32, %c0_i32_0 : i32, i32
  }
  func.func @transform_5(%arg0: i32) -> (i32, i32) {
    %c0_i32 = arith.constant 0 : i32
    %c0_i32_0 = arith.constant 0 : i32
    %c0_i32_1 = arith.constant 0 : i32
    return %c0_i32, %c0_i32_0 : i32, i32
  }
}

</mosaic_0001>

<llo_original>
// kernel: _lambda_.4
$region0: #{_lambda_.4}
  #allocation0 [shape = 'u32[]', space=smem, size = 0x4, offset = 0x4, fixed_abs, tag = 'smem constant byte address 0x4 - core index']
  #allocation1 [shape = 'u32[144,128]{1,0:T(1,128)}', space=vmem, size = 0x12000, scoped, tag = 'internal scratch']
  %s0 = inlined_call_operand.hbm [shape: bf16[128,36], index: 0, kind: input, shape index: {}]
  %s1 = inlined_call_operand.hbm [shape: bf16[36,128], index: 1, kind: input, shape index: {}]
  %s2 = inlined_call_operand.hbm [shape: f32[1,128], index: 2, kind: input, shape index: {}]
  %s3 = inlined_call_operand.hbm [shape: bf16[128,128], index: 3, kind: output, shape index: {}]
  %s4 = sld [smem:[#allocation0]]
  $region34: #{_lambda_.4} parent=0
    _
  %s6 = ssub.s32 1, %s4
  %s7 = scalar_select 0, %s6, %s4
  $region1: #{_lambda_.4} parent=0
    #allocation2 [shape = 'u8[32768]{0}', space=vmem, size = 0x8000, scoped, tag = 'input window, operand 0, single buffered']
    #allocation3 [shape = 's32[1]{0}', space=sflag, size = 0x4, scoped, tag = 'scoped memory for _lambda_.4']
    #allocation4 [shape = 's32[1]{0}', space=sflag, size = 0x4, scoped, tag = 'scoped memory for _lambda_.4']
    #allocation5 [shape = 'u8[10240]{0}', space=vmem, size = 0x2800, scoped, tag = 'input window, operand 1, single buffered']
    #allocation6 [shape = 's32[1]{0}', space=sflag, size = 0x4, scoped, tag = 'scoped memory for _lambda_.4']
    #allocation7 [shape = 'u8[512]{0}', space=vmem, size = 0x400, scoped, tag = 'input window, operand 2, single buffered']
    #allocation8 [shape = 'u8[32768]{0}', space=vmem, size = 0x8000, scoped, tag = 'output window, operand 0, single buffered']
    %8 = vsyncpa [#allocation3], 0
    %9 = vsyncpa [#allocation6], 0
    %10 = vsyncpa [#allocation4], 0
    // Predicated region
    $region2: #{_lambda_.4} parent=1 // pred_check
      _
    $region3: #{_lambda_.4} parent=1 // pred_check_branch
      %12 = sbr.rel (0) target = $region5
    $region4: #{_lambda_.4} parent=1 // pred_region
      %s14 = ssub.s32 1024, 1024
      %15 = vsyncadd [#allocation3], %s14
      %s16 = sshll.u32 [#allocation2], 4
      %s17 = int_to_ptr.vmem [resolvable:$true] %s16
      %22 = dma.hbm_to_vmem [thread:$0]  %s0, 1024, %s17, [#allocation3], 64, 64, 4
    $region5: #{_lambda_.4} parent=1 // pred_fallthru
      _
    // Predicated region
    $region6: #{_lambda_.4} parent=1 // pred_check
      _
    $region7: #{_lambda_.4} parent=1 // pred_check_branch
      %24 = sbr.rel (0) target = $region9
    $region8: #{_lambda_.4} parent=1 // pred_region
      %s26 = ssub.s32 320, 320
      %27 = vsyncadd [#allocation6], %s26
      %s28 = sshll.u32 [#allocation5], 4
      %s29 = int_to_ptr.vmem [resolvable:$true] %s28
      %34 = dma.hbm_to_vmem [thread:$0]  %s1, 320, %s29, [#allocation6], 64, 64, 4
    $region9: #{_lambda_.4} parent=1 // pred_fallthru
      _
    // Predicated region
    $region10: #{_lambda_.4} parent=1 // pred_check
      _
    $region11: #{_lambda_.4} parent=1 // pred_check_branch
      %36 = sbr.rel (0) target = $region13
    $region12: #{_lambda_.4} parent=1 // pred_region
      %s38 = ssub.s32 16, 16
      %39 = vsyncadd [#allocation6], %s38
      %s41 = sshll.u32 [#allocation7], 4
      %s42 = int_to_ptr.vmem [resolvable:$true] %s41
      %44 = dma.hbm_to_vmem [thread:$0]  %s2, 16, %s42, [#allocation6]
    $region13: #{_lambda_.4} parent=1 // pred_fallthru
      _
    // Predicated region
    $region14: #{_lambda_.4} parent=1 // pred_check
      _
    $region15: #{_lambda_.4} parent=1 // pred_check_branch
      %46 = sbr.rel (0) target = $region17
    $region16: #{_lambda_.4} parent=1 // pred_region
      %47 = dma.done [#allocation3], 1024
    $region17: #{_lambda_.4} parent=1 // pred_fallthru
      _
    // Predicated region
    $region18: #{_lambda_.4} parent=1 // pred_check
      _
    $region19: #{_lambda_.4} parent=1 // pred_check_branch
      %49 = sbr.rel (0) target = $region21
    $region20: #{_lambda_.4} parent=1 // pred_region
      %50 = dma.done [#allocation6], 320
    $region21: #{_lambda_.4} parent=1 // pred_fallthru
      _
    // Predicated region
    $region22: #{_lambda_.4} parent=1 // pred_check
      _
    $region23: #{_lambda_.4} parent=1 // pred_check_branch
      %52 = sbr.rel (0) target = $region25
    $region24: #{_lambda_.4} parent=1 // pred_region
      %53 = dma.done [#allocation6], 16
    $region25: #{_lambda_.4} parent=1 // pred_fallthru
      _
    %v55 = vld [vmem:[#allocation2] sm:$0xf]
    %v56 = vld [vmem:[#allocation2 + $0x4] sm:$0xf]
    %v57 = vld [vmem:[#allocation2 + $0x8] sm:$0xf]
    %v58 = vld [vmem:[#allocation2 + $0xc] sm:$0xf]
    %v59 = vld [vmem:[#allocation2 + $0x10] sm:$0xf]
    %v60 = vld [vmem:[#allocation2 + $0x14] sm:$0xf]
    %v61 = vld [vmem:[#allocation2 + $0x18] sm:$0xf]
    %v62 = vld [vmem:[#allocation2 + $0x1c] sm:$0xf]
    %v63 = vld [vmem:[#allocation2 + $0x20] sm:$0xf]
    %v64 = vld [vmem:[#allocation2 + $0x24] sm:$0xf]
    %v65 = vld [vmem:[#allocation2 + $0x28] sm:$0xf]
    %v66 = vld [vmem:[#allocation2 + $0x2c] sm:$0xf]
    %v67 = vld [vmem:[#allocation2 + $0x30] sm:$0xf]
    %v68 = vld [vmem:[#allocation2 + $0x34] sm:$0xf]
    %v69 = vld [vmem:[#allocation2 + $0x38] sm:$0xf]
    %v70 = vld [vmem:[#allocation2 + $0x3c] sm:$0xf]
    %v71 = vld [vmem:[#allocation5] sm:$0xf]
    %v72 = vld [vmem:[#allocation5 + $0x4] sm:$0xf]
    %v73 = vld [vmem:[#allocation5 + $0x8] sm:$0xf]
    %v74 = vld [vmem:[#allocation5 + $0xc] sm:$0xf]
    %v75 = vld [vmem:[#allocation5 + $0x10] sm:$0x3]
    %v76 = vld [vmem:[#allocation7] sm:$0x1]
    %v78 = vlaneseq
    %v79 = vshrl.u32 %v78, 7
    %v80 = vsub.s32 0, %v79
    %v81 = vrot.slane %v76, %v80
    %v99 = vunpack.c.l.b16 %v55
    %v100 = vunpack.c.l.b16 %v56
    %v101 = vunpack.c.l.b16 %v57
    %v102 = vunpack.c.l.b16 %v58
    %v103 = vunpack.c.l.b16 %v59
    %v104 = vunpack.c.l.b16 %v60
    %v105 = vunpack.c.l.b16 %v61
    %v106 = vunpack.c.l.b16 %v62
    %v107 = vunpack.c.l.b16 %v63
    %v108 = vunpack.c.l.b16 %v64
    %v109 = vunpack.c.l.b16 %v65
    %v110 = vunpack.c.l.b16 %v66
    %v111 = vunpack.c.l.b16 %v67
    %v112 = vunpack.c.l.b16 %v68
    %v113 = vunpack.c.l.b16 %v69
    %v114 = vunpack.c.l.b16 %v70
    %v115 = vpack.c.b16 %v100, %v99
    %v116 = vpack.c.b16 %v102, %v101
    %v117 = vpack.c.b16 %v104, %v103
    %v118 = vpack.c.b16 %v106, %v105
    %v119 = vpack.c.b16 %v108, %v107
    %v120 = vpack.c.b16 %v110, %v109
    %v121 = vpack.c.b16 %v112, %v111
    %v122 = vpack.c.b16 %v114, %v113
    %v128 = vunpack.c.l.b16 %v71
    %v129 = vunpack.c.l.b16 %v72
    %v130 = vunpack.c.l.b16 %v73
    %v131 = vunpack.c.l.b16 %v74
    %v132 = vunpack.c.l.b16 %v75
    %v133 = vpack.c.b16 %v129, %v128
    %v134 = vpack.c.b16 %v131, %v130
    %v135 = vpack.c.b16 %v132, %v132
    %vm138 = vcmask 293888
    %v140 = vsel %vm138, %v115, 0
    %v143 = vsel %vm138, %v116, 0
    %v146 = vsel %vm138, %v117, 0
    %v149 = vsel %vm138, %v118, 0
    %v152 = vsel %vm138, %v119, 0
    %v155 = vsel %vm138, %v120, 0
    %v158 = vsel %vm138, %v121, 0
    %v161 = vsel %vm138, %v122, 0
    %vm163 = vcmask 1041408
    %v165 = vsel %vm163, %v135, 0
    %167 = vmatprep.subr.bf16.mxu0 0
    %168 = vmatpush1.bf16.msra.mxu0 %v133
    %169 = vmatprep.subr.bf16.mxu0 0
    %170 = vmatpush1.bf16.msra.mxu0 %v134
    %171 = vmatprep.subr.bf16.mxu0 0
    %172 = vmatpush1.bf16.msra.mxu0 %v165
    %173 = vmatprep.subr.bf16.mxu0 0
    %174 = vmatpush1.bf16.msra.mxu0 0
    %175 = vmatprep.subr.bf16.mxu0 0
    %176 = vmatpush1.bf16.msra.mxu0 0
    %177 = vmatprep.subr.bf16.mxu0 0
    %178 = vmatpush1.bf16.msra.mxu0 0
    %179 = vmatprep.subr.bf16.mxu0 0
    %180 = vmatpush1.bf16.msra.mxu0 0
    %181 = vmatprep.subr.bf16.mxu0 0
    %182 = vmatpush1.bf16.msra.mxu0 0
    %183 = vmatprep.subr.bf16.mxu0 0
    %184 = vmatpush1.bf16.msra.mxu0 0
    %185 = vmatprep.subr.bf16.mxu0 0
    %186 = vmatpush1.bf16.msra.mxu0 0
    %187 = vmatprep.subr.bf16.mxu0 0
    %188 = vmatpush1.bf16.msra.mxu0 0
    %189 = vmatprep.subr.bf16.mxu0 0
    %190 = vmatpush1.bf16.msra.mxu0 0
    %191 = vmatprep.subr.bf16.mxu0 0
    %192 = vmatpush1.bf16.msra.mxu0 0
    %193 = vmatprep.subr.bf16.mxu0 0
    %194 = vmatpush1.bf16.msra.mxu0 0
    %195 = vmatprep.subr.bf16.mxu0 0
    %196 = vmatpush1.bf16.msra.mxu0 0
    %197 = vmatprep.subr.bf16.mxu0 0
    %198 = vmatpush1.bf16.msra.mxu0 0
    %199 = vmatprep.mubr.bf16.mxu0 0
    %200 = vmatmul.mubr.bf16.gmra.mrb[0].mxu0 %v140
    %v201 = vpop.f32.mrb[0].mxu0
    %v202 = vadd.f32 %v81, %v201
    %v203 = vpop.f32.mrb[0].mxu0
    %v204 = vpop.f32.mrb[0].mxu0
    %v205 = vadd.f32 %v81, %v204
    %v206 = vpop.f32.mrb[0].mxu0
    %207 = vmatprep.mubr.bf16.mxu0 0
    %208 = vmatmul.mubr.bf16.gmra.mrb[0].mxu0 %v143
    %v209 = vpop.f32.mrb[0].mxu0
    %v210 = vadd.f32 %v81, %v209
    %v211 = vpop.f32.mrb[0].mxu0
    %v212 = vpop.f32.mrb[0].mxu0
    %v213 = vadd.f32 %v81, %v212
    %v214 = vpop.f32.mrb[0].mxu0
    %215 = vmatprep.mubr.bf16.mxu0 0
    %216 = vmatmul.mubr.bf16.gmra.mrb[0].mxu0 %v146
    %v217 = vpop.f32.mrb[0].mxu0
    %v218 = vadd.f32 %v81, %v217
    %v219 = vpop.f32.mrb[0].mxu0
    %v220 = vpop.f32.mrb[0].mxu0
    %v221 = vadd.f32 %v81, %v220
    %v222 = vpop.f32.mrb[0].mxu0
    %223 = vmatprep.mubr.bf16.mxu0 0
    %224 = vmatmul.mubr.bf16.gmra.mrb[0].mxu0 %v149
    %v225 = vpop.f32.mrb[0].mxu0
    %v226 = vadd.f32 %v81, %v225
    %v227 = vpop.f32.mrb[0].mxu0
    %v228 = vpop.f32.mrb[0].mxu0
    %v229 = vadd.f32 %v81, %v228
    %v230 = vpop.f32.mrb[0].mxu0
    %231 = vmatprep.mubr.bf16.mxu0 0
    %232 = vmatmul.mubr.bf16.gmra.mrb[0].mxu0 %v152
    %v233 = vpop.f32.mrb[0].mxu0
    %v234 = vadd.f32 %v81, %v233
    %v235 = vpop.f32.mrb[0].mxu0
    %v236 = vpop.f32.mrb[0].mxu0
    %v237 = vadd.f32 %v81, %v236
    %v238 = vpop.f32.mrb[0].mxu0
    %239 = vmatprep.mubr.bf16.mxu0 0
    %240 = vmatmul.mubr.bf16.gmra.mrb[0].mxu0 %v155
    %v241 = vpop.f32.mrb[0].mxu0
    %v242 = vadd.f32 %v81, %v241
    %v243 = vpop.f32.mrb[0].mxu0
    %v244 = vpop.f32.mrb[0].mxu0
    %v245 = vadd.f32 %v81, %v244
    %v246 = vpop.f32.mrb[0].mxu0
    %247 = vmatprep.mubr.bf16.mxu0 0
    %248 = vmatmul.mubr.bf16.gmra.mrb[0].mxu0 %v158
    %v249 = vpop.f32.mrb[0].mxu0
    %v250 = vadd.f32 %v81, %v249
    %v251 = vpop.f32.mrb[0].mxu0
    %v252 = vpop.f32.mrb[0].mxu0
    %v253 = vadd.f32 %v81, %v252
    %v254 = vpop.f32.mrb[0].mxu0
    %255 = vmatprep.mubr.bf16.mxu0 0
    %256 = vmatmul.mubr.bf16.gmra.mrb[0].mxu0 %v161
    %v257 = vpop.f32.mrb[0].mxu0
    %v258 = vadd.f32 %v81, %v257
    %v259 = vpop.f32.mrb[0].mxu0
    %v260 = vpop.f32.mrb[0].mxu0
    %v261 = vadd.f32 %v81, %v260
    %v262 = vpop.f32.mrb[0].mxu0
    %263 = vdwg.mxu0
    %vm264 = vcmp.gt.f32.partialorder %v202, 0.0
    %vm265 = vcmp.gt.f32.partialorder %v205, 0.0
    %vm266 = vcmp.gt.f32.partialorder %v210, 0.0
    %vm267 = vcmp.gt.f32.partialorder %v213, 0.0
    %vm268 = vcmp.gt.f32.partialorder %v218, 0.0
    %vm269 = vcmp.gt.f32.partialorder %v221, 0.0
    %vm270 = vcmp.gt.f32.partialorder %v226, 0.0
    %vm271 = vcmp.gt.f32.partialorder %v229, 0.0
    %vm272 = vcmp.gt.f32.partialorder %v234, 0.0
    %vm273 = vcmp.gt.f32.partialorder %v237, 0.0
    %vm274 = vcmp.gt.f32.partialorder %v242, 0.0
    %vm275 = vcmp.gt.f32.partialorder %v245, 0.0
    %vm276 = vcmp.gt.f32.partialorder %v250, 0.0
    %vm277 = vcmp.gt.f32.partialorder %v253, 0.0
    %vm278 = vcmp.gt.f32.partialorder %v258, 0.0
    %vm279 = vcmp.gt.f32.partialorder %v261, 0.0
    %v280 = vmul.f32 %v202, 0.01
    %v281 = vmul.f32 %v205, 0.01
    %v282 = vmul.f32 %v210, 0.01
    %v283 = vmul.f32 %v213, 0.01
    %v284 = vmul.f32 %v218, 0.01
    %v285 = vmul.f32 %v221, 0.01
    %v286 = vmul.f32 %v226, 0.01
    %v287 = vmul.f32 %v229, 0.01
    %v288 = vmul.f32 %v234, 0.01
    %v289 = vmul.f32 %v237, 0.01
    %v290 = vmul.f32 %v242, 0.01
    %v291 = vmul.f32 %v245, 0.01
    %v292 = vmul.f32 %v250, 0.01
    %v293 = vmul.f32 %v253, 0.01
    %v294 = vmul.f32 %v258, 0.01
    %v295 = vmul.f32 %v261, 0.01
    %v296 = vsel %vm264, %v202, %v280
    %v297 = vsel %vm265, %v205, %v281
    %v298 = vsel %vm266, %v210, %v282
    %v299 = vsel %vm267, %v213, %v283
    %v300 = vsel %vm268, %v218, %v284
    %v301 = vsel %vm269, %v221, %v285
    %v302 = vsel %vm270, %v226, %v286
    %v303 = vsel %vm271, %v229, %v287
    %v304 = vsel %vm272, %v234, %v288
    %v305 = vsel %vm273, %v237, %v289
    %v306 = vsel %vm274, %v242, %v290
    %v307 = vsel %vm275, %v245, %v291
    %v308 = vsel %vm276, %v250, %v292
    %v309 = vsel %vm277, %v253, %v293
    %v310 = vsel %vm278, %v258, %v294
    %v311 = vsel %vm279, %v261, %v295
    %v312 = vpack.c.bf16 %v297, %v296
    %v313 = vpack.c.bf16 %v299, %v298
    %v314 = vpack.c.bf16 %v301, %v300
    %v315 = vpack.c.bf16 %v303, %v302
    %v316 = vpack.c.bf16 %v305, %v304
    %v317 = vpack.c.bf16 %v307, %v306
    %v318 = vpack.c.bf16 %v309, %v308
    %v319 = vpack.c.bf16 %v311, %v310
    %v328 = vunpack.c.l.b16 %v312
    %v329 = vunpack.c.h.b16 %v312
    %v330 = vunpack.c.l.b16 %v313
    %v331 = vunpack.c.h.b16 %v313
    %v332 = vunpack.c.l.b16 %v314
    %v333 = vunpack.c.h.b16 %v314
    %v334 = vunpack.c.l.b16 %v315
    %v335 = vunpack.c.h.b16 %v315
    %v336 = vunpack.c.l.b16 %v316
    %v337 = vunpack.c.h.b16 %v316
    %v338 = vunpack.c.l.b16 %v317
    %v339 = vunpack.c.h.b16 %v317
    %v340 = vunpack.c.l.b16 %v318
    %v341 = vunpack.c.h.b16 %v318
    %v342 = vunpack.c.l.b16 %v319
    %v343 = vunpack.c.h.b16 %v319
    %v344 = vpack.c.b16 %v328, %v328
    %v345 = vpack.c.b16 %v329, %v329
    %v346 = vpack.c.b16 %v330, %v330
    %v347 = vpack.c.b16 %v331, %v331
    %v348 = vpack.c.b16 %v332, %v332
    %v349 = vpack.c.b16 %v333, %v333
    %v350 = vpack.c.b16 %v334, %v334
    %v351 = vpack.c.b16 %v335, %v335
    %v352 = vpack.c.b16 %v336, %v336
    %v353 = vpack.c.b16 %v337, %v337
    %v354 = vpack.c.b16 %v338, %v338
    %v355 = vpack.c.b16 %v339, %v339
    %v356 = vpack.c.b16 %v340, %v340
    %v357 = vpack.c.b16 %v341, %v341
    %v358 = vpack.c.b16 %v342, %v342
    %v359 = vpack.c.b16 %v343, %v343
    %376 = vst [vmem:[#allocation8] sm:$0xf] %v344
    %377 = vst [vmem:[#allocation8 + $0x4] sm:$0xf] %v345
    %378 = vst [vmem:[#allocation8 + $0x8] sm:$0xf] %v346
    %379 = vst [vmem:[#allocation8 + $0xc] sm:$0xf] %v347
    %380 = vst [vmem:[#allocation8 + $0x10] sm:$0xf] %v348
    %381 = vst [vmem:[#allocation8 + $0x14] sm:$0xf] %v349
    %382 = vst [vmem:[#allocation8 + $0x18] sm:$0xf] %v350
    %383 = vst [vmem:[#allocation8 + $0x1c] sm:$0xf] %v351
    %384 = vst [vmem:[#allocation8 + $0x20] sm:$0xf] %v352
    %385 = vst [vmem:[#allocation8 + $0x24] sm:$0xf] %v353
    %386 = vst [vmem:[#allocation8 + $0x28] sm:$0xf] %v354
    %387 = vst [vmem:[#allocation8 + $0x2c] sm:$0xf] %v355
    %388 = vst [vmem:[#allocation8 + $0x30] sm:$0xf] %v356
    %389 = vst [vmem:[#allocation8 + $0x34] sm:$0xf] %v357
    %390 = vst [vmem:[#allocation8 + $0x38] sm:$0xf] %v358
    %391 = vst [vmem:[#allocation8 + $0x3c] sm:$0xf] %v359
    // Predicated region
    $region26: #{_lambda_.4} parent=1 // pred_check
      _
    $region27: #{_lambda_.4} parent=1 // pred_check_branch
      %393 = sbr.rel (0) target = $region29
    $region28: #{_lambda_.4} parent=1 // pred_region
      %s395 = ssub.s32 1024, 1024
      %396 = vsyncadd [#allocation4], %s395
      %s397 = sshll.u32 [#allocation8], 4
      %s398 = int_to_ptr.vmem [resolvable:$true] %s397
      %403 = dma.vmem_to_hbm [thread:$0]  %s398, 1024, %s3, [#allocation4], 64, 64, 4
    $region29: #{_lambda_.4} parent=1 // pred_fallthru
      _
    // Predicated region
    $region30: #{_lambda_.4} parent=1 // pred_check
      _
    $region31: #{_lambda_.4} parent=1 // pred_check_branch
      %405 = sbr.rel (0) target = $region33
    $region32: #{_lambda_.4} parent=1 // pred_region
      %406 = dma.done [#allocation4], 1024
    $region33: #{_lambda_.4} parent=1 // pred_fallthru
      _
    %407 = vsyncpa [#allocation3], 1
    %408 = vsyncpa [#allocation6], 1
    %409 = vsyncpa [#allocation4], 1

// kernel: _lambda_.5
$region0: #{_lambda_.5}
  #allocation0 [shape = 'u32[]', space=smem, size = 0x4, offset = 0x4, fixed_abs, tag = 'smem constant byte address 0x4 - core index']
  #allocation1 [shape = 'u32[144,128]{1,0:T(1,128)}', space=vmem, size = 0x12000, scoped, tag = 'internal scratch']
  %s0 = inlined_call_operand.hbm [shape: bf16[32,1152], index: 0, kind: input, shape index: {}]
  %s1 = inlined_call_operand.hbm [shape: bf16[1152,128], index: 1, kind: input, shape index: {}]
  %s2 = inlined_call_operand.hbm [shape: f32[1,128], index: 2, kind: input, shape index: {}]
  %s3 = inlined_call_operand.hbm [shape: bf16[32,128], index: 3, kind: output, shape index: {}]
  %s4 = sld [smem:[#allocation0]]
  $region34: #{_lambda_.5} parent=0
    _
  %s6 = ssub.s32 1, %s4
  %s7 = scalar_select 0, %s6, %s4
  $region1: #{_lambda_.5} parent=0
    #allocation2 [shape = 'u8[73728]{0}', space=vmem, size = 0x12000, scoped, tag = 'input window, operand 0, single buffered']
    #allocation3 [shape = 's32[1]{0}', space=sflag, size = 0x4, scoped, tag = 'scoped memory for _lambda_.5']
    #allocation4 [shape = 's32[1]{0}', space=sflag, size = 0x4, scoped, tag = 'scoped memory for _lambda_.5']
    #allocation5 [shape = 'u8[294912]{0}', space=vmem, size = 0x48000, scoped, tag = 'input window, operand 1, single buffered']
    #allocation6 [shape = 's32[1]{0}', space=sflag, size = 0x4, scoped, tag = 'scoped memory for _lambda_.5']
    #allocation7 [shape = 'u8[512]{0}', space=vmem, size = 0x400, scoped, tag = 'input window, operand 2, single buffered']
    #allocation8 [shape = 'u8[8192]{0}', space=vmem, size = 0x2000, scoped, tag = 'output window, operand 0, single buffered']
    %8 = vsyncpa [#allocation3], 0
    %9 = vsyncpa [#allocation6], 0
    %10 = vsyncpa [#allocation4], 0
    // Predicated region
    $region2: #{_lambda_.5} parent=1 // pred_check
      _
    $region3: #{_lambda_.5} parent=1 // pred_check_branch
      %12 = sbr.rel (0) target = $region5
    $region4: #{_lambda_.5} parent=1 // pred_region
      %s14 = ssub.s32 2304, 2304
      %15 = vsyncadd [#allocation3], %s14
      %s16 = sshll.u32 [#allocation2], 4
      %s17 = int_to_ptr.vmem [resolvable:$true] %s16
      %22 = dma.hbm_to_vmem [thread:$0]  %s0, 2304, %s17, [#allocation3], 576, 576, 36
    $region5: #{_lambda_.5} parent=1 // pred_fallthru
      _
    // Predicated region
    $region6: #{_lambda_.5} parent=1 // pred_check
      _
    $region7: #{_lambda_.5} parent=1 // pred_check_branch
      %24 = sbr.rel (0) target = $region9
    $region8: #{_lambda_.5} parent=1 // pred_region
      %s26 = ssub.s32 9216, 9216
      %27 = vsyncadd [#allocation6], %s26
      %s28 = sshll.u32 [#allocation5], 4
      %s29 = int_to_ptr.vmem [resolvable:$true] %s28
      %34 = dma.hbm_to_vmem [thread:$0]  %s1, 9216, %s29, [#allocation6], 64, 64, 4
    $region9: #{_lambda_.5} parent=1 // pred_fallthru
      _
    // Predicated region
    $region10: #{_lambda_.5} parent=1 // pred_check
      _
    $region11: #{_lambda_.5} parent=1 // pred_check_branch
      %36 = sbr.rel (0) target = $region13
    $region12: #{_lambda_.5} parent=1 // pred_region
      %s38 = ssub.s32 16, 16
      %39 = vsyncadd [#allocation6], %s38
      %s41 = sshll.u32 [#allocation7], 4
      %s42 = int_to_ptr.vmem [resolvable:$true] %s41
      %44 = dma.hbm_to_vmem [thread:$0]  %s2, 16, %s42, [#allocation6]
    $region13: #{_lambda_.5} parent=1 // pred_fallthru
      _
    // Predicated region
    $region14: #{_lambda_.5} parent=1 // pred_check
      _
    $region15: #{_lambda_.5} parent=1 // pred_check_branch
      %46 = sbr.rel (0) target = $region17
    $region16: #{_lambda_.5} parent=1 // pred_region
      %47 = dma.done [#allocation3], 2304
    $region17: #{_lambda_.5} parent=1 // pred_fallthru
      _
    // Predicated region
    $region18: #{_lambda_.5} parent=1 // pred_check
      _
    $region19: #{_lambda_.5} parent=1 // pred_check_branch
      %49 = sbr.rel (0) target = $region21
    $region20: #{_lambda_.5} parent=1 // pred_region
      %50 = dma.done [#allocation6], 9216
    $region21: #{_lambda_.5} parent=1 // pred_fallthru
      _
    // Predicated region
    $region22: #{_lambda_.5} parent=1 // pred_check
      _
    $region23: #{_lambda_.5} parent=1 // pred_check_branch
      %52 = sbr.rel (0) target = $region25
    $region24: #{_lambda_.5} parent=1 // pred_region
      %53 = dma.done [#allocation6], 16
    $region25: #{_lambda_.5} parent=1 // pred_fallthru
      _
    %v55 = vld [vmem:[#allocation2] sm:$0xff]
    %v56 = vld [vmem:[#allocation2 + $0x8] sm:$0xff]
    %v57 = vld [vmem:[#allocation2 + $0x10] sm:$0xff]
    %v58 = vld [vmem:[#allocation2 + $0x18] sm:$0xff]
    %v59 = vld [vmem:[#allocation2 + $0x20] sm:$0xf]
    %v60 = vld [vmem:[#allocation2 + $0x24] sm:$0xff]
    %v61 = vld [vmem:[#allocation2 + $0x2c] sm:$0xff]
    %v62 = vld [vmem:[#allocation2 + $0x34] sm:$0xff]
    %v63 = vld [vmem:[#allocation2 + $0x3c] sm:$0xff]
    %v64 = vld [vmem:[#allocation2 + $0x44] sm:$0xf]
    %v65 = vld [vmem:[#allocation2 + $0x48] sm:$0xff]
    %v66 = vld [vmem:[#allocation2 + $0x50] sm:$0xff]
    %v67 = vld [vmem:[#allocation2 + $0x58] sm:$0xff]
    %v68 = vld [vmem:[#allocation2 + $0x60] sm:$0xff]
    %v69 = vld [vmem:[#allocation2 + $0x68] sm:$0xf]
    %v70 = vld [vmem:[#allocation2 + $0x6c] sm:$0xff]
    %v71 = vld [vmem:[#allocation2 + $0x74] sm:$0xff]
    %v72 = vld [vmem:[#allocation2 + $0x7c] sm:$0xff]
    %v73 = vld [vmem:[#allocation2 + $0x84] sm:$0xff]
    %v74 = vld [vmem:[#allocation2 + $0x8c] sm:$0xf]
    %v75 = vld [vmem:[#allocation5] sm:$0xf]
    %v76 = vld [vmem:[#allocation5 + $0x4] sm:$0xf]
    %v77 = vld [vmem:[#allocation5 + $0x8] sm:$0xf]
    %v78 = vld [vmem:[#allocation5 + $0xc] sm:$0xf]
    %v79 = vld [vmem:[#allocation5 + $0x10] sm:$0xf]
    %v80 = vld [vmem:[#allocation5 + $0x14] sm:$0xf]
    %v81 = vld [vmem:[#allocation5 + $0x18] sm:$0xf]
    %v82 = vld [vmem:[#allocation5 + $0x1c] sm:$0xf]
    %v83 = vld [vmem:[#allocation5 + $0x20] sm:$0xf]
    %v84 = vld [vmem:[#allocation5 + $0x24] sm:$0xf]
    %v85 = vld [vmem:[#allocation5 + $0x28] sm:$0xf]
    %v86 = vld [vmem:[#allocation5 + $0x2c] sm:$0xf]
    %v87 = vld [vmem:[#allocation5 + $0x30] sm:$0xf]
    %v88 = vld [vmem:[#allocation5 + $0x34] sm:$0xf]
    %v89 = vld [vmem:[#allocation5 + $0x38] sm:$0xf]
    %v90 = vld [vmem:[#allocation5 + $0x3c] sm:$0xf]
    %v91 = vld [vmem:[#allocation5 + $0x40] sm:$0xf]
    %v92 = vld [vmem:[#allocation5 + $0x44] sm:$0xf]
    %v93 = vld [vmem:[#allocation5 + $0x48] sm:$0xf]
    %v94 = vld [vmem:[#allocation5 + $0x4c] sm:$0xf]
    %v95 = vld [vmem:[#allocation5 + $0x50] sm:$0xf]
    %v96 = vld [vmem:[#allocation5 + $0x54] sm:$0xf]
    %v97 = vld [vmem:[#allocation5 + $0x58] sm:$0xf]
    %v98 = vld [vmem:[#allocation5 + $0x5c] sm:$0xf]
    %v99 = vld [vmem:[#allocation5 + $0x60] sm:$0xf]
    %v100 = vld [vmem:[#allocation5 + $0x64] sm:$0xf]
    %v101 = vld [vmem:[#allocation5 + $0x68] sm:$0xf]
    %v102 = vld [vmem:[#allocation5 + $0x6c] sm:$0xf]
    %v103 = vld [vmem:[#allocation5 + $0x70] sm:$0xf]
    %v104 = vld [vmem:[#allocation5 + $0x74] sm:$0xf]
    %v105 = vld [vmem:[#allocation5 + $0x78] sm:$0xf]
    %v106 = vld [vmem:[#allocation5 + $0x7c] sm:$0xf]
    %v107 = vld [vmem:[#allocation5 + $0x80] sm:$0xf]
    %v108 = vld [vmem:[#allocation5 + $0x84] sm:$0xf]
    %v109 = vld [vmem:[#allocation5 + $0x88] sm:$0xf]
    %v110 = vld [vmem:[#allocation5 + $0x8c] sm:$0xf]
    %v111 = vld [vmem:[#allocation5 + $0x90] sm:$0xf]
    %v112 = vld [vmem:[#allocation5 + $0x94] sm:$0xf]
    %v113 = vld [vmem:[#allocation5 + $0x98] sm:$0xf]
    %v114 = vld [vmem:[#allocation5 + $0x9c] sm:$0xf]
    %v115 = vld [vmem:[#allocation5 + $0xa0] sm:$0xf]
    %v116 = vld [vmem:[#allocation5 + $0xa4] sm:$0xf]
    %v117 = vld [vmem:[#allocation5 + $0xa8] sm:$0xf]
    %v118 = vld [vmem:[#allocation5 + $0xac] sm:$0xf]
    %v119 = vld [vmem:[#allocation5 + $0xb0] sm:$0xf]
    %v120 = vld [vmem:[#allocation5 + $0xb4] sm:$0xf]
    %v121 = vld [vmem:[#allocation5 + $0xb8] sm:$0xf]
    %v122 = vld [vmem:[#allocation5 + $0xbc] sm:$0xf]
    %v123 = vld [vmem:[#allocation5 + $0xc0] sm:$0xf]
    %v124 = vld [vmem:[#allocation5 + $0xc4] sm:$0xf]
    %v125 = vld [vmem:[#allocation5 + $0xc8] sm:$0xf]
    %v126 = vld [vmem:[#allocation5 + $0xcc] sm:$0xf]
    %v127 = vld [vmem:[#allocation5 + $0xd0] sm:$0xf]
    %v128 = vld [vmem:[#allocation5 + $0xd4] sm:$0xf]
    %v129 = vld [vmem:[#allocation5 + $0xd8] sm:$0xf]
    %v130 = vld [vmem:[#allocation5 + $0xdc] sm:$0xf]
    %v131 = vld [vmem:[#allocation5 + $0xe0] sm:$0xf]
    %v132 = vld [vmem:[#allocation5 + $0xe4] sm:$0xf]
    %v133 = vld [vmem:[#allocation5 + $0xe8] sm:$0xf]
    %v134 = vld [vmem:[#allocation5 + $0xec] sm:$0xf]
    %v135 = vld [vmem:[#allocation5 + $0xf0] sm:$0xf]
    %v136 = vld [vmem:[#allocation5 + $0xf4] sm:$0xf]
    %v137 = vld [vmem:[#allocation5 + $0xf8] sm:$0xf]
    %v138 = vld [vmem:[#allocation5 + $0xfc] sm:$0xf]
    %v139 = vld [vmem:[#allocation5 + $0x100] sm:$0xf]
    %v140 = vld [vmem:[#allocation5 + $0x104] sm:$0xf]
    %v141 = vld [vmem:[#allocation5 + $0x108] sm:$0xf]
    %v142 = vld [vmem:[#allocation5 + $0x10c] sm:$0xf]
    %v143 = vld [vmem:[#allocation5 + $0x110] sm:$0xf]
    %v144 = vld [vmem:[#allocation5 + $0x114] sm:$0xf]
    %v145 = vld [vmem:[#allocation5 + $0x118] sm:$0xf]
    %v146 = vld [vmem:[#allocation5 + $0x11c] sm:$0xf]
    %v147 = vld [vmem:[#allocation5 + $0x120] sm:$0xf]
    %v148 = vld [vmem:[#allocation5 + $0x124] sm:$0xf]
    %v149 = vld [vmem:[#allocation5 + $0x128] sm:$0xf]
    %v150 = vld [vmem:[#allocation5 + $0x12c] sm:$0xf]
    %v151 = vld [vmem:[#allocation5 + $0x130] sm:$0xf]
    %v152 = vld [vmem:[#allocation5 + $0x134] sm:$0xf]
    %v153 = vld [vmem:[#allocation5 + $0x138] sm:$0xf]
    %v154 = vld [vmem:[#allocation5 + $0x13c] sm:$0xf]
    %v155 = vld [vmem:[#allocation5 + $0x140] sm:$0xf]
    %v156 = vld [vmem:[#allocation5 + $0x144] sm:$0xf]
    %v157 = vld [vmem:[#allocation5 + $0x148] sm:$0xf]
    %v158 = vld [vmem:[#allocation5 + $0x14c] sm:$0xf]
    %v159 = vld [vmem:[#allocation5 + $0x150] sm:$0xf]
    %v160 = vld [vmem:[#allocation5 + $0x154] sm:$0xf]
    %v161 = vld [vmem:[#allocation5 + $0x158] sm:$0xf]
    %v162 = vld [vmem:[#allocation5 + $0x15c] sm:$0xf]
    %v163 = vld [vmem:[#allocation5 + $0x160] sm:$0xf]
    %v164 = vld [vmem:[#allocation5 + $0x164] sm:$0xf]
    %v165 = vld [vmem:[#allocation5 + $0x168] sm:$0xf]
    %v166 = vld [vmem:[#allocation5 + $0x16c] sm:$0xf]
    %v167 = vld [vmem:[#allocation5 + $0x170] sm:$0xf]
    %v168 = vld [vmem:[#allocation5 + $0x174] sm:$0xf]
    %v169 = vld [vmem:[#allocation5 + $0x178] sm:$0xf]
    %v170 = vld [vmem:[#allocation5 + $0x17c] sm:$0xf]
    %v171 = vld [vmem:[#allocation5 + $0x180] sm:$0xf]
    %v172 = vld [vmem:[#allocation5 + $0x184] sm:$0xf]
    %v173 = vld [vmem:[#allocation5 + $0x188] sm:$0xf]
    %v174 = vld [vmem:[#allocation5 + $0x18c] sm:$0xf]
    %v175 = vld [vmem:[#allocation5 + $0x190] sm:$0xf]
    %v176 = vld [vmem:[#allocation5 + $0x194] sm:$0xf]
    %v177 = vld [vmem:[#allocation5 + $0x198] sm:$0xf]
    %v178 = vld [vmem:[#allocation5 + $0x19c] sm:$0xf]
    %v179 = vld [vmem:[#allocation5 + $0x1a0] sm:$0xf]
    %v180 = vld [vmem:[#allocation5 + $0x1a4] sm:$0xf]
    %v181 = vld [vmem:[#allocation5 + $0x1a8] sm:$0xf]
    %v182 = vld [vmem:[#allocation5 + $0x1ac] sm:$0xf]
    %v183 = vld [vmem:[#allocation5 + $0x1b0] sm:$0xf]
    %v184 = vld [vmem:[#allocation5 + $0x1b4] sm:$0xf]
    %v185 = vld [vmem:[#allocation5 + $0x1b8] sm:$0xf]
    %v186 = vld [vmem:[#allocation5 + $0x1bc] sm:$0xf]
    %v187 = vld [vmem:[#allocation5 + $0x1c0] sm:$0xf]
    %v188 = vld [vmem:[#allocation5 + $0x1c4] sm:$0xf]
    %v189 = vld [vmem:[#allocation5 + $0x1c8] sm:$0xf]
    %v190 = vld [vmem:[#allocation5 + $0x1cc] sm:$0xf]
    %v191 = vld [vmem:[#allocation5 + $0x1d0] sm:$0xf]
    %v192 = vld [vmem:[#allocation5 + $0x1d4] sm:$0xf]
    %v193 = vld [vmem:[#allocation5 + $0x1d8] sm:$0xf]
    %v194 = vld [vmem:[#allocation5 + $0x1dc] sm:$0xf]
    %v195 = vld [vmem:[#allocation5 + $0x1e0] sm:$0xf]
    %v196 = vld [vmem:[#allocation5 + $0x1e4] sm:$0xf]
    %v197 = vld [vmem:[#allocation5 + $0x1e8] sm:$0xf]
    %v198 = vld [vmem:[#allocation5 + $0x1ec] sm:$0xf]
    %v199 = vld [vmem:[#allocation5 + $0x1f0] sm:$0xf]
    %v200 = vld [vmem:[#allocation5 + $0x1f4] sm:$0xf]
    %v201 = vld [vmem:[#allocation5 + $0x1f8] sm:$0xf]
    %v202 = vld [vmem:[#allocation5 + $0x1fc] sm:$0xf]
    %v203 = vld [vmem:[#allocation5 + $0x200] sm:$0xf]
    %v204 = vld [vmem:[#allocation5 + $0x204] sm:$0xf]
    %v205 = vld [vmem:[#allocation5 + $0x208] sm:$0xf]
    %v206 = vld [vmem:[#allocation5 + $0x20c] sm:$0xf]
    %v207 = vld [vmem:[#allocation5 + $0x210] sm:$0xf]
    %v208 = vld [vmem:[#allocation5 + $0x214] sm:$0xf]
    %v209 = vld [vmem:[#allocation5 + $0x218] sm:$0xf]
    %v210 = vld [vmem:[#allocation5 + $0x21c] sm:$0xf]
    %v211 = vld [vmem:[#allocation5 + $0x220] sm:$0xf]
    %v212 = vld [vmem:[#allocation5 + $0x224] sm:$0xf]
    %v213 = vld [vmem:[#allocation5 + $0x228] sm:$0xf]
    %v214 = vld [vmem:[#allocation5 + $0x22c] sm:$0xf]
    %v215 = vld [vmem:[#allocation5 + $0x230] sm:$0xf]
    %v216 = vld [vmem:[#allocation5 + $0x234] sm:$0xf]
    %v217 = vld [vmem:[#allocation5 + $0x238] sm:$0xf]
    %v218 = vld [vmem:[#allocation5 + $0x23c] sm:$0xf]
    %v219 = vld [vmem:[#allocation7] sm:$0x1]
    %v221 = vlaneseq
    %v222 = vshrl.u32 %v221, 7
    %v223 = vsub.s32 0, %v222
    %v224 = vrot.slane %v219, %v223
    %v246 = vunpack.c.l.b16 %v55
    %v247 = vunpack.c.h.b16 %v55
    %v248 = vunpack.c.l.b16 %v56
    %v249 = vunpack.c.h.b16 %v56
    %v250 = vunpack.c.l.b16 %v57
    %v251 = vunpack.c.h.b16 %v57
    %v252 = vunpack.c.l.b16 %v58
    %v253 = vunpack.c.h.b16 %v58
    %v254 = vunpack.c.l.b16 %v59
    %v255 = vunpack.c.l.b16 %v60
    %v256 = vunpack.c.h.b16 %v60
    %v257 = vunpack.c.l.b16 %v61
    %v258 = vunpack.c.h.b16 %v61
    %v259 = vunpack.c.l.b16 %v62
    %v260 = vunpack.c.h.b16 %v62
    %v261 = vunpack.c.l.b16 %v63
    %v262 = vunpack.c.h.b16 %v63
    %v263 = vunpack.c.l.b16 %v64
    %v264 = vunpack.c.l.b16 %v65
    %v265 = vunpack.c.h.b16 %v65
    %v266 = vunpack.c.l.b16 %v66
    %v267 = vunpack.c.h.b16 %v66
    %v268 = vunpack.c.l.b16 %v67
    %v269 = vunpack.c.h.b16 %v67
    %v270 = vunpack.c.l.b16 %v68
    %v271 = vunpack.c.h.b16 %v68
    %v272 = vunpack.c.l.b16 %v69
    %v273 = vunpack.c.l.b16 %v70
    %v274 = vunpack.c.h.b16 %v70
    %v275 = vunpack.c.l.b16 %v71
    %v276 = vunpack.c.h.b16 %v71
    %v277 = vunpack.c.l.b16 %v72
    %v278 = vunpack.c.h.b16 %v72
    %v279 = vunpack.c.l.b16 %v73
    %v280 = vunpack.c.h.b16 %v73
    %v281 = vunpack.c.l.b16 %v74
    %v282 = vpack.c.b16 %v255, %v246
    %v283 = vpack.c.b16 %v256, %v247
    %v284 = vpack.c.b16 %v257, %v248
    %v285 = vpack.c.b16 %v258, %v249
    %v286 = vpack.c.b16 %v259, %v250
    %v287 = vpack.c.b16 %v260, %v251
    %v288 = vpack.c.b16 %v261, %v252
    %v289 = vpack.c.b16 %v262, %v253
    %v290 = vpack.c.b16 %v263, %v254
    %v291 = vpack.c.b16 %v273, %v264
    %v292 = vpack.c.b16 %v274, %v265
    %v293 = vpack.c.b16 %v275, %v266
    %v294 = vpack.c.b16 %v276, %v267
    %v295 = vpack.c.b16 %v277, %v268
    %v296 = vpack.c.b16 %v278, %v269
    %v297 = vpack.c.b16 %v279, %v270
    %v298 = vpack.c.b16 %v280, %v271
    %v299 = vpack.c.b16 %v281, %v272
    %v462 = vunpack.c.l.b16 %v75
    %v463 = vunpack.c.l.b16 %v76
    %v464 = vunpack.c.l.b16 %v77
    %v465 = vunpack.c.l.b16 %v78
    %v466 = vunpack.c.l.b16 %v79
    %v467 = vunpack.c.l.b16 %v80
    %v468 = vunpack.c.l.b16 %v81
    %v469 = vunpack.c.l.b16 %v82
    %v470 = vunpack.c.l.b16 %v83
    %v471 = vunpack.c.l.b16 %v84
    %v472 = vunpack.c.l.b16 %v85
    %v473 = vunpack.c.l.b16 %v86
    %v474 = vunpack.c.l.b16 %v87
    %v475 = vunpack.c.l.b16 %v88
    %v476 = vunpack.c.l.b16 %v89
    %v477 = vunpack.c.l.b16 %v90
    %v478 = vunpack.c.l.b16 %v91
    %v479 = vunpack.c.l.b16 %v92
    %v480 = vunpack.c.l.b16 %v93
    %v481 = vunpack.c.l.b16 %v94
    %v482 = vunpack.c.l.b16 %v95
    %v483 = vunpack.c.l.b16 %v96
    %v484 = vunpack.c.l.b16 %v97
    %v485 = vunpack.c.l.b16 %v98
    %v486 = vunpack.c.l.b16 %v99
    %v487 = vunpack.c.l.b16 %v100
    %v488 = vunpack.c.l.b16 %v101
    %v489 = vunpack.c.l.b16 %v102
    %v490 = vunpack.c.l.b16 %v103
    %v491 = vunpack.c.l.b16 %v104
    %v492 = vunpack.c.l.b16 %v105
    %v493 = vunpack.c.l.b16 %v106
    %v494 = vunpack.c.l.b16 %v107
    %v495 = vunpack.c.l.b16 %v108
    %v496 = vunpack.c.l.b16 %v109
    %v497 = vunpack.c.l.b16 %v110
    %v498 = vunpack.c.l.b16 %v111
    %v499 = vunpack.c.l.b16 %v112
    %v500 = vunpack.c.l.b16 %v113
    %v501 = vunpack.c.l.b16 %v114
    %v502 = vunpack.c.l.b16 %v115
    %v503 = vunpack.c.l.b16 %v116
    %v504 = vunpack.c.l.b16 %v117
    %v505 = vunpack.c.l.b16 %v118
    %v506 = vunpack.c.l.b16 %v119
    %v507 = vunpack.c.l.b16 %v120
    %v508 = vunpack.c.l.b16 %v121
    %v509 = vunpack.c.l.b16 %v122
    %v510 = vunpack.c.l.b16 %v123
    %v511 = vunpack.c.l.b16 %v124
    %v512 = vunpack.c.l.b16 %v125
    %v513 = vunpack.c.l.b16 %v126
    %v514 = vunpack.c.l.b16 %v127
    %v515 = vunpack.c.l.b16 %v128
    %v516 = vunpack.c.l.b16 %v129
    %v517 = vunpack.c.l.b16 %v130
    %v518 = vunpack.c.l.b16 %v131
    %v519 = vunpack.c.l.b16 %v132
    %v520 = vunpack.c.l.b16 %v133
    %v521 = vunpack.c.l.b16 %v134
    %v522 = vunpack.c.l.b16 %v135
    %v523 = vunpack.c.l.b16 %v136
    %v524 = vunpack.c.l.b16 %v137
    %v525 = vunpack.c.l.b16 %v138
    %v526 = vunpack.c.l.b16 %v139
    %v527 = vunpack.c.l.b16 %v140
    %v528 = vunpack.c.l.b16 %v141
    %v529 = vunpack.c.l.b16 %v142
    %v530 = vunpack.c.l.b16 %v143
    %v531 = vunpack.c.l.b16 %v144
    %v532 = vunpack.c.l.b16 %v145
    %v533 = vunpack.c.l.b16 %v146
    %v534 = vunpack.c.l.b16 %v147
    %v535 = vunpack.c.l.b16 %v148
    %v536 = vunpack.c.l.b16 %v149
    %v537 = vunpack.c.l.b16 %v150
    %v538 = vunpack.c.l.b16 %v151
    %v539 = vunpack.c.l.b16 %v152
    %v540 = vunpack.c.l.b16 %v153
    %v541 = vunpack.c.l.b16 %v154
    %v542 = vunpack.c.l.b16 %v155
    %v543 = vunpack.c.l.b16 %v156
    %v544 = vunpack.c.l.b16 %v157
    %v545 = vunpack.c.l.b16 %v158
    %v546 = vunpack.c.l.b16 %v159
    %v547 = vunpack.c.l.b16 %v160
    %v548 = vunpack.c.l.b16 %v161
    %v549 = vunpack.c.l.b16 %v162
    %v550 = vunpack.c.l.b16 %v163
    %v551 = vunpack.c.l.b16 %v164
    %v552 = vunpack.c.l.b16 %v165
    %v553 = vunpack.c.l.b16 %v166
    %v554 = vunpack.c.l.b16 %v167
    %v555 = vunpack.c.l.b16 %v168
    %v556 = vunpack.c.l.b16 %v169
    %v557 = vunpack.c.l.b16 %v170
    %v558 = vunpack.c.l.b16 %v171
    %v559 = vunpack.c.l.b16 %v172
    %v560 = vunpack.c.l.b16 %v173
    %v561 = vunpack.c.l.b16 %v174
    %v562 = vunpack.c.l.b16 %v175
    %v563 = vunpack.c.l.b16 %v176
    %v564 = vunpack.c.l.b16 %v177
    %v565 = vunpack.c.l.b16 %v178
    %v566 = vunpack.c.l.b16 %v179
    %v567 = vunpack.c.l.b16 %v180
    %v568 = vunpack.c.l.b16 %v181
    %v569 = vunpack.c.l.b16 %v182
    %v570 = vunpack.c.l.b16 %v183
    %v571 = vunpack.c.l.b16 %v184
    %v572 = vunpack.c.l.b16 %v185
    %v573 = vunpack.c.l.b16 %v186
    %v574 = vunpack.c.l.b16 %v187
    %v575 = vunpack.c.l.b16 %v188
    %v576 = vunpack.c.l.b16 %v189
    %v577 = vunpack.c.l.b16 %v190
    %v578 = vunpack.c.l.b16 %v191
    %v579 = vunpack.c.l.b16 %v192
    %v580 = vunpack.c.l.b16 %v193
    %v581 = vunpack.c.l.b16 %v194
    %v582 = vunpack.c.l.b16 %v195
    %v583 = vunpack.c.l.b16 %v196
    %v584 = vunpack.c.l.b16 %v197
    %v585 = vunpack.c.l.b16 %v198
    %v586 = vunpack.c.l.b16 %v199
    %v587 = vunpack.c.l.b16 %v200
    %v588 = vunpack.c.l.b16 %v201
    %v589 = vunpack.c.l.b16 %v202
    %v590 = vunpack.c.l.b16 %v203
    %v591 = vunpack.c.l.b16 %v204
    %v592 = vunpack.c.l.b16 %v205
    %v593 = vunpack.c.l.b16 %v206
    %v594 = vunpack.c.l.b16 %v207
    %v595 = vunpack.c.l.b16 %v208
    %v596 = vunpack.c.l.b16 %v209
    %v597 = vunpack.c.l.b16 %v210
    %v598 = vunpack.c.l.b16 %v211
    %v599 = vunpack.c.l.b16 %v212
    %v600 = vunpack.c.l.b16 %v213
    %v601 = vunpack.c.l.b16 %v214
    %v602 = vunpack.c.l.b16 %v215
    %v603 = vunpack.c.l.b16 %v216
    %v604 = vunpack.c.l.b16 %v217
    %v605 = vunpack.c.l.b16 %v218
    %v606 = vpack.c.b16 %v463, %v462
    %v607 = vpack.c.b16 %v465, %v464
    %v608 = vpack.c.b16 %v467, %v466
    %v609 = vpack.c.b16 %v469, %v468
    %v610 = vpack.c.b16 %v471, %v470
    %v611 = vpack.c.b16 %v473, %v472
    %v612 = vpack.c.b16 %v475, %v474
    %v613 = vpack.c.b16 %v477, %v476
    %v614 = vpack.c.b16 %v479, %v478
    %v615 = vpack.c.b16 %v481, %v480
    %v616 = vpack.c.b16 %v483, %v482
    %v617 = vpack.c.b16 %v485, %v484
    %v618 = vpack.c.b16 %v487, %v486
    %v619 = vpack.c.b16 %v489, %v488
    %v620 = vpack.c.b16 %v491, %v490
    %v621 = vpack.c.b16 %v493, %v492
    %v622 = vpack.c.b16 %v495, %v494
    %v623 = vpack.c.b16 %v497, %v496
    %v624 = vpack.c.b16 %v499, %v498
    %v625 = vpack.c.b16 %v501, %v500
    %v626 = vpack.c.b16 %v503, %v502
    %v627 = vpack.c.b16 %v505, %v504
    %v628 = vpack.c.b16 %v507, %v506
    %v629 = vpack.c.b16 %v509, %v508
    %v630 = vpack.c.b16 %v511, %v510
    %v631 = vpack.c.b16 %v513, %v512
    %v632 = vpack.c.b16 %v515, %v514
    %v633 = vpack.c.b16 %v517, %v516
    %v634 = vpack.c.b16 %v519, %v518
    %v635 = vpack.c.b16 %v521, %v520
    %v636 = vpack.c.b16 %v523, %v522
    %v637 = vpack.c.b16 %v525, %v524
    %v638 = vpack.c.b16 %v527, %v526
    %v639 = vpack.c.b16 %v529, %v528
    %v640 = vpack.c.b16 %v531, %v530
    %v641 = vpack.c.b16 %v533, %v532
    %v642 = vpack.c.b16 %v535, %v534
    %v643 = vpack.c.b16 %v537, %v536
    %v644 = vpack.c.b16 %v539, %v538
    %v645 = vpack.c.b16 %v541, %v540
    %v646 = vpack.c.b16 %v543, %v542
    %v647 = vpack.c.b16 %v545, %v544
    %v648 = vpack.c.b16 %v547, %v546
    %v649 = vpack.c.b16 %v549, %v548
    %v650 = vpack.c.b16 %v551, %v550
    %v651 = vpack.c.b16 %v553, %v552
    %v652 = vpack.c.b16 %v555, %v554
    %v653 = vpack.c.b16 %v557, %v556
    %v654 = vpack.c.b16 %v559, %v558
    %v655 = vpack.c.b16 %v561, %v560
    %v656 = vpack.c.b16 %v563, %v562
    %v657 = vpack.c.b16 %v565, %v564
    %v658 = vpack.c.b16 %v567, %v566
    %v659 = vpack.c.b16 %v569, %v568
    %v660 = vpack.c.b16 %v571, %v570
    %v661 = vpack.c.b16 %v573, %v572
    %v662 = vpack.c.b16 %v575, %v574
    %v663 = vpack.c.b16 %v577, %v576
    %v664 = vpack.c.b16 %v579, %v578
    %v665 = vpack.c.b16 %v581, %v580
    %v666 = vpack.c.b16 %v583, %v582
    %v667 = vpack.c.b16 %v585, %v584
    %v668 = vpack.c.b16 %v587, %v586
    %v669 = vpack.c.b16 %v589, %v588
    %v670 = vpack.c.b16 %v591, %v590
    %v671 = vpack.c.b16 %v593, %v592
    %v672 = vpack.c.b16 %v595, %v594
    %v673 = vpack.c.b16 %v597, %v596
    %v674 = vpack.c.b16 %v599, %v598
    %v675 = vpack.c.b16 %v601, %v600
    %v676 = vpack.c.b16 %v603, %v602
    %v677 = vpack.c.b16 %v605, %v604
    %750 = vmatprep.subr.bf16.mxu0 0
    %751 = vmatpush1.bf16.msra.mxu0 %v606
    %752 = vmatprep.subr.bf16.mxu0 0
    %753 = vmatpush1.bf16.msra.mxu0 %v607
    %754 = vmatprep.subr.bf16.mxu0 0
    %755 = vmatpush1.bf16.msra.mxu0 %v608
    %756 = vmatprep.subr.bf16.mxu0 0
    %757 = vmatpush1.bf16.msra.mxu0 %v609
    %758 = vmatprep.subr.bf16.mxu0 0
    %759 = vmatpush1.bf16.msra.mxu0 %v610
    %760 = vmatprep.subr.bf16.mxu0 0
    %761 = vmatpush1.bf16.msra.mxu0 %v611
    %762 = vmatprep.subr.bf16.mxu0 0
    %763 = vmatpush1.bf16.msra.mxu0 %v612
    %764 = vmatprep.subr.bf16.mxu0 0
    %765 = vmatpush1.bf16.msra.mxu0 %v613
    %766 = vmatprep.subr.bf16.mxu0 0
    %767 = vmatpush1.bf16.msra.mxu0 %v614
    %768 = vmatprep.subr.bf16.mxu0 0
    %769 = vmatpush1.bf16.msra.mxu0 %v615
    %770 = vmatprep.subr.bf16.mxu0 0
    %771 = vmatpush1.bf16.msra.mxu0 %v616
    %772 = vmatprep.subr.bf16.mxu0 0
    %773 = vmatpush1.bf16.msra.mxu0 %v617
    %774 = vmatprep.subr.bf16.mxu0 0
    %775 = vmatpush1.bf16.msra.mxu0 %v618
    %776 = vmatprep.subr.bf16.mxu0 0
    %777 = vmatpush1.bf16.msra.mxu0 %v619
    %778 = vmatprep.subr.bf16.mxu0 0
    %779 = vmatpush1.bf16.msra.mxu0 %v620
    %780 = vmatprep.subr.bf16.mxu0 0
    %781 = vmatpush1.bf16.msra.mxu0 %v621
    %782 = vmatprep.mubr.bf16.mxu0 %v283
    %783 = vmatmul.mubr.bf16.gmra.mrb[0].mxu0 %v282
    %v784 = vpop.f32.mrb[0].mxu0
    %v785 = vadd.f32 %v224, %v784
    %v786 = vpop.f32.mrb[0].mxu0
    %v787 = vpop.f32.mrb[0].mxu0
    %v788 = vadd.f32 %v224, %v787
    %v789 = vpop.f32.mrb[0].mxu0
    %790 = vmatprep.mubr.bf16.mxu0 %v292
    %791 = vmatmul.mubr.bf16.gmra.mrb[0].mxu0 %v291
    %v792 = vpop.f32.mrb[0].mxu0
    %v793 = vadd.f32 %v224, %v792
    %v794 = vpop.f32.mrb[0].mxu0
    %v795 = vpop.f32.mrb[0].mxu0
    %v796 = vadd.f32 %v224, %v795
    %v797 = vpop.f32.mrb[0].mxu0
    %798 = vdwg.mxu0
    %799 = vmatprep.subr.bf16.mxu0 0
    %800 = vmatpush1.bf16.msra.mxu0 %v622
    %801 = vmatprep.subr.bf16.mxu0 0
    %802 = vmatpush1.bf16.msra.mxu0 %v623
    %803 = vmatprep.subr.bf16.mxu0 0
    %804 = vmatpush1.bf16.msra.mxu0 %v624
    %805 = vmatprep.subr.bf16.mxu0 0
    %806 = vmatpush1.bf16.msra.mxu0 %v625
    %807 = vmatprep.subr.bf16.mxu0 0
    %808 = vmatpush1.bf16.msra.mxu0 %v626
    %809 = vmatprep.subr.bf16.mxu0 0
    %810 = vmatpush1.bf16.msra.mxu0 %v627
    %811 = vmatprep.subr.bf16.mxu0 0
    %812 = vmatpush1.bf16.msra.mxu0 %v628
    %813 = vmatprep.subr.bf16.mxu0 0
    %814 = vmatpush1.bf16.msra.mxu0 %v629
    %815 = vmatprep.subr.bf16.mxu0 0
    %816 = vmatpush1.bf16.msra.mxu0 %v630
    %817 = vmatprep.subr.bf16.mxu0 0
    %818 = vmatpush1.bf16.msra.mxu0 %v631
    %819 = vmatprep.subr.bf16.mxu0 0
    %820 = vmatpush1.bf16.msra.mxu0 %v632
    %821 = vmatprep.subr.bf16.mxu0 0
    %822 = vmatpush1.bf16.msra.mxu0 %v633
    %823 = vmatprep.subr.bf16.mxu0 0
    %824 = vmatpush1.bf16.msra.mxu0 %v634
    %825 = vmatprep.subr.bf16.mxu0 0
    %826 = vmatpush1.bf16.msra.mxu0 %v635
    %827 = vmatprep.subr.bf16.mxu0 0
    %828 = vmatpush1.bf16.msra.mxu0 %v636
    %829 = vmatprep.subr.bf16.mxu0 0
    %830 = vmatpush1.bf16.msra.mxu0 %v637
    %831 = vmatprep.mubr.bf16.mxu0 %v285
    %832 = vmatmul.mubr.bf16.gmra.mrb[0].mxu0 %v284
    %v833 = vpop.f32.mrb[0].mxu0
    %v834 = vadd.f32 %v785, %v833
    %v835 = vpop.f32.mrb[0].mxu0
    %v836 = vpop.f32.mrb[0].mxu0
    %v837 = vadd.f32 %v788, %v836
    %v838 = vpop.f32.mrb[0].mxu0
    %839 = vmatprep.mubr.bf16.mxu0 %v294
    %840 = vmatmul.mubr.bf16.gmra.mrb[0].mxu0 %v293
    %v841 = vpop.f32.mrb[0].mxu0
    %v842 = vadd.f32 %v793, %v841
    %v843 = vpop.f32.mrb[0].mxu0
    %v844 = vpop.f32.mrb[0].mxu0
    %v845 = vadd.f32 %v796, %v844
    %v846 = vpop.f32.mrb[0].mxu0
    %847 = vdwg.mxu0
    %848 = vmatprep.subr.bf16.mxu0 0
    %849 = vmatpush1.bf16.msra.mxu0 %v638
    %850 = vmatprep.subr.bf16.mxu0 0
    %851 = vmatpush1.bf16.msra.mxu0 %v639
    %852 = vmatprep.subr.bf16.mxu0 0
    %853 = vmatpush1.bf16.msra.mxu0 %v640
    %854 = vmatprep.subr.bf16.mxu0 0
    %855 = vmatpush1.bf16.msra.mxu0 %v641
    %856 = vmatprep.subr.bf16.mxu0 0
    %857 = vmatpush1.bf16.msra.mxu0 %v642
    %858 = vmatprep.subr.bf16.mxu0 0
    %859 = vmatpush1.bf16.msra.mxu0 %v643
    %860 = vmatprep.subr.bf16.mxu0 0
    %861 = vmatpush1.bf16.msra.mxu0 %v644
    %862 = vmatprep.subr.bf16.mxu0 0
    %863 = vmatpush1.bf16.msra.mxu0 %v645
    %864 = vmatprep.subr.bf16.mxu0 0
    %865 = vmatpush1.bf16.msra.mxu0 %v646
    %866 = vmatprep.subr.bf16.mxu0 0
    %867 = vmatpush1.bf16.msra.mxu0 %v647
    %868 = vmatprep.subr.bf16.mxu0 0
    %869 = vmatpush1.bf16.msra.mxu0 %v648
    %870 = vmatprep.subr.bf16.mxu0 0
    %871 = vmatpush1.bf16.msra.mxu0 %v649
    %872 = vmatprep.subr.bf16.mxu0 0
    %873 = vmatpush1.bf16.msra.mxu0 %v650
    %874 = vmatprep.subr.bf16.mxu0 0
    %875 = vmatpush1.bf16.msra.mxu0 %v651
    %876 = vmatprep.subr.bf16.mxu0 0
    %877 = vmatpush1.bf16.msra.mxu0 %v652
    %878 = vmatprep.subr.bf16.mxu0 0
    %879 = vmatpush1.bf16.msra.mxu0 %v653
    %880 = vmatprep.mubr.bf16.mxu0 %v287
    %881 = vmatmul.mubr.bf16.gmra.mrb[0].mxu0 %v286
    %v882 = vpop.f32.mrb[0].mxu0
    %v883 = vadd.f32 %v834, %v882
    %v884 = vpop.f32.mrb[0].mxu0
    %v885 = vpop.f32.mrb[0].mxu0
    %v886 = vadd.f32 %v837, %v885
    %v887 = vpop.f32.mrb[0].mxu0
    %888 = vmatprep.mubr.bf16.mxu0 %v296
    %889 = vmatmul.mubr.bf16.gmra.mrb[0].mxu0 %v295
    %v890 = vpop.f32.mrb[0].mxu0
    %v891 = vadd.f32 %v842, %v890
    %v892 = vpop.f32.mrb[0].mxu0
    %v893 = vpop.f32.mrb[0].mxu0
    %v894 = vadd.f32 %v845, %v893
    %v895 = vpop.f32.mrb[0].mxu0
    %896 = vdwg.mxu0
    %897 = vmatprep.subr.bf16.mxu0 0
    %898 = vmatpush1.bf16.msra.mxu0 %v654
    %899 = vmatprep.subr.bf16.mxu0 0
    %900 = vmatpush1.bf16.msra.mxu0 %v655
    %901 = vmatprep.subr.bf16.mxu0 0
    %902 = vmatpush1.bf16.msra.mxu0 %v656
    %903 = vmatprep.subr.bf16.mxu0 0
    %904 = vmatpush1.bf16.msra.mxu0 %v657
    %905 = vmatprep.subr.bf16.mxu0 0
    %906 = vmatpush1.bf16.msra.mxu0 %v658
    %907 = vmatprep.subr.bf16.mxu0 0
    %908 = vmatpush1.bf16.msra.mxu0 %v659
    %909 = vmatprep.subr.bf16.mxu0 0
    %910 = vmatpush1.bf16.msra.mxu0 %v660
    %911 = vmatprep.subr.bf16.mxu0 0
    %912 = vmatpush1.bf16.msra.mxu0 %v661
    %913 = vmatprep.subr.bf16.mxu0 0
    %914 = vmatpush1.bf16.msra.mxu0 %v662
    %915 = vmatprep.subr.bf16.mxu0 0
    %916 = vmatpush1.bf16.msra.mxu0 %v663
    %917 = vmatprep.subr.bf16.mxu0 0
    %918 = vmatpush1.bf16.msra.mxu0 %v664
    %919 = vmatprep.subr.bf16.mxu0 0
    %920 = vmatpush1.bf16.msra.mxu0 %v665
    %921 = vmatprep.subr.bf16.mxu0 0
    %922 = vmatpush1.bf16.msra.mxu0 %v666
    %923 = vmatprep.subr.bf16.mxu0 0
    %924 = vmatpush1.bf16.msra.mxu0 %v667
    %925 = vmatprep.subr.bf16.mxu0 0
    %926 = vmatpush1.bf16.msra.mxu0 %v668
    %927 = vmatprep.subr.bf16.mxu0 0
    %928 = vmatpush1.bf16.msra.mxu0 %v669
    %929 = vmatprep.mubr.bf16.mxu0 %v289
    %930 = vmatmul.mubr.bf16.gmra.mrb[0].mxu0 %v288
    %v931 = vpop.f32.mrb[0].mxu0
    %v932 = vadd.f32 %v883, %v931
    %v933 = vpop.f32.mrb[0].mxu0
    %v934 = vpop.f32.mrb[0].mxu0
    %v935 = vadd.f32 %v886, %v934
    %v936 = vpop.f32.mrb[0].mxu0
    %937 = vmatprep.mubr.bf16.mxu0 %v298
    %938 = vmatmul.mubr.bf16.gmra.mrb[0].mxu0 %v297
    %v939 = vpop.f32.mrb[0].mxu0
    %v940 = vadd.f32 %v891, %v939
    %v941 = vpop.f32.mrb[0].mxu0
    %v942 = vpop.f32.mrb[0].mxu0
    %v943 = vadd.f32 %v894, %v942
    %v944 = vpop.f32.mrb[0].mxu0
    %945 = vdwg.mxu0
    %946 = vmatprep.subr.bf16.mxu0 0
    %947 = vmatpush1.bf16.msra.mxu0 %v670
    %948 = vmatprep.subr.bf16.mxu0 0
    %949 = vmatpush1.bf16.msra.mxu0 %v671
    %950 = vmatprep.subr.bf16.mxu0 0
    %951 = vmatpush1.bf16.msra.mxu0 %v672
    %952 = vmatprep.subr.bf16.mxu0 0
    %953 = vmatpush1.bf16.msra.mxu0 %v673
    %954 = vmatprep.subr.bf16.mxu0 0
    %955 = vmatpush1.bf16.msra.mxu0 %v674
    %956 = vmatprep.subr.bf16.mxu0 0
    %957 = vmatpush1.bf16.msra.mxu0 %v675
    %958 = vmatprep.subr.bf16.mxu0 0
    %959 = vmatpush1.bf16.msra.mxu0 %v676
    %960 = vmatprep.subr.bf16.mxu0 0
    %961 = vmatpush1.bf16.msra.mxu0 %v677
    %962 = vmatprep.subr.bf16.mxu0 0
    %963 = vmatpush1.bf16.msra.mxu0 0
    %964 = vmatprep.subr.bf16.mxu0 0
    %965 = vmatpush1.bf16.msra.mxu0 0
    %966 = vmatprep.subr.bf16.mxu0 0
    %967 = vmatpush1.bf16.msra.mxu0 0
    %968 = vmatprep.subr.bf16.mxu0 0
    %969 = vmatpush1.bf16.msra.mxu0 0
    %970 = vmatprep.subr.bf16.mxu0 0
    %971 = vmatpush1.bf16.msra.mxu0 0
    %972 = vmatprep.subr.bf16.mxu0 0
    %973 = vmatpush1.bf16.msra.mxu0 0
    %974 = vmatprep.subr.bf16.mxu0 0
    %975 = vmatpush1.bf16.msra.mxu0 0
    %976 = vmatprep.subr.bf16.mxu0 0
    %977 = vmatpush1.bf16.msra.mxu0 0
    %978 = vmatprep.mubr.bf16.mxu0 0
    %979 = vmatmul.mubr.bf16.gmra.mrb[0].mxu0 %v290
    %v980 = vpop.f32.mrb[0].mxu0
    %v981 = vadd.f32 %v932, %v980
    %v982 = vpop.f32.mrb[0].mxu0
    %v983 = vpop.f32.mrb[0].mxu0
    %v984 = vadd.f32 %v935, %v983
    %v985 = vpop.f32.mrb[0].mxu0
    %986 = vmatprep.mubr.bf16.mxu0 0
    %987 = vmatmul.mubr.bf16.gmra.mrb[0].mxu0 %v299
    %v988 = vpop.f32.mrb[0].mxu0
    %v989 = vadd.f32 %v940, %v988
    %v990 = vpop.f32.mrb[0].mxu0
    %v991 = vpop.f32.mrb[0].mxu0
    %v992 = vadd.f32 %v943, %v991
    %v993 = vpop.f32.mrb[0].mxu0
    %994 = vdwg.mxu0
    %vm995 = vcmp.gt.f32.partialorder %v981, 0.0
    %vm996 = vcmp.gt.f32.partialorder %v984, 0.0
    %vm997 = vcmp.gt.f32.partialorder %v989, 0.0
    %vm998 = vcmp.gt.f32.partialorder %v992, 0.0
    %v999 = vmul.f32 %v981, 0.01
    %v1000 = vmul.f32 %v984, 0.01
    %v1001 = vmul.f32 %v989, 0.01
    %v1002 = vmul.f32 %v992, 0.01
    %v1003 = vsel %vm995, %v981, %v999
    %v1004 = vsel %vm996, %v984, %v1000
    %v1005 = vsel %vm997, %v989, %v1001
    %v1006 = vsel %vm998, %v992, %v1002
    %v1007 = vpack.c.bf16 %v1004, %v1003
    %v1008 = vpack.c.bf16 %v1006, %v1005
    %v1011 = vunpack.c.l.b16 %v1007
    %v1012 = vunpack.c.h.b16 %v1007
    %v1013 = vunpack.c.l.b16 %v1008
    %v1014 = vunpack.c.h.b16 %v1008
    %v1015 = vpack.c.b16 %v1011, %v1011
    %v1016 = vpack.c.b16 %v1012, %v1012
    %v1017 = vpack.c.b16 %v1013, %v1013
    %v1018 = vpack.c.b16 %v1014, %v1014
    %1023 = vst [vmem:[#allocation8] sm:$0xf] %v1015
    %1024 = vst [vmem:[#allocation8 + $0x4] sm:$0xf] %v1016
    %1025 = vst [vmem:[#allocation8 + $0x8] sm:$0xf] %v1017
    %1026 = vst [vmem:[#allocation8 + $0xc] sm:$0xf] %v1018
    // Predicated region
    $region26: #{_lambda_.5} parent=1 // pred_check
      _
    $region27: #{_lambda_.5} parent=1 // pred_check_branch
      %1028 = sbr.rel (0) target = $region29
    $region28: #{_lambda_.5} parent=1 // pred_region
      %s1030 = ssub.s32 256, 256
      %1031 = vsyncadd [#allocation4], %s1030
      %s1032 = sshll.u32 [#allocation8], 4
      %s1033 = int_to_ptr.vmem [resolvable:$true] %s1032
      %1038 = dma.vmem_to_hbm [thread:$0]  %s1033, 256, %s3, [#allocation4], 64, 64, 4
    $region29: #{_lambda_.5} parent=1 // pred_fallthru
      _
    // Predicated region
    $region30: #{_lambda_.5} parent=1 // pred_check
      _
    $region31: #{_lambda_.5} parent=1 // pred_check_branch
      %1040 = sbr.rel (0) target = $region33
    $region32: #{_lambda_.5} parent=1 // pred_region
      %1041 = dma.done [#allocation4], 256
    $region33: #{_lambda_.5} parent=1 // pred_fallthru
      _
    %1042 = vsyncpa [#allocation3], 1
    %1043 = vsyncpa [#allocation6], 1
    %1044 = vsyncpa [#allocation4], 1

// kernel: _lambda_.6
$region0: #{_lambda_.6}
  #allocation0 [shape = 'u32[]', space=smem, size = 0x4, offset = 0x4, fixed_abs, tag = 'smem constant byte address 0x4 - core index']
  #allocation1 [shape = 'u32[144,128]{1,0:T(1,128)}', space=vmem, size = 0x12000, scoped, tag = 'internal scratch']
  %s0 = inlined_call_operand.hbm [shape: bf16[8,1152], index: 0, kind: input, shape index: {}]
  %s1 = inlined_call_operand.hbm [shape: bf16[1152,128], index: 1, kind: input, shape index: {}]
  %s2 = inlined_call_operand.hbm [shape: f32[1,128], index: 2, kind: input, shape index: {}]
  %s3 = inlined_call_operand.hbm [shape: bf16[8,128], index: 3, kind: output, shape index: {}]
  %s4 = sld [smem:[#allocation0]]
  $region34: #{_lambda_.6} parent=0
    _
  %s6 = ssub.s32 1, %s4
  %s7 = scalar_select 0, %s6, %s4
  $region1: #{_lambda_.6} parent=0
    #allocation2 [shape = 'u8[18432]{0}', space=vmem, size = 0x4800, scoped, tag = 'input window, operand 0, single buffered']
    #allocation3 [shape = 's32[1]{0}', space=sflag, size = 0x4, scoped, tag = 'scoped memory for _lambda_.6']
    #allocation4 [shape = 's32[1]{0}', space=sflag, size = 0x4, scoped, tag = 'scoped memory for _lambda_.6']
    #allocation5 [shape = 'u8[294912]{0}', space=vmem, size = 0x48000, scoped, tag = 'input window, operand 1, single buffered']
    #allocation6 [shape = 's32[1]{0}', space=sflag, size = 0x4, scoped, tag = 'scoped memory for _lambda_.6']
    #allocation7 [shape = 'u8[512]{0}', space=vmem, size = 0x400, scoped, tag = 'input window, operand 2, single buffered']
    #allocation8 [shape = 'u8[2048]{0}', space=vmem, size = 0x800, scoped, tag = 'output window, operand 0, single buffered']
    %8 = vsyncpa [#allocation3], 0
    %9 = vsyncpa [#allocation6], 0
    %10 = vsyncpa [#allocation4], 0
    // Predicated region
    $region2: #{_lambda_.6} parent=1 // pred_check
      _
    $region3: #{_lambda_.6} parent=1 // pred_check_branch
      %12 = sbr.rel (0) target = $region5
    $region4: #{_lambda_.6} parent=1 // pred_region
      %s14 = ssub.s32 576, 576
      %15 = vsyncadd [#allocation3], %s14
      %s17 = sshll.u32 [#allocation2], 4
      %s18 = int_to_ptr.vmem [resolvable:$true] %s17
      %20 = dma.hbm_to_vmem [thread:$0]  %s0, 576, %s18, [#allocation3]
    $region5: #{_lambda_.6} parent=1 // pred_fallthru
      _
    // Predicated region
    $region6: #{_lambda_.6} parent=1 // pred_check
      _
    $region7: #{_lambda_.6} parent=1 // pred_check_branch
      %22 = sbr.rel (0) target = $region9
    $region8: #{_lambda_.6} parent=1 // pred_region
      %s24 = ssub.s32 9216, 9216
      %25 = vsyncadd [#allocation6], %s24
      %s26 = sshll.u32 [#allocation5], 4
      %s27 = int_to_ptr.vmem [resolvable:$true] %s26
      %32 = dma.hbm_to_vmem [thread:$0]  %s1, 9216, %s27, [#allocation6], 64, 64, 4
    $region9: #{_lambda_.6} parent=1 // pred_fallthru
      _
    // Predicated region
    $region10: #{_lambda_.6} parent=1 // pred_check
      _
    $region11: #{_lambda_.6} parent=1 // pred_check_branch
      %34 = sbr.rel (0) target = $region13
    $region12: #{_lambda_.6} parent=1 // pred_region
      %s36 = ssub.s32 16, 16
      %37 = vsyncadd [#allocation6], %s36
      %s39 = sshll.u32 [#allocation7], 4
      %s40 = int_to_ptr.vmem [resolvable:$true] %s39
      %42 = dma.hbm_to_vmem [thread:$0]  %s2, 16, %s40, [#allocation6]
    $region13: #{_lambda_.6} parent=1 // pred_fallthru
      _
    // Predicated region
    $region14: #{_lambda_.6} parent=1 // pred_check
      _
    $region15: #{_lambda_.6} parent=1 // pred_check_branch
      %44 = sbr.rel (0) target = $region17
    $region16: #{_lambda_.6} parent=1 // pred_region
      %45 = dma.done [#allocation3], 576
    $region17: #{_lambda_.6} parent=1 // pred_fallthru
      _
    // Predicated region
    $region18: #{_lambda_.6} parent=1 // pred_check
      _
    $region19: #{_lambda_.6} parent=1 // pred_check_branch
      %47 = sbr.rel (0) target = $region21
    $region20: #{_lambda_.6} parent=1 // pred_region
      %48 = dma.done [#allocation6], 9216
    $region21: #{_lambda_.6} parent=1 // pred_fallthru
      _
    // Predicated region
    $region22: #{_lambda_.6} parent=1 // pred_check
      _
    $region23: #{_lambda_.6} parent=1 // pred_check_branch
      %50 = sbr.rel (0) target = $region25
    $region24: #{_lambda_.6} parent=1 // pred_region
      %51 = dma.done [#allocation6], 16
    $region25: #{_lambda_.6} parent=1 // pred_fallthru
      _
    %v53 = vld [vmem:[#allocation2] sm:$0xff]
    %v54 = vld [vmem:[#allocation2 + $0x8] sm:$0xff]
    %v55 = vld [vmem:[#allocation2 + $0x10] sm:$0xff]
    %v56 = vld [vmem:[#allocation2 + $0x18] sm:$0xff]
    %v57 = vld [vmem:[#allocation2 + $0x20] sm:$0xf]
    %v58 = vld [vmem:[#allocation5] sm:$0xf]
    %v59 = vld [vmem:[#allocation5 + $0x4] sm:$0xf]
    %v60 = vld [vmem:[#allocation5 + $0x8] sm:$0xf]
    %v61 = vld [vmem:[#allocation5 + $0xc] sm:$0xf]
    %v62 = vld [vmem:[#allocation5 + $0x10] sm:$0xf]
    %v63 = vld [vmem:[#allocation5 + $0x14] sm:$0xf]
    %v64 = vld [vmem:[#allocation5 + $0x18] sm:$0xf]
    %v65 = vld [vmem:[#allocation5 + $0x1c] sm:$0xf]
    %v66 = vld [vmem:[#allocation5 + $0x20] sm:$0xf]
    %v67 = vld [vmem:[#allocation5 + $0x24] sm:$0xf]
    %v68 = vld [vmem:[#allocation5 + $0x28] sm:$0xf]
    %v69 = vld [vmem:[#allocation5 + $0x2c] sm:$0xf]
    %v70 = vld [vmem:[#allocation5 + $0x30] sm:$0xf]
    %v71 = vld [vmem:[#allocation5 + $0x34] sm:$0xf]
    %v72 = vld [vmem:[#allocation5 + $0x38] sm:$0xf]
    %v73 = vld [vmem:[#allocation5 + $0x3c] sm:$0xf]
    %v74 = vld [vmem:[#allocation5 + $0x40] sm:$0xf]
    %v75 = vld [vmem:[#allocation5 + $0x44] sm:$0xf]
    %v76 = vld [vmem:[#allocation5 + $0x48] sm:$0xf]
    %v77 = vld [vmem:[#allocation5 + $0x4c] sm:$0xf]
    %v78 = vld [vmem:[#allocation5 + $0x50] sm:$0xf]
    %v79 = vld [vmem:[#allocation5 + $0x54] sm:$0xf]
    %v80 = vld [vmem:[#allocation5 + $0x58] sm:$0xf]
    %v81 = vld [vmem:[#allocation5 + $0x5c] sm:$0xf]
    %v82 = vld [vmem:[#allocation5 + $0x60] sm:$0xf]
    %v83 = vld [vmem:[#allocation5 + $0x64] sm:$0xf]
    %v84 = vld [vmem:[#allocation5 + $0x68] sm:$0xf]
    %v85 = vld [vmem:[#allocation5 + $0x6c] sm:$0xf]
    %v86 = vld [vmem:[#allocation5 + $0x70] sm:$0xf]
    %v87 = vld [vmem:[#allocation5 + $0x74] sm:$0xf]
    %v88 = vld [vmem:[#allocation5 + $0x78] sm:$0xf]
    %v89 = vld [vmem:[#allocation5 + $0x7c] sm:$0xf]
    %v90 = vld [vmem:[#allocation5 + $0x80] sm:$0xf]
    %v91 = vld [vmem:[#allocation5 + $0x84] sm:$0xf]
    %v92 = vld [vmem:[#allocation5 + $0x88] sm:$0xf]
    %v93 = vld [vmem:[#allocation5 + $0x8c] sm:$0xf]
    %v94 = vld [vmem:[#allocation5 + $0x90] sm:$0xf]
    %v95 = vld [vmem:[#allocation5 + $0x94] sm:$0xf]
    %v96 = vld [vmem:[#allocation5 + $0x98] sm:$0xf]
    %v97 = vld [vmem:[#allocation5 + $0x9c] sm:$0xf]
    %v98 = vld [vmem:[#allocation5 + $0xa0] sm:$0xf]
    %v99 = vld [vmem:[#allocation5 + $0xa4] sm:$0xf]
    %v100 = vld [vmem:[#allocation5 + $0xa8] sm:$0xf]
    %v101 = vld [vmem:[#allocation5 + $0xac] sm:$0xf]
    %v102 = vld [vmem:[#allocation5 + $0xb0] sm:$0xf]
    %v103 = vld [vmem:[#allocation5 + $0xb4] sm:$0xf]
    %v104 = vld [vmem:[#allocation5 + $0xb8] sm:$0xf]
    %v105 = vld [vmem:[#allocation5 + $0xbc] sm:$0xf]
    %v106 = vld [vmem:[#allocation5 + $0xc0] sm:$0xf]
    %v107 = vld [vmem:[#allocation5 + $0xc4] sm:$0xf]
    %v108 = vld [vmem:[#allocation5 + $0xc8] sm:$0xf]
    %v109 = vld [vmem:[#allocation5 + $0xcc] sm:$0xf]
    %v110 = vld [vmem:[#allocation5 + $0xd0] sm:$0xf]
    %v111 = vld [vmem:[#allocation5 + $0xd4] sm:$0xf]
    %v112 = vld [vmem:[#allocation5 + $0xd8] sm:$0xf]
    %v113 = vld [vmem:[#allocation5 + $0xdc] sm:$0xf]
    %v114 = vld [vmem:[#allocation5 + $0xe0] sm:$0xf]
    %v115 = vld [vmem:[#allocation5 + $0xe4] sm:$0xf]
    %v116 = vld [vmem:[#allocation5 + $0xe8] sm:$0xf]
    %v117 = vld [vmem:[#allocation5 + $0xec] sm:$0xf]
    %v118 = vld [vmem:[#allocation5 + $0xf0] sm:$0xf]
    %v119 = vld [vmem:[#allocation5 + $0xf4] sm:$0xf]
    %v120 = vld [vmem:[#allocation5 + $0xf8] sm:$0xf]
    %v121 = vld [vmem:[#allocation5 + $0xfc] sm:$0xf]
    %v122 = vld [vmem:[#allocation5 + $0x100] sm:$0xf]
    %v123 = vld [vmem:[#allocation5 + $0x104] sm:$0xf]
    %v124 = vld [vmem:[#allocation5 + $0x108] sm:$0xf]
    %v125 = vld [vmem:[#allocation5 + $0x10c] sm:$0xf]
    %v126 = vld [vmem:[#allocation5 + $0x110] sm:$0xf]
    %v127 = vld [vmem:[#allocation5 + $0x114] sm:$0xf]
    %v128 = vld [vmem:[#allocation5 + $0x118] sm:$0xf]
    %v129 = vld [vmem:[#allocation5 + $0x11c] sm:$0xf]
    %v130 = vld [vmem:[#allocation5 + $0x120] sm:$0xf]
    %v131 = vld [vmem:[#allocation5 + $0x124] sm:$0xf]
    %v132 = vld [vmem:[#allocation5 + $0x128] sm:$0xf]
    %v133 = vld [vmem:[#allocation5 + $0x12c] sm:$0xf]
    %v134 = vld [vmem:[#allocation5 + $0x130] sm:$0xf]
    %v135 = vld [vmem:[#allocation5 + $0x134] sm:$0xf]
    %v136 = vld [vmem:[#allocation5 + $0x138] sm:$0xf]
    %v137 = vld [vmem:[#allocation5 + $0x13c] sm:$0xf]
    %v138 = vld [vmem:[#allocation5 + $0x140] sm:$0xf]
    %v139 = vld [vmem:[#allocation5 + $0x144] sm:$0xf]
    %v140 = vld [vmem:[#allocation5 + $0x148] sm:$0xf]
    %v141 = vld [vmem:[#allocation5 + $0x14c] sm:$0xf]
    %v142 = vld [vmem:[#allocation5 + $0x150] sm:$0xf]
    %v143 = vld [vmem:[#allocation5 + $0x154] sm:$0xf]
    %v144 = vld [vmem:[#allocation5 + $0x158] sm:$0xf]
    %v145 = vld [vmem:[#allocation5 + $0x15c] sm:$0xf]
    %v146 = vld [vmem:[#allocation5 + $0x160] sm:$0xf]
    %v147 = vld [vmem:[#allocation5 + $0x164] sm:$0xf]
    %v148 = vld [vmem:[#allocation5 + $0x168] sm:$0xf]
    %v149 = vld [vmem:[#allocation5 + $0x16c] sm:$0xf]
    %v150 = vld [vmem:[#allocation5 + $0x170] sm:$0xf]
    %v151 = vld [vmem:[#allocation5 + $0x174] sm:$0xf]
    %v152 = vld [vmem:[#allocation5 + $0x178] sm:$0xf]
    %v153 = vld [vmem:[#allocation5 + $0x17c] sm:$0xf]
    %v154 = vld [vmem:[#allocation5 + $0x180] sm:$0xf]
    %v155 = vld [vmem:[#allocation5 + $0x184] sm:$0xf]
    %v156 = vld [vmem:[#allocation5 + $0x188] sm:$0xf]
    %v157 = vld [vmem:[#allocation5 + $0x18c] sm:$0xf]
    %v158 = vld [vmem:[#allocation5 + $0x190] sm:$0xf]
    %v159 = vld [vmem:[#allocation5 + $0x194] sm:$0xf]
    %v160 = vld [vmem:[#allocation5 + $0x198] sm:$0xf]
    %v161 = vld [vmem:[#allocation5 + $0x19c] sm:$0xf]
    %v162 = vld [vmem:[#allocation5 + $0x1a0] sm:$0xf]
    %v163 = vld [vmem:[#allocation5 + $0x1a4] sm:$0xf]
    %v164 = vld [vmem:[#allocation5 + $0x1a8] sm:$0xf]
    %v165 = vld [vmem:[#allocation5 + $0x1ac] sm:$0xf]
    %v166 = vld [vmem:[#allocation5 + $0x1b0] sm:$0xf]
    %v167 = vld [vmem:[#allocation5 + $0x1b4] sm:$0xf]
    %v168 = vld [vmem:[#allocation5 + $0x1b8] sm:$0xf]
    %v169 = vld [vmem:[#allocation5 + $0x1bc] sm:$0xf]
    %v170 = vld [vmem:[#allocation5 + $0x1c0] sm:$0xf]
    %v171 = vld [vmem:[#allocation5 + $0x1c4] sm:$0xf]
    %v172 = vld [vmem:[#allocation5 + $0x1c8] sm:$0xf]
    %v173 = vld [vmem:[#allocation5 + $0x1cc] sm:$0xf]
    %v174 = vld [vmem:[#allocation5 + $0x1d0] sm:$0xf]
    %v175 = vld [vmem:[#allocation5 + $0x1d4] sm:$0xf]
    %v176 = vld [vmem:[#allocation5 + $0x1d8] sm:$0xf]
    %v177 = vld [vmem:[#allocation5 + $0x1dc] sm:$0xf]
    %v178 = vld [vmem:[#allocation5 + $0x1e0] sm:$0xf]
    %v179 = vld [vmem:[#allocation5 + $0x1e4] sm:$0xf]
    %v180 = vld [vmem:[#allocation5 + $0x1e8] sm:$0xf]
    %v181 = vld [vmem:[#allocation5 + $0x1ec] sm:$0xf]
    %v182 = vld [vmem:[#allocation5 + $0x1f0] sm:$0xf]
    %v183 = vld [vmem:[#allocation5 + $0x1f4] sm:$0xf]
    %v184 = vld [vmem:[#allocation5 + $0x1f8] sm:$0xf]
    %v185 = vld [vmem:[#allocation5 + $0x1fc] sm:$0xf]
    %v186 = vld [vmem:[#allocation5 + $0x200] sm:$0xf]
    %v187 = vld [vmem:[#allocation5 + $0x204] sm:$0xf]
    %v188 = vld [vmem:[#allocation5 + $0x208] sm:$0xf]
    %v189 = vld [vmem:[#allocation5 + $0x20c] sm:$0xf]
    %v190 = vld [vmem:[#allocation5 + $0x210] sm:$0xf]
    %v191 = vld [vmem:[#allocation5 + $0x214] sm:$0xf]
    %v192 = vld [vmem:[#allocation5 + $0x218] sm:$0xf]
    %v193 = vld [vmem:[#allocation5 + $0x21c] sm:$0xf]
    %v194 = vld [vmem:[#allocation5 + $0x220] sm:$0xf]
    %v195 = vld [vmem:[#allocation5 + $0x224] sm:$0xf]
    %v196 = vld [vmem:[#allocation5 + $0x228] sm:$0xf]
    %v197 = vld [vmem:[#allocation5 + $0x22c] sm:$0xf]
    %v198 = vld [vmem:[#allocation5 + $0x230] sm:$0xf]
    %v199 = vld [vmem:[#allocation5 + $0x234] sm:$0xf]
    %v200 = vld [vmem:[#allocation5 + $0x238] sm:$0xf]
    %v201 = vld [vmem:[#allocation5 + $0x23c] sm:$0xf]
    %v202 = vld [vmem:[#allocation7] sm:$0x1]
    %v204 = vlaneseq
    %v205 = vshrl.u32 %v204, 7
    %v206 = vsub.s32 0, %v205
    %v207 = vrot.slane %v202, %v206
    %v214 = vunpack.c.l.b16 %v53
    %v215 = vunpack.c.h.b16 %v53
    %v216 = vunpack.c.l.b16 %v54
    %v217 = vunpack.c.h.b16 %v54
    %v218 = vunpack.c.l.b16 %v55
    %v219 = vunpack.c.h.b16 %v55
    %v220 = vunpack.c.l.b16 %v56
    %v221 = vunpack.c.h.b16 %v56
    %v222 = vunpack.c.l.b16 %v57
    %v223 = vpack.c.b16 %v214, %v214
    %v224 = vpack.c.b16 %v215, %v215
    %v225 = vpack.c.b16 %v216, %v216
    %v226 = vpack.c.b16 %v217, %v217
    %v227 = vpack.c.b16 %v218, %v218
    %v228 = vpack.c.b16 %v219, %v219
    %v229 = vpack.c.b16 %v220, %v220
    %v230 = vpack.c.b16 %v221, %v221
    %v231 = vpack.c.b16 %v222, %v222
    %v385 = vunpack.c.l.b16 %v58
    %v386 = vunpack.c.l.b16 %v59
    %v387 = vunpack.c.l.b16 %v60
    %v388 = vunpack.c.l.b16 %v61
    %v389 = vunpack.c.l.b16 %v62
    %v390 = vunpack.c.l.b16 %v63
    %v391 = vunpack.c.l.b16 %v64
    %v392 = vunpack.c.l.b16 %v65
    %v393 = vunpack.c.l.b16 %v66
    %v394 = vunpack.c.l.b16 %v67
    %v395 = vunpack.c.l.b16 %v68
    %v396 = vunpack.c.l.b16 %v69
    %v397 = vunpack.c.l.b16 %v70
    %v398 = vunpack.c.l.b16 %v71
    %v399 = vunpack.c.l.b16 %v72
    %v400 = vunpack.c.l.b16 %v73
    %v401 = vunpack.c.l.b16 %v74
    %v402 = vunpack.c.l.b16 %v75
    %v403 = vunpack.c.l.b16 %v76
    %v404 = vunpack.c.l.b16 %v77
    %v405 = vunpack.c.l.b16 %v78
    %v406 = vunpack.c.l.b16 %v79
    %v407 = vunpack.c.l.b16 %v80
    %v408 = vunpack.c.l.b16 %v81
    %v409 = vunpack.c.l.b16 %v82
    %v410 = vunpack.c.l.b16 %v83
    %v411 = vunpack.c.l.b16 %v84
    %v412 = vunpack.c.l.b16 %v85
    %v413 = vunpack.c.l.b16 %v86
    %v414 = vunpack.c.l.b16 %v87
    %v415 = vunpack.c.l.b16 %v88
    %v416 = vunpack.c.l.b16 %v89
    %v417 = vunpack.c.l.b16 %v90
    %v418 = vunpack.c.l.b16 %v91
    %v419 = vunpack.c.l.b16 %v92
    %v420 = vunpack.c.l.b16 %v93
    %v421 = vunpack.c.l.b16 %v94
    %v422 = vunpack.c.l.b16 %v95
    %v423 = vunpack.c.l.b16 %v96
    %v424 = vunpack.c.l.b16 %v97
    %v425 = vunpack.c.l.b16 %v98
    %v426 = vunpack.c.l.b16 %v99
    %v427 = vunpack.c.l.b16 %v100
    %v428 = vunpack.c.l.b16 %v101
    %v429 = vunpack.c.l.b16 %v102
    %v430 = vunpack.c.l.b16 %v103
    %v431 = vunpack.c.l.b16 %v104
    %v432 = vunpack.c.l.b16 %v105
    %v433 = vunpack.c.l.b16 %v106
    %v434 = vunpack.c.l.b16 %v107
    %v435 = vunpack.c.l.b16 %v108
    %v436 = vunpack.c.l.b16 %v109
    %v437 = vunpack.c.l.b16 %v110
    %v438 = vunpack.c.l.b16 %v111
    %v439 = vunpack.c.l.b16 %v112
    %v440 = vunpack.c.l.b16 %v113
    %v441 = vunpack.c.l.b16 %v114
    %v442 = vunpack.c.l.b16 %v115
    %v443 = vunpack.c.l.b16 %v116
    %v444 = vunpack.c.l.b16 %v117
    %v445 = vunpack.c.l.b16 %v118
    %v446 = vunpack.c.l.b16 %v119
    %v447 = vunpack.c.l.b16 %v120
    %v448 = vunpack.c.l.b16 %v121
    %v449 = vunpack.c.l.b16 %v122
    %v450 = vunpack.c.l.b16 %v123
    %v451 = vunpack.c.l.b16 %v124
    %v452 = vunpack.c.l.b16 %v125
    %v453 = vunpack.c.l.b16 %v126
    %v454 = vunpack.c.l.b16 %v127
    %v455 = vunpack.c.l.b16 %v128
    %v456 = vunpack.c.l.b16 %v129
    %v457 = vunpack.c.l.b16 %v130
    %v458 = vunpack.c.l.b16 %v131
    %v459 = vunpack.c.l.b16 %v132
    %v460 = vunpack.c.l.b16 %v133
    %v461 = vunpack.c.l.b16 %v134
    %v462 = vunpack.c.l.b16 %v135
    %v463 = vunpack.c.l.b16 %v136
    %v464 = vunpack.c.l.b16 %v137
    %v465 = vunpack.c.l.b16 %v138
    %v466 = vunpack.c.l.b16 %v139
    %v467 = vunpack.c.l.b16 %v140
    %v468 = vunpack.c.l.b16 %v141
    %v469 = vunpack.c.l.b16 %v142
    %v470 = vunpack.c.l.b16 %v143
    %v471 = vunpack.c.l.b16 %v144
    %v472 = vunpack.c.l.b16 %v145
    %v473 = vunpack.c.l.b16 %v146
    %v474 = vunpack.c.l.b16 %v147
    %v475 = vunpack.c.l.b16 %v148
    %v476 = vunpack.c.l.b16 %v149
    %v477 = vunpack.c.l.b16 %v150
    %v478 = vunpack.c.l.b16 %v151
    %v479 = vunpack.c.l.b16 %v152
    %v480 = vunpack.c.l.b16 %v153
    %v481 = vunpack.c.l.b16 %v154
    %v482 = vunpack.c.l.b16 %v155
    %v483 = vunpack.c.l.b16 %v156
    %v484 = vunpack.c.l.b16 %v157
    %v485 = vunpack.c.l.b16 %v158
    %v486 = vunpack.c.l.b16 %v159
    %v487 = vunpack.c.l.b16 %v160
    %v488 = vunpack.c.l.b16 %v161
    %v489 = vunpack.c.l.b16 %v162
    %v490 = vunpack.c.l.b16 %v163
    %v491 = vunpack.c.l.b16 %v164
    %v492 = vunpack.c.l.b16 %v165
    %v493 = vunpack.c.l.b16 %v166
    %v494 = vunpack.c.l.b16 %v167
    %v495 = vunpack.c.l.b16 %v168
    %v496 = vunpack.c.l.b16 %v169
    %v497 = vunpack.c.l.b16 %v170
    %v498 = vunpack.c.l.b16 %v171
    %v499 = vunpack.c.l.b16 %v172
    %v500 = vunpack.c.l.b16 %v173
    %v501 = vunpack.c.l.b16 %v174
    %v502 = vunpack.c.l.b16 %v175
    %v503 = vunpack.c.l.b16 %v176
    %v504 = vunpack.c.l.b16 %v177
    %v505 = vunpack.c.l.b16 %v178
    %v506 = vunpack.c.l.b16 %v179
    %v507 = vunpack.c.l.b16 %v180
    %v508 = vunpack.c.l.b16 %v181
    %v509 = vunpack.c.l.b16 %v182
    %v510 = vunpack.c.l.b16 %v183
    %v511 = vunpack.c.l.b16 %v184
    %v512 = vunpack.c.l.b16 %v185
    %v513 = vunpack.c.l.b16 %v186
    %v514 = vunpack.c.l.b16 %v187
    %v515 = vunpack.c.l.b16 %v188
    %v516 = vunpack.c.l.b16 %v189
    %v517 = vunpack.c.l.b16 %v190
    %v518 = vunpack.c.l.b16 %v191
    %v519 = vunpack.c.l.b16 %v192
    %v520 = vunpack.c.l.b16 %v193
    %v521 = vunpack.c.l.b16 %v194
    %v522 = vunpack.c.l.b16 %v195
    %v523 = vunpack.c.l.b16 %v196
    %v524 = vunpack.c.l.b16 %v197
    %v525 = vunpack.c.l.b16 %v198
    %v526 = vunpack.c.l.b16 %v199
    %v527 = vunpack.c.l.b16 %v200
    %v528 = vunpack.c.l.b16 %v201
    %v529 = vpack.c.b16 %v386, %v385
    %v530 = vpack.c.b16 %v388, %v387
    %v531 = vpack.c.b16 %v390, %v389
    %v532 = vpack.c.b16 %v392, %v391
    %v533 = vpack.c.b16 %v394, %v393
    %v534 = vpack.c.b16 %v396, %v395
    %v535 = vpack.c.b16 %v398, %v397
    %v536 = vpack.c.b16 %v400, %v399
    %v537 = vpack.c.b16 %v402, %v401
    %v538 = vpack.c.b16 %v404, %v403
    %v539 = vpack.c.b16 %v406, %v405
    %v540 = vpack.c.b16 %v408, %v407
    %v541 = vpack.c.b16 %v410, %v409
    %v542 = vpack.c.b16 %v412, %v411
    %v543 = vpack.c.b16 %v414, %v413
    %v544 = vpack.c.b16 %v416, %v415
    %v545 = vpack.c.b16 %v418, %v417
    %v546 = vpack.c.b16 %v420, %v419
    %v547 = vpack.c.b16 %v422, %v421
    %v548 = vpack.c.b16 %v424, %v423
    %v549 = vpack.c.b16 %v426, %v425
    %v550 = vpack.c.b16 %v428, %v427
    %v551 = vpack.c.b16 %v430, %v429
    %v552 = vpack.c.b16 %v432, %v431
    %v553 = vpack.c.b16 %v434, %v433
    %v554 = vpack.c.b16 %v436, %v435
    %v555 = vpack.c.b16 %v438, %v437
    %v556 = vpack.c.b16 %v440, %v439
    %v557 = vpack.c.b16 %v442, %v441
    %v558 = vpack.c.b16 %v444, %v443
    %v559 = vpack.c.b16 %v446, %v445
    %v560 = vpack.c.b16 %v448, %v447
    %v561 = vpack.c.b16 %v450, %v449
    %v562 = vpack.c.b16 %v452, %v451
    %v563 = vpack.c.b16 %v454, %v453
    %v564 = vpack.c.b16 %v456, %v455
    %v565 = vpack.c.b16 %v458, %v457
    %v566 = vpack.c.b16 %v460, %v459
    %v567 = vpack.c.b16 %v462, %v461
    %v568 = vpack.c.b16 %v464, %v463
    %v569 = vpack.c.b16 %v466, %v465
    %v570 = vpack.c.b16 %v468, %v467
    %v571 = vpack.c.b16 %v470, %v469
    %v572 = vpack.c.b16 %v472, %v471
    %v573 = vpack.c.b16 %v474, %v473
    %v574 = vpack.c.b16 %v476, %v475
    %v575 = vpack.c.b16 %v478, %v477
    %v576 = vpack.c.b16 %v480, %v479
    %v577 = vpack.c.b16 %v482, %v481
    %v578 = vpack.c.b16 %v484, %v483
    %v579 = vpack.c.b16 %v486, %v485
    %v580 = vpack.c.b16 %v488, %v487
    %v581 = vpack.c.b16 %v490, %v489
    %v582 = vpack.c.b16 %v492, %v491
    %v583 = vpack.c.b16 %v494, %v493
    %v584 = vpack.c.b16 %v496, %v495
    %v585 = vpack.c.b16 %v498, %v497
    %v586 = vpack.c.b16 %v500, %v499
    %v587 = vpack.c.b16 %v502, %v501
    %v588 = vpack.c.b16 %v504, %v503
    %v589 = vpack.c.b16 %v506, %v505
    %v590 = vpack.c.b16 %v508, %v507
    %v591 = vpack.c.b16 %v510, %v509
    %v592 = vpack.c.b16 %v512, %v511
    %v593 = vpack.c.b16 %v514, %v513
    %v594 = vpack.c.b16 %v516, %v515
    %v595 = vpack.c.b16 %v518, %v517
    %v596 = vpack.c.b16 %v520, %v519
    %v597 = vpack.c.b16 %v522, %v521
    %v598 = vpack.c.b16 %v524, %v523
    %v599 = vpack.c.b16 %v526, %v525
    %v600 = vpack.c.b16 %v528, %v527
    %673 = vmatprep.subr.bf16.mxu0 0
    %674 = vmatpush1.bf16.msra.mxu0 %v529
    %675 = vmatprep.subr.bf16.mxu0 0
    %676 = vmatpush1.bf16.msra.mxu0 %v530
    %677 = vmatprep.subr.bf16.mxu0 0
    %678 = vmatpush1.bf16.msra.mxu0 %v531
    %679 = vmatprep.subr.bf16.mxu0 0
    %680 = vmatpush1.bf16.msra.mxu0 %v532
    %681 = vmatprep.subr.bf16.mxu0 0
    %682 = vmatpush1.bf16.msra.mxu0 %v533
    %683 = vmatprep.subr.bf16.mxu0 0
    %684 = vmatpush1.bf16.msra.mxu0 %v534
    %685 = vmatprep.subr.bf16.mxu0 0
    %686 = vmatpush1.bf16.msra.mxu0 %v535
    %687 = vmatprep.subr.bf16.mxu0 0
    %688 = vmatpush1.bf16.msra.mxu0 %v536
    %689 = vmatprep.subr.bf16.mxu0 0
    %690 = vmatpush1.bf16.msra.mxu0 %v537
    %691 = vmatprep.subr.bf16.mxu0 0
    %692 = vmatpush1.bf16.msra.mxu0 %v538
    %693 = vmatprep.subr.bf16.mxu0 0
    %694 = vmatpush1.bf16.msra.mxu0 %v539
    %695 = vmatprep.subr.bf16.mxu0 0
    %696 = vmatpush1.bf16.msra.mxu0 %v540
    %697 = vmatprep.subr.bf16.mxu0 0
    %698 = vmatpush1.bf16.msra.mxu0 %v541
    %699 = vmatprep.subr.bf16.mxu0 0
    %700 = vmatpush1.bf16.msra.mxu0 %v542
    %701 = vmatprep.subr.bf16.mxu0 0
    %702 = vmatpush1.bf16.msra.mxu0 %v543
    %703 = vmatprep.subr.bf16.mxu0 0
    %704 = vmatpush1.bf16.msra.mxu0 %v544
    %705 = vmatprep.mubr.bf16.mxu0 %v224
    %706 = vmatmul.mubr.bf16.gmra.mrb[0].mxu0 %v223
    %v707 = vpop.f32.mrb[0].mxu0
    %v708 = vadd.f32 %v207, %v707
    %v709 = vpop.f32.mrb[0].mxu0
    %v710 = vpop.f32.mrb[0].mxu0
    %v711 = vpop.f32.mrb[0].mxu0
    %712 = vdwg.mxu0
    %713 = vmatprep.subr.bf16.mxu0 0
    %714 = vmatpush1.bf16.msra.mxu0 %v545
    %715 = vmatprep.subr.bf16.mxu0 0
    %716 = vmatpush1.bf16.msra.mxu0 %v546
    %717 = vmatprep.subr.bf16.mxu0 0
    %718 = vmatpush1.bf16.msra.mxu0 %v547
    %719 = vmatprep.subr.bf16.mxu0 0
    %720 = vmatpush1.bf16.msra.mxu0 %v548
    %721 = vmatprep.subr.bf16.mxu0 0
    %722 = vmatpush1.bf16.msra.mxu0 %v549
    %723 = vmatprep.subr.bf16.mxu0 0
    %724 = vmatpush1.bf16.msra.mxu0 %v550
    %725 = vmatprep.subr.bf16.mxu0 0
    %726 = vmatpush1.bf16.msra.mxu0 %v551
    %727 = vmatprep.subr.bf16.mxu0 0
    %728 = vmatpush1.bf16.msra.mxu0 %v552
    %729 = vmatprep.subr.bf16.mxu0 0
    %730 = vmatpush1.bf16.msra.mxu0 %v553
    %731 = vmatprep.subr.bf16.mxu0 0
    %732 = vmatpush1.bf16.msra.mxu0 %v554
    %733 = vmatprep.subr.bf16.mxu0 0
    %734 = vmatpush1.bf16.msra.mxu0 %v555
    %735 = vmatprep.subr.bf16.mxu0 0
    %736 = vmatpush1.bf16.msra.mxu0 %v556
    %737 = vmatprep.subr.bf16.mxu0 0
    %738 = vmatpush1.bf16.msra.mxu0 %v557
    %739 = vmatprep.subr.bf16.mxu0 0
    %740 = vmatpush1.bf16.msra.mxu0 %v558
    %741 = vmatprep.subr.bf16.mxu0 0
    %742 = vmatpush1.bf16.msra.mxu0 %v559
    %743 = vmatprep.subr.bf16.mxu0 0
    %744 = vmatpush1.bf16.msra.mxu0 %v560
    %745 = vmatprep.mubr.bf16.mxu0 %v226
    %746 = vmatmul.mubr.bf16.gmra.mrb[0].mxu0 %v225
    %v747 = vpop.f32.mrb[0].mxu0
    %v748 = vadd.f32 %v708, %v747
    %v749 = vpop.f32.mrb[0].mxu0
    %v750 = vpop.f32.mrb[0].mxu0
    %v751 = vpop.f32.mrb[0].mxu0
    %752 = vdwg.mxu0
    %753 = vmatprep.subr.bf16.mxu0 0
    %754 = vmatpush1.bf16.msra.mxu0 %v561
    %755 = vmatprep.subr.bf16.mxu0 0
    %756 = vmatpush1.bf16.msra.mxu0 %v562
    %757 = vmatprep.subr.bf16.mxu0 0
    %758 = vmatpush1.bf16.msra.mxu0 %v563
    %759 = vmatprep.subr.bf16.mxu0 0
    %760 = vmatpush1.bf16.msra.mxu0 %v564
    %761 = vmatprep.subr.bf16.mxu0 0
    %762 = vmatpush1.bf16.msra.mxu0 %v565
    %763 = vmatprep.subr.bf16.mxu0 0
    %764 = vmatpush1.bf16.msra.mxu0 %v566
    %765 = vmatprep.subr.bf16.mxu0 0
    %766 = vmatpush1.bf16.msra.mxu0 %v567
    %767 = vmatprep.subr.bf16.mxu0 0
    %768 = vmatpush1.bf16.msra.mxu0 %v568
    %769 = vmatprep.subr.bf16.mxu0 0
    %770 = vmatpush1.bf16.msra.mxu0 %v569
    %771 = vmatprep.subr.bf16.mxu0 0
    %772 = vmatpush1.bf16.msra.mxu0 %v570
    %773 = vmatprep.subr.bf16.mxu0 0
    %774 = vmatpush1.bf16.msra.mxu0 %v571
    %775 = vmatprep.subr.bf16.mxu0 0
    %776 = vmatpush1.bf16.msra.mxu0 %v572
    %777 = vmatprep.subr.bf16.mxu0 0
    %778 = vmatpush1.bf16.msra.mxu0 %v573
    %779 = vmatprep.subr.bf16.mxu0 0
    %780 = vmatpush1.bf16.msra.mxu0 %v574
    %781 = vmatprep.subr.bf16.mxu0 0
    %782 = vmatpush1.bf16.msra.mxu0 %v575
    %783 = vmatprep.subr.bf16.mxu0 0
    %784 = vmatpush1.bf16.msra.mxu0 %v576
    %785 = vmatprep.mubr.bf16.mxu0 %v228
    %786 = vmatmul.mubr.bf16.gmra.mrb[0].mxu0 %v227
    %v787 = vpop.f32.mrb[0].mxu0
    %v788 = vadd.f32 %v748, %v787
    %v789 = vpop.f32.mrb[0].mxu0
    %v790 = vpop.f32.mrb[0].mxu0
    %v791 = vpop.f32.mrb[0].mxu0
    %792 = vdwg.mxu0
    %793 = vmatprep.subr.bf16.mxu0 0
    %794 = vmatpush1.bf16.msra.mxu0 %v577
    %795 = vmatprep.subr.bf16.mxu0 0
    %796 = vmatpush1.bf16.msra.mxu0 %v578
    %797 = vmatprep.subr.bf16.mxu0 0
    %798 = vmatpush1.bf16.msra.mxu0 %v579
    %799 = vmatprep.subr.bf16.mxu0 0
    %800 = vmatpush1.bf16.msra.mxu0 %v580
    %801 = vmatprep.subr.bf16.mxu0 0
    %802 = vmatpush1.bf16.msra.mxu0 %v581
    %803 = vmatprep.subr.bf16.mxu0 0
    %804 = vmatpush1.bf16.msra.mxu0 %v582
    %805 = vmatprep.subr.bf16.mxu0 0
    %806 = vmatpush1.bf16.msra.mxu0 %v583
    %807 = vmatprep.subr.bf16.mxu0 0
    %808 = vmatpush1.bf16.msra.mxu0 %v584
    %809 = vmatprep.subr.bf16.mxu0 0
    %810 = vmatpush1.bf16.msra.mxu0 %v585
    %811 = vmatprep.subr.bf16.mxu0 0
    %812 = vmatpush1.bf16.msra.mxu0 %v586
    %813 = vmatprep.subr.bf16.mxu0 0
    %814 = vmatpush1.bf16.msra.mxu0 %v587
    %815 = vmatprep.subr.bf16.mxu0 0
    %816 = vmatpush1.bf16.msra.mxu0 %v588
    %817 = vmatprep.subr.bf16.mxu0 0
    %818 = vmatpush1.bf16.msra.mxu0 %v589
    %819 = vmatprep.subr.bf16.mxu0 0
    %820 = vmatpush1.bf16.msra.mxu0 %v590
    %821 = vmatprep.subr.bf16.mxu0 0
    %822 = vmatpush1.bf16.msra.mxu0 %v591
    %823 = vmatprep.subr.bf16.mxu0 0
    %824 = vmatpush1.bf16.msra.mxu0 %v592
    %825 = vmatprep.mubr.bf16.mxu0 %v230
    %826 = vmatmul.mubr.bf16.gmra.mrb[0].mxu0 %v229
    %v827 = vpop.f32.mrb[0].mxu0
    %v828 = vadd.f32 %v788, %v827
    %v829 = vpop.f32.mrb[0].mxu0
    %v830 = vpop.f32.mrb[0].mxu0
    %v831 = vpop.f32.mrb[0].mxu0
    %832 = vdwg.mxu0
    %833 = vmatprep.subr.bf16.mxu0 0
    %834 = vmatpush1.bf16.msra.mxu0 %v593
    %835 = vmatprep.subr.bf16.mxu0 0
    %836 = vmatpush1.bf16.msra.mxu0 %v594
    %837 = vmatprep.subr.bf16.mxu0 0
    %838 = vmatpush1.bf16.msra.mxu0 %v595
    %839 = vmatprep.subr.bf16.mxu0 0
    %840 = vmatpush1.bf16.msra.mxu0 %v596
    %841 = vmatprep.subr.bf16.mxu0 0
    %842 = vmatpush1.bf16.msra.mxu0 %v597
    %843 = vmatprep.subr.bf16.mxu0 0
    %844 = vmatpush1.bf16.msra.mxu0 %v598
    %845 = vmatprep.subr.bf16.mxu0 0
    %846 = vmatpush1.bf16.msra.mxu0 %v599
    %847 = vmatprep.subr.bf16.mxu0 0
    %848 = vmatpush1.bf16.msra.mxu0 %v600
    %849 = vmatprep.subr.bf16.mxu0 0
    %850 = vmatpush1.bf16.msra.mxu0 0
    %851 = vmatprep.subr.bf16.mxu0 0
    %852 = vmatpush1.bf16.msra.mxu0 0
    %853 = vmatprep.subr.bf16.mxu0 0
    %854 = vmatpush1.bf16.msra.mxu0 0
    %855 = vmatprep.subr.bf16.mxu0 0
    %856 = vmatpush1.bf16.msra.mxu0 0
    %857 = vmatprep.subr.bf16.mxu0 0
    %858 = vmatpush1.bf16.msra.mxu0 0
    %859 = vmatprep.subr.bf16.mxu0 0
    %860 = vmatpush1.bf16.msra.mxu0 0
    %861 = vmatprep.subr.bf16.mxu0 0
    %862 = vmatpush1.bf16.msra.mxu0 0
    %863 = vmatprep.subr.bf16.mxu0 0
    %864 = vmatpush1.bf16.msra.mxu0 0
    %865 = vmatprep.mubr.bf16.mxu0 0
    %866 = vmatmul.mubr.bf16.gmra.mrb[0].mxu0 %v231
    %v867 = vpop.f32.mrb[0].mxu0
    %v868 = vadd.f32 %v828, %v867
    %v869 = vpop.f32.mrb[0].mxu0
    %v870 = vpop.f32.mrb[0].mxu0
    %v871 = vpop.f32.mrb[0].mxu0
    %872 = vdwg.mxu0
    %vm873 = vcmp.gt.f32.partialorder %v868, 0.0
    %v874 = vmul.f32 %v868, 0.01
    %v875 = vsel %vm873, %v868, %v874
    %v876 = vpack.c.bf16 %v875, %v875
    %877 = vst [vmem:[#allocation8] sm:$0xf] %v876
    // Predicated region
    $region26: #{_lambda_.6} parent=1 // pred_check
      _
    $region27: #{_lambda_.6} parent=1 // pred_check_branch
      %879 = sbr.rel (0) target = $region29
    $region28: #{_lambda_.6} parent=1 // pred_region
      %s881 = ssub.s32 64, 64
      %882 = vsyncadd [#allocation4], %s881
      %s884 = sshll.u32 [#allocation8], 4
      %s885 = int_to_ptr.vmem [resolvable:$true] %s884
      %887 = dma.vmem_to_hbm [thread:$0]  %s885, 64, %s3, [#allocation4]
    $region29: #{_lambda_.6} parent=1 // pred_fallthru
      _
    // Predicated region
    $region30: #{_lambda_.6} parent=1 // pred_check
      _
    $region31: #{_lambda_.6} parent=1 // pred_check_branch
      %889 = sbr.rel (0) target = $region33
    $region32: #{_lambda_.6} parent=1 // pred_region
      %890 = dma.done [#allocation4], 64
    $region33: #{_lambda_.6} parent=1 // pred_fallthru
      _
    %891 = vsyncpa [#allocation3], 1
    %892 = vsyncpa [#allocation6], 1
    %893 = vsyncpa [#allocation4], 1

// kernel: _lambda_.7
$region0: #{_lambda_.7}
  #allocation0 [shape = 'u32[]', space=smem, size = 0x4, offset = 0x4, fixed_abs, tag = 'smem constant byte address 0x4 - core index']
  #allocation1 [shape = 'u32[144,128]{1,0:T(1,128)}', space=vmem, size = 0x12000, scoped, tag = 'internal scratch']
  %s0 = inlined_call_operand.hbm [shape: bf16[8,1152], index: 0, kind: input, shape index: {}]
  %s1 = inlined_call_operand.hbm [shape: bf16[1152,128], index: 1, kind: input, shape index: {}]
  %s2 = inlined_call_operand.hbm [shape: f32[1,128], index: 2, kind: input, shape index: {}]
  %s3 = inlined_call_operand.hbm [shape: bf16[128,128], index: 3, kind: input, shape index: {}]
  %s4 = inlined_call_operand.hbm [shape: f32[1,128], index: 4, kind: input, shape index: {}]
  %s5 = inlined_call_operand.hbm [shape: f32[8,128], index: 5, kind: output, shape index: {}]
  %s6 = sld [smem:[#allocation0]]
  $region50: #{_lambda_.7} parent=0
    _
  %s8 = ssub.s32 1, %s6
  %s9 = scalar_select 0, %s8, %s6
  $region1: #{_lambda_.7} parent=0
    #allocation2 [shape = 'u8[18432]{0}', space=vmem, size = 0x4800, scoped, tag = 'input window, operand 0, single buffered']
    #allocation3 [shape = 's32[1]{0}', space=sflag, size = 0x4, scoped, tag = 'scoped memory for _lambda_.7']
    #allocation4 [shape = 's32[1]{0}', space=sflag, size = 0x4, scoped, tag = 'scoped memory for _lambda_.7']
    #allocation5 [shape = 'u8[294912]{0}', space=vmem, size = 0x48000, scoped, tag = 'input window, operand 1, single buffered']
    #allocation6 [shape = 's32[1]{0}', space=sflag, size = 0x4, scoped, tag = 'scoped memory for _lambda_.7']
    #allocation7 [shape = 'u8[512]{0}', space=vmem, size = 0x400, scoped, tag = 'input window, operand 2, single buffered']
    #allocation8 [shape = 'u8[32768]{0}', space=vmem, size = 0x8000, scoped, tag = 'input window, operand 3, single buffered']
    #allocation9 [shape = 's32[1]{0}', space=sflag, size = 0x4, scoped, tag = 'scoped memory for _lambda_.7']
    #allocation10 [shape = 'u8[512]{0}', space=vmem, size = 0x400, scoped, tag = 'input window, operand 4, single buffered']
    #allocation11 [shape = 'u8[4096]{0}', space=vmem, size = 0x1000, scoped, tag = 'output window, operand 0, single buffered']
    %10 = vsyncpa [#allocation3], 0
    %11 = vsyncpa [#allocation6], 0
    %12 = vsyncpa [#allocation9], 0
    %13 = vsyncpa [#allocation4], 0
    // Predicated region
    $region2: #{_lambda_.7} parent=1 // pred_check
      _
    $region3: #{_lambda_.7} parent=1 // pred_check_branch
      %15 = sbr.rel (0) target = $region5
    $region4: #{_lambda_.7} parent=1 // pred_region
      %s17 = ssub.s32 576, 576
      %18 = vsyncadd [#allocation3], %s17
      %s20 = sshll.u32 [#allocation2], 4
      %s21 = int_to_ptr.vmem [resolvable:$true] %s20
      %23 = dma.hbm_to_vmem [thread:$0]  %s0, 576, %s21, [#allocation3]
    $region5: #{_lambda_.7} parent=1 // pred_fallthru
      _
    // Predicated region
    $region6: #{_lambda_.7} parent=1 // pred_check
      _
    $region7: #{_lambda_.7} parent=1 // pred_check_branch
      %25 = sbr.rel (0) target = $region9
    $region8: #{_lambda_.7} parent=1 // pred_region
      %s27 = ssub.s32 9216, 9216
      %28 = vsyncadd [#allocation6], %s27
      %s29 = sshll.u32 [#allocation5], 4
      %s30 = int_to_ptr.vmem [resolvable:$true] %s29
      %35 = dma.hbm_to_vmem [thread:$0]  %s1, 9216, %s30, [#allocation6], 64, 64, 4
    $region9: #{_lambda_.7} parent=1 // pred_fallthru
      _
    // Predicated region
    $region10: #{_lambda_.7} parent=1 // pred_check
      _
    $region11: #{_lambda_.7} parent=1 // pred_check_branch
      %37 = sbr.rel (0) target = $region13
    $region12: #{_lambda_.7} parent=1 // pred_region
      %s39 = ssub.s32 16, 16
      %40 = vsyncadd [#allocation6], %s39
      %s42 = sshll.u32 [#allocation7], 4
      %s43 = int_to_ptr.vmem [resolvable:$true] %s42
      %45 = dma.hbm_to_vmem [thread:$0]  %s2, 16, %s43, [#allocation6]
    $region13: #{_lambda_.7} parent=1 // pred_fallthru
      _
    // Predicated region
    $region14: #{_lambda_.7} parent=1 // pred_check
      _
    $region15: #{_lambda_.7} parent=1 // pred_check_branch
      %47 = sbr.rel (0) target = $region17
    $region16: #{_lambda_.7} parent=1 // pred_region
      %s49 = ssub.s32 1024, 1024
      %50 = vsyncadd [#allocation9], %s49
      %s51 = sshll.u32 [#allocation8], 4
      %s52 = int_to_ptr.vmem [resolvable:$true] %s51
      %57 = dma.hbm_to_vmem [thread:$0]  %s3, 1024, %s52, [#allocation9], 64, 64, 4
    $region17: #{_lambda_.7} parent=1 // pred_fallthru
      _
    // Predicated region
    $region18: #{_lambda_.7} parent=1 // pred_check
      _
    $region19: #{_lambda_.7} parent=1 // pred_check_branch
      %59 = sbr.rel (0) target = $region21
    $region20: #{_lambda_.7} parent=1 // pred_region
      %s61 = ssub.s32 16, 16
      %62 = vsyncadd [#allocation9], %s61
      %s64 = sshll.u32 [#allocation10], 4
      %s65 = int_to_ptr.vmem [resolvable:$true] %s64
      %67 = dma.hbm_to_vmem [thread:$0]  %s4, 16, %s65, [#allocation9]
    $region21: #{_lambda_.7} parent=1 // pred_fallthru
      _
    // Predicated region
    $region22: #{_lambda_.7} parent=1 // pred_check
      _
    $region23: #{_lambda_.7} parent=1 // pred_check_branch
      %69 = sbr.rel (0) target = $region25
    $region24: #{_lambda_.7} parent=1 // pred_region
      %70 = dma.done [#allocation3], 576
    $region25: #{_lambda_.7} parent=1 // pred_fallthru
      _
    // Predicated region
    $region26: #{_lambda_.7} parent=1 // pred_check
      _
    $region27: #{_lambda_.7} parent=1 // pred_check_branch
      %72 = sbr.rel (0) target = $region29
    $region28: #{_lambda_.7} parent=1 // pred_region
      %73 = dma.done [#allocation6], 9216
    $region29: #{_lambda_.7} parent=1 // pred_fallthru
      _
    // Predicated region
    $region30: #{_lambda_.7} parent=1 // pred_check
      _
    $region31: #{_lambda_.7} parent=1 // pred_check_branch
      %75 = sbr.rel (0) target = $region33
    $region32: #{_lambda_.7} parent=1 // pred_region
      %76 = dma.done [#allocation6], 16
    $region33: #{_lambda_.7} parent=1 // pred_fallthru
      _
    // Predicated region
    $region34: #{_lambda_.7} parent=1 // pred_check
      _
    $region35: #{_lambda_.7} parent=1 // pred_check_branch
      %78 = sbr.rel (0) target = $region37
    $region36: #{_lambda_.7} parent=1 // pred_region
      %79 = dma.done [#allocation9], 1024
    $region37: #{_lambda_.7} parent=1 // pred_fallthru
      _
    // Predicated region
    $region38: #{_lambda_.7} parent=1 // pred_check
      _
    $region39: #{_lambda_.7} parent=1 // pred_check_branch
      %81 = sbr.rel (0) target = $region41
    $region40: #{_lambda_.7} parent=1 // pred_region
      %82 = dma.done [#allocation9], 16
    $region41: #{_lambda_.7} parent=1 // pred_fallthru
      _
    %v84 = vld [vmem:[#allocation2] sm:$0xff]
    %v85 = vld [vmem:[#allocation2 + $0x8] sm:$0xff]
    %v86 = vld [vmem:[#allocation2 + $0x10] sm:$0xff]
    %v87 = vld [vmem:[#allocation2 + $0x18] sm:$0xff]
    %v88 = vld [vmem:[#allocation2 + $0x20] sm:$0xf]
    %v89 = vld [vmem:[#allocation5] sm:$0xf]
    %v90 = vld [vmem:[#allocation5 + $0x4] sm:$0xf]
    %v91 = vld [vmem:[#allocation5 + $0x8] sm:$0xf]
    %v92 = vld [vmem:[#allocation5 + $0xc] sm:$0xf]
    %v93 = vld [vmem:[#allocation5 + $0x10] sm:$0xf]
    %v94 = vld [vmem:[#allocation5 + $0x14] sm:$0xf]
    %v95 = vld [vmem:[#allocation5 + $0x18] sm:$0xf]
    %v96 = vld [vmem:[#allocation5 + $0x1c] sm:$0xf]
    %v97 = vld [vmem:[#allocation5 + $0x20] sm:$0xf]
    %v98 = vld [vmem:[#allocation5 + $0x24] sm:$0xf]
    %v99 = vld [vmem:[#allocation5 + $0x28] sm:$0xf]
    %v100 = vld [vmem:[#allocation5 + $0x2c] sm:$0xf]
    %v101 = vld [vmem:[#allocation5 + $0x30] sm:$0xf]
    %v102 = vld [vmem:[#allocation5 + $0x34] sm:$0xf]
    %v103 = vld [vmem:[#allocation5 + $0x38] sm:$0xf]
    %v104 = vld [vmem:[#allocation5 + $0x3c] sm:$0xf]
    %v105 = vld [vmem:[#allocation5 + $0x40] sm:$0xf]
    %v106 = vld [vmem:[#allocation5 + $0x44] sm:$0xf]
    %v107 = vld [vmem:[#allocation5 + $0x48] sm:$0xf]
    %v108 = vld [vmem:[#allocation5 + $0x4c] sm:$0xf]
    %v109 = vld [vmem:[#allocation5 + $0x50] sm:$0xf]
    %v110 = vld [vmem:[#allocation5 + $0x54] sm:$0xf]
    %v111 = vld [vmem:[#allocation5 + $0x58] sm:$0xf]
    %v112 = vld [vmem:[#allocation5 + $0x5c] sm:$0xf]
    %v113 = vld [vmem:[#allocation5 + $0x60] sm:$0xf]
    %v114 = vld [vmem:[#allocation5 + $0x64] sm:$0xf]
    %v115 = vld [vmem:[#allocation5 + $0x68] sm:$0xf]
    %v116 = vld [vmem:[#allocation5 + $0x6c] sm:$0xf]
    %v117 = vld [vmem:[#allocation5 + $0x70] sm:$0xf]
    %v118 = vld [vmem:[#allocation5 + $0x74] sm:$0xf]
    %v119 = vld [vmem:[#allocation5 + $0x78] sm:$0xf]
    %v120 = vld [vmem:[#allocation5 + $0x7c] sm:$0xf]
    %v121 = vld [vmem:[#allocation5 + $0x80] sm:$0xf]
    %v122 = vld [vmem:[#allocation5 + $0x84] sm:$0xf]
    %v123 = vld [vmem:[#allocation5 + $0x88] sm:$0xf]
    %v124 = vld [vmem:[#allocation5 + $0x8c] sm:$0xf]
    %v125 = vld [vmem:[#allocation5 + $0x90] sm:$0xf]
    %v126 = vld [vmem:[#allocation5 + $0x94] sm:$0xf]
    %v127 = vld [vmem:[#allocation5 + $0x98] sm:$0xf]
    %v128 = vld [vmem:[#allocation5 + $0x9c] sm:$0xf]
    %v129 = vld [vmem:[#allocation5 + $0xa0] sm:$0xf]
    %v130 = vld [vmem:[#allocation5 + $0xa4] sm:$0xf]
    %v131 = vld [vmem:[#allocation5 + $0xa8] sm:$0xf]
    %v132 = vld [vmem:[#allocation5 + $0xac] sm:$0xf]
    %v133 = vld [vmem:[#allocation5 + $0xb0] sm:$0xf]
    %v134 = vld [vmem:[#allocation5 + $0xb4] sm:$0xf]
    %v135 = vld [vmem:[#allocation5 + $0xb8] sm:$0xf]
    %v136 = vld [vmem:[#allocation5 + $0xbc] sm:$0xf]
    %v137 = vld [vmem:[#allocation5 + $0xc0] sm:$0xf]
    %v138 = vld [vmem:[#allocation5 + $0xc4] sm:$0xf]
    %v139 = vld [vmem:[#allocation5 + $0xc8] sm:$0xf]
    %v140 = vld [vmem:[#allocation5 + $0xcc] sm:$0xf]
    %v141 = vld [vmem:[#allocation5 + $0xd0] sm:$0xf]
    %v142 = vld [vmem:[#allocation5 + $0xd4] sm:$0xf]
    %v143 = vld [vmem:[#allocation5 + $0xd8] sm:$0xf]
    %v144 = vld [vmem:[#allocation5 + $0xdc] sm:$0xf]
    %v145 = vld [vmem:[#allocation5 + $0xe0] sm:$0xf]
    %v146 = vld [vmem:[#allocation5 + $0xe4] sm:$0xf]
    %v147 = vld [vmem:[#allocation5 + $0xe8] sm:$0xf]
    %v148 = vld [vmem:[#allocation5 + $0xec] sm:$0xf]
    %v149 = vld [vmem:[#allocation5 + $0xf0] sm:$0xf]
    %v150 = vld [vmem:[#allocation5 + $0xf4] sm:$0xf]
    %v151 = vld [vmem:[#allocation5 + $0xf8] sm:$0xf]
    %v152 = vld [vmem:[#allocation5 + $0xfc] sm:$0xf]
    %v153 = vld [vmem:[#allocation5 + $0x100] sm:$0xf]
    %v154 = vld [vmem:[#allocation5 + $0x104] sm:$0xf]
    %v155 = vld [vmem:[#allocation5 + $0x108] sm:$0xf]
    %v156 = vld [vmem:[#allocation5 + $0x10c] sm:$0xf]
    %v157 = vld [vmem:[#allocation5 + $0x110] sm:$0xf]
    %v158 = vld [vmem:[#allocation5 + $0x114] sm:$0xf]
    %v159 = vld [vmem:[#allocation5 + $0x118] sm:$0xf]
    %v160 = vld [vmem:[#allocation5 + $0x11c] sm:$0xf]
    %v161 = vld [vmem:[#allocation5 + $0x120] sm:$0xf]
    %v162 = vld [vmem:[#allocation5 + $0x124] sm:$0xf]
    %v163 = vld [vmem:[#allocation5 + $0x128] sm:$0xf]
    %v164 = vld [vmem:[#allocation5 + $0x12c] sm:$0xf]
    %v165 = vld [vmem:[#allocation5 + $0x130] sm:$0xf]
    %v166 = vld [vmem:[#allocation5 + $0x134] sm:$0xf]
    %v167 = vld [vmem:[#allocation5 + $0x138] sm:$0xf]
    %v168 = vld [vmem:[#allocation5 + $0x13c] sm:$0xf]
    %v169 = vld [vmem:[#allocation5 + $0x140] sm:$0xf]
    %v170 = vld [vmem:[#allocation5 + $0x144] sm:$0xf]
    %v171 = vld [vmem:[#allocation5 + $0x148] sm:$0xf]
    %v172 = vld [vmem:[#allocation5 + $0x14c] sm:$0xf]
    %v173 = vld [vmem:[#allocation5 + $0x150] sm:$0xf]
    %v174 = vld [vmem:[#allocation5 + $0x154] sm:$0xf]
    %v175 = vld [vmem:[#allocation5 + $0x158] sm:$0xf]
    %v176 = vld [vmem:[#allocation5 + $0x15c] sm:$0xf]
    %v177 = vld [vmem:[#allocation5 + $0x160] sm:$0xf]
    %v178 = vld [vmem:[#allocation5 + $0x164] sm:$0xf]
    %v179 = vld [vmem:[#allocation5 + $0x168] sm:$0xf]
    %v180 = vld [vmem:[#allocation5 + $0x16c] sm:$0xf]
    %v181 = vld [vmem:[#allocation5 + $0x170] sm:$0xf]
    %v182 = vld [vmem:[#allocation5 + $0x174] sm:$0xf]
    %v183 = vld [vmem:[#allocation5 + $0x178] sm:$0xf]
    %v184 = vld [vmem:[#allocation5 + $0x17c] sm:$0xf]
    %v185 = vld [vmem:[#allocation5 + $0x180] sm:$0xf]
    %v186 = vld [vmem:[#allocation5 + $0x184] sm:$0xf]
    %v187 = vld [vmem:[#allocation5 + $0x188] sm:$0xf]
    %v188 = vld [vmem:[#allocation5 + $0x18c] sm:$0xf]
    %v189 = vld [vmem:[#allocation5 + $0x190] sm:$0xf]
    %v190 = vld [vmem:[#allocation5 + $0x194] sm:$0xf]
    %v191 = vld [vmem:[#allocation5 + $0x198] sm:$0xf]
    %v192 = vld [vmem:[#allocation5 + $0x19c] sm:$0xf]
    %v193 = vld [vmem:[#allocation5 + $0x1a0] sm:$0xf]
    %v194 = vld [vmem:[#allocation5 + $0x1a4] sm:$0xf]
    %v195 = vld [vmem:[#allocation5 + $0x1a8] sm:$0xf]
    %v196 = vld [vmem:[#allocation5 + $0x1ac] sm:$0xf]
    %v197 = vld [vmem:[#allocation5 + $0x1b0] sm:$0xf]
    %v198 = vld [vmem:[#allocation5 + $0x1b4] sm:$0xf]
    %v199 = vld [vmem:[#allocation5 + $0x1b8] sm:$0xf]
    %v200 = vld [vmem:[#allocation5 + $0x1bc] sm:$0xf]
    %v201 = vld [vmem:[#allocation5 + $0x1c0] sm:$0xf]
    %v202 = vld [vmem:[#allocation5 + $0x1c4] sm:$0xf]
    %v203 = vld [vmem:[#allocation5 + $0x1c8] sm:$0xf]
    %v204 = vld [vmem:[#allocation5 + $0x1cc] sm:$0xf]
    %v205 = vld [vmem:[#allocation5 + $0x1d0] sm:$0xf]
    %v206 = vld [vmem:[#allocation5 + $0x1d4] sm:$0xf]
    %v207 = vld [vmem:[#allocation5 + $0x1d8] sm:$0xf]
    %v208 = vld [vmem:[#allocation5 + $0x1dc] sm:$0xf]
    %v209 = vld [vmem:[#allocation5 + $0x1e0] sm:$0xf]
    %v210 = vld [vmem:[#allocation5 + $0x1e4] sm:$0xf]
    %v211 = vld [vmem:[#allocation5 + $0x1e8] sm:$0xf]
    %v212 = vld [vmem:[#allocation5 + $0x1ec] sm:$0xf]
    %v213 = vld [vmem:[#allocation5 + $0x1f0] sm:$0xf]
    %v214 = vld [vmem:[#allocation5 + $0x1f4] sm:$0xf]
    %v215 = vld [vmem:[#allocation5 + $0x1f8] sm:$0xf]
    %v216 = vld [vmem:[#allocation5 + $0x1fc] sm:$0xf]
    %v217 = vld [vmem:[#allocation5 + $0x200] sm:$0xf]
    %v218 = vld [vmem:[#allocation5 + $0x204] sm:$0xf]
    %v219 = vld [vmem:[#allocation5 + $0x208] sm:$0xf]
    %v220 = vld [vmem:[#allocation5 + $0x20c] sm:$0xf]
    %v221 = vld [vmem:[#allocation5 + $0x210] sm:$0xf]
    %v222 = vld [vmem:[#allocation5 + $0x214] sm:$0xf]
    %v223 = vld [vmem:[#allocation5 + $0x218] sm:$0xf]
    %v224 = vld [vmem:[#allocation5 + $0x21c] sm:$0xf]
    %v225 = vld [vmem:[#allocation5 + $0x220] sm:$0xf]
    %v226 = vld [vmem:[#allocation5 + $0x224] sm:$0xf]
    %v227 = vld [vmem:[#allocation5 + $0x228] sm:$0xf]
    %v228 = vld [vmem:[#allocation5 + $0x22c] sm:$0xf]
    %v229 = vld [vmem:[#allocation5 + $0x230] sm:$0xf]
    %v230 = vld [vmem:[#allocation5 + $0x234] sm:$0xf]
    %v231 = vld [vmem:[#allocation5 + $0x238] sm:$0xf]
    %v232 = vld [vmem:[#allocation5 + $0x23c] sm:$0xf]
    %v233 = vld [vmem:[#allocation7] sm:$0x1]
    %v235 = vlaneseq
    %v236 = vshrl.u32 %v235, 7
    %v237 = vsub.s32 0, %v236
    %v238 = vrot.slane %v233, %v237
    %v245 = vunpack.c.l.b16 %v84
    %v246 = vunpack.c.h.b16 %v84
    %v247 = vunpack.c.l.b16 %v85
    %v248 = vunpack.c.h.b16 %v85
    %v249 = vunpack.c.l.b16 %v86
    %v250 = vunpack.c.h.b16 %v86
    %v251 = vunpack.c.l.b16 %v87
    %v252 = vunpack.c.h.b16 %v87
    %v253 = vunpack.c.l.b16 %v88
    %v254 = vpack.c.b16 %v245, %v245
    %v255 = vpack.c.b16 %v246, %v246
    %v256 = vpack.c.b16 %v247, %v247
    %v257 = vpack.c.b16 %v248, %v248
    %v258 = vpack.c.b16 %v249, %v249
    %v259 = vpack.c.b16 %v250, %v250
    %v260 = vpack.c.b16 %v251, %v251
    %v261 = vpack.c.b16 %v252, %v252
    %v262 = vpack.c.b16 %v253, %v253
    %v416 = vunpack.c.l.b16 %v89
    %v417 = vunpack.c.l.b16 %v90
    %v418 = vunpack.c.l.b16 %v91
    %v419 = vunpack.c.l.b16 %v92
    %v420 = vunpack.c.l.b16 %v93
    %v421 = vunpack.c.l.b16 %v94
    %v422 = vunpack.c.l.b16 %v95
    %v423 = vunpack.c.l.b16 %v96
    %v424 = vunpack.c.l.b16 %v97
    %v425 = vunpack.c.l.b16 %v98
    %v426 = vunpack.c.l.b16 %v99
    %v427 = vunpack.c.l.b16 %v100
    %v428 = vunpack.c.l.b16 %v101
    %v429 = vunpack.c.l.b16 %v102
    %v430 = vunpack.c.l.b16 %v103
    %v431 = vunpack.c.l.b16 %v104
    %v432 = vunpack.c.l.b16 %v105
    %v433 = vunpack.c.l.b16 %v106
    %v434 = vunpack.c.l.b16 %v107
    %v435 = vunpack.c.l.b16 %v108
    %v436 = vunpack.c.l.b16 %v109
    %v437 = vunpack.c.l.b16 %v110
    %v438 = vunpack.c.l.b16 %v111
    %v439 = vunpack.c.l.b16 %v112
    %v440 = vunpack.c.l.b16 %v113
    %v441 = vunpack.c.l.b16 %v114
    %v442 = vunpack.c.l.b16 %v115
    %v443 = vunpack.c.l.b16 %v116
    %v444 = vunpack.c.l.b16 %v117
    %v445 = vunpack.c.l.b16 %v118
    %v446 = vunpack.c.l.b16 %v119
    %v447 = vunpack.c.l.b16 %v120
    %v448 = vunpack.c.l.b16 %v121
    %v449 = vunpack.c.l.b16 %v122
    %v450 = vunpack.c.l.b16 %v123
    %v451 = vunpack.c.l.b16 %v124
    %v452 = vunpack.c.l.b16 %v125
    %v453 = vunpack.c.l.b16 %v126
    %v454 = vunpack.c.l.b16 %v127
    %v455 = vunpack.c.l.b16 %v128
    %v456 = vunpack.c.l.b16 %v129
    %v457 = vunpack.c.l.b16 %v130
    %v458 = vunpack.c.l.b16 %v131
    %v459 = vunpack.c.l.b16 %v132
    %v460 = vunpack.c.l.b16 %v133
    %v461 = vunpack.c.l.b16 %v134
    %v462 = vunpack.c.l.b16 %v135
    %v463 = vunpack.c.l.b16 %v136
    %v464 = vunpack.c.l.b16 %v137
    %v465 = vunpack.c.l.b16 %v138
    %v466 = vunpack.c.l.b16 %v139
    %v467 = vunpack.c.l.b16 %v140
    %v468 = vunpack.c.l.b16 %v141
    %v469 = vunpack.c.l.b16 %v142
    %v470 = vunpack.c.l.b16 %v143
    %v471 = vunpack.c.l.b16 %v144
    %v472 = vunpack.c.l.b16 %v145
    %v473 = vunpack.c.l.b16 %v146
    %v474 = vunpack.c.l.b16 %v147
    %v475 = vunpack.c.l.b16 %v148
    %v476 = vunpack.c.l.b16 %v149
    %v477 = vunpack.c.l.b16 %v150
    %v478 = vunpack.c.l.b16 %v151
    %v479 = vunpack.c.l.b16 %v152
    %v480 = vunpack.c.l.b16 %v153
    %v481 = vunpack.c.l.b16 %v154
    %v482 = vunpack.c.l.b16 %v155
    %v483 = vunpack.c.l.b16 %v156
    %v484 = vunpack.c.l.b16 %v157
    %v485 = vunpack.c.l.b16 %v158
    %v486 = vunpack.c.l.b16 %v159
    %v487 = vunpack.c.l.b16 %v160
    %v488 = vunpack.c.l.b16 %v161
    %v489 = vunpack.c.l.b16 %v162
    %v490 = vunpack.c.l.b16 %v163
    %v491 = vunpack.c.l.b16 %v164
    %v492 = vunpack.c.l.b16 %v165
    %v493 = vunpack.c.l.b16 %v166
    %v494 = vunpack.c.l.b16 %v167
    %v495 = vunpack.c.l.b16 %v168
    %v496 = vunpack.c.l.b16 %v169
    %v497 = vunpack.c.l.b16 %v170
    %v498 = vunpack.c.l.b16 %v171
    %v499 = vunpack.c.l.b16 %v172
    %v500 = vunpack.c.l.b16 %v173
    %v501 = vunpack.c.l.b16 %v174
    %v502 = vunpack.c.l.b16 %v175
    %v503 = vunpack.c.l.b16 %v176
    %v504 = vunpack.c.l.b16 %v177
    %v505 = vunpack.c.l.b16 %v178
    %v506 = vunpack.c.l.b16 %v179
    %v507 = vunpack.c.l.b16 %v180
    %v508 = vunpack.c.l.b16 %v181
    %v509 = vunpack.c.l.b16 %v182
    %v510 = vunpack.c.l.b16 %v183
    %v511 = vunpack.c.l.b16 %v184
    %v512 = vunpack.c.l.b16 %v185
    %v513 = vunpack.c.l.b16 %v186
    %v514 = vunpack.c.l.b16 %v187
    %v515 = vunpack.c.l.b16 %v188
    %v516 = vunpack.c.l.b16 %v189
    %v517 = vunpack.c.l.b16 %v190
    %v518 = vunpack.c.l.b16 %v191
    %v519 = vunpack.c.l.b16 %v192
    %v520 = vunpack.c.l.b16 %v193
    %v521 = vunpack.c.l.b16 %v194
    %v522 = vunpack.c.l.b16 %v195
    %v523 = vunpack.c.l.b16 %v196
    %v524 = vunpack.c.l.b16 %v197
    %v525 = vunpack.c.l.b16 %v198
    %v526 = vunpack.c.l.b16 %v199
    %v527 = vunpack.c.l.b16 %v200
    %v528 = vunpack.c.l.b16 %v201
    %v529 = vunpack.c.l.b16 %v202
    %v530 = vunpack.c.l.b16 %v203
    %v531 = vunpack.c.l.b16 %v204
    %v532 = vunpack.c.l.b16 %v205
    %v533 = vunpack.c.l.b16 %v206
    %v534 = vunpack.c.l.b16 %v207
    %v535 = vunpack.c.l.b16 %v208
    %v536 = vunpack.c.l.b16 %v209
    %v537 = vunpack.c.l.b16 %v210
    %v538 = vunpack.c.l.b16 %v211
    %v539 = vunpack.c.l.b16 %v212
    %v540 = vunpack.c.l.b16 %v213
    %v541 = vunpack.c.l.b16 %v214
    %v542 = vunpack.c.l.b16 %v215
    %v543 = vunpack.c.l.b16 %v216
    %v544 = vunpack.c.l.b16 %v217
    %v545 = vunpack.c.l.b16 %v218
    %v546 = vunpack.c.l.b16 %v219
    %v547 = vunpack.c.l.b16 %v220
    %v548 = vunpack.c.l.b16 %v221
    %v549 = vunpack.c.l.b16 %v222
    %v550 = vunpack.c.l.b16 %v223
    %v551 = vunpack.c.l.b16 %v224
    %v552 = vunpack.c.l.b16 %v225
    %v553 = vunpack.c.l.b16 %v226
    %v554 = vunpack.c.l.b16 %v227
    %v555 = vunpack.c.l.b16 %v228
    %v556 = vunpack.c.l.b16 %v229
    %v557 = vunpack.c.l.b16 %v230
    %v558 = vunpack.c.l.b16 %v231
    %v559 = vunpack.c.l.b16 %v232
    %v560 = vpack.c.b16 %v417, %v416
    %v561 = vpack.c.b16 %v419, %v418
    %v562 = vpack.c.b16 %v421, %v420
    %v563 = vpack.c.b16 %v423, %v422
    %v564 = vpack.c.b16 %v425, %v424
    %v565 = vpack.c.b16 %v427, %v426
    %v566 = vpack.c.b16 %v429, %v428
    %v567 = vpack.c.b16 %v431, %v430
    %v568 = vpack.c.b16 %v433, %v432
    %v569 = vpack.c.b16 %v435, %v434
    %v570 = vpack.c.b16 %v437, %v436
    %v571 = vpack.c.b16 %v439, %v438
    %v572 = vpack.c.b16 %v441, %v440
    %v573 = vpack.c.b16 %v443, %v442
    %v574 = vpack.c.b16 %v445, %v444
    %v575 = vpack.c.b16 %v447, %v446
    %v576 = vpack.c.b16 %v449, %v448
    %v577 = vpack.c.b16 %v451, %v450
    %v578 = vpack.c.b16 %v453, %v452
    %v579 = vpack.c.b16 %v455, %v454
    %v580 = vpack.c.b16 %v457, %v456
    %v581 = vpack.c.b16 %v459, %v458
    %v582 = vpack.c.b16 %v461, %v460
    %v583 = vpack.c.b16 %v463, %v462
    %v584 = vpack.c.b16 %v465, %v464
    %v585 = vpack.c.b16 %v467, %v466
    %v586 = vpack.c.b16 %v469, %v468
    %v587 = vpack.c.b16 %v471, %v470
    %v588 = vpack.c.b16 %v473, %v472
    %v589 = vpack.c.b16 %v475, %v474
    %v590 = vpack.c.b16 %v477, %v476
    %v591 = vpack.c.b16 %v479, %v478
    %v592 = vpack.c.b16 %v481, %v480
    %v593 = vpack.c.b16 %v483, %v482
    %v594 = vpack.c.b16 %v485, %v484
    %v595 = vpack.c.b16 %v487, %v486
    %v596 = vpack.c.b16 %v489, %v488
    %v597 = vpack.c.b16 %v491, %v490
    %v598 = vpack.c.b16 %v493, %v492
    %v599 = vpack.c.b16 %v495, %v494
    %v600 = vpack.c.b16 %v497, %v496
    %v601 = vpack.c.b16 %v499, %v498
    %v602 = vpack.c.b16 %v501, %v500
    %v603 = vpack.c.b16 %v503, %v502
    %v604 = vpack.c.b16 %v505, %v504
    %v605 = vpack.c.b16 %v507, %v506
    %v606 = vpack.c.b16 %v509, %v508
    %v607 = vpack.c.b16 %v511, %v510
    %v608 = vpack.c.b16 %v513, %v512
    %v609 = vpack.c.b16 %v515, %v514
    %v610 = vpack.c.b16 %v517, %v516
    %v611 = vpack.c.b16 %v519, %v518
    %v612 = vpack.c.b16 %v521, %v520
    %v613 = vpack.c.b16 %v523, %v522
    %v614 = vpack.c.b16 %v525, %v524
    %v615 = vpack.c.b16 %v527, %v526
    %v616 = vpack.c.b16 %v529, %v528
    %v617 = vpack.c.b16 %v531, %v530
    %v618 = vpack.c.b16 %v533, %v532
    %v619 = vpack.c.b16 %v535, %v534
    %v620 = vpack.c.b16 %v537, %v536
    %v621 = vpack.c.b16 %v539, %v538
    %v622 = vpack.c.b16 %v541, %v540
    %v623 = vpack.c.b16 %v543, %v542
    %v624 = vpack.c.b16 %v545, %v544
    %v625 = vpack.c.b16 %v547, %v546
    %v626 = vpack.c.b16 %v549, %v548
    %v627 = vpack.c.b16 %v551, %v550
    %v628 = vpack.c.b16 %v553, %v552
    %v629 = vpack.c.b16 %v555, %v554
    %v630 = vpack.c.b16 %v557, %v556
    %v631 = vpack.c.b16 %v559, %v558
    %704 = vmatprep.subr.bf16.mxu0 0
    %705 = vmatpush1.bf16.msra.mxu0 %v560
    %706 = vmatprep.subr.bf16.mxu0 0
    %707 = vmatpush1.bf16.msra.mxu0 %v561
    %708 = vmatprep.subr.bf16.mxu0 0
    %709 = vmatpush1.bf16.msra.mxu0 %v562
    %710 = vmatprep.subr.bf16.mxu0 0
    %711 = vmatpush1.bf16.msra.mxu0 %v563
    %712 = vmatprep.subr.bf16.mxu0 0
    %713 = vmatpush1.bf16.msra.mxu0 %v564
    %714 = vmatprep.subr.bf16.mxu0 0
    %715 = vmatpush1.bf16.msra.mxu0 %v565
    %716 = vmatprep.subr.bf16.mxu0 0
    %717 = vmatpush1.bf16.msra.mxu0 %v566
    %718 = vmatprep.subr.bf16.mxu0 0
    %719 = vmatpush1.bf16.msra.mxu0 %v567
    %720 = vmatprep.subr.bf16.mxu0 0
    %721 = vmatpush1.bf16.msra.mxu0 %v568
    %722 = vmatprep.subr.bf16.mxu0 0
    %723 = vmatpush1.bf16.msra.mxu0 %v569
    %724 = vmatprep.subr.bf16.mxu0 0
    %725 = vmatpush1.bf16.msra.mxu0 %v570
    %726 = vmatprep.subr.bf16.mxu0 0
    %727 = vmatpush1.bf16.msra.mxu0 %v571
    %728 = vmatprep.subr.bf16.mxu0 0
    %729 = vmatpush1.bf16.msra.mxu0 %v572
    %730 = vmatprep.subr.bf16.mxu0 0
    %731 = vmatpush1.bf16.msra.mxu0 %v573
    %732 = vmatprep.subr.bf16.mxu0 0
    %733 = vmatpush1.bf16.msra.mxu0 %v574
    %734 = vmatprep.subr.bf16.mxu0 0
    %735 = vmatpush1.bf16.msra.mxu0 %v575
    %736 = vmatprep.mubr.bf16.mxu0 %v255
    %737 = vmatmul.mubr.bf16.gmra.mrb[0].mxu0 %v254
    %v738 = vpop.f32.mrb[0].mxu0
    %v739 = vadd.f32 %v238, %v738
    %v740 = vpop.f32.mrb[0].mxu0
    %v741 = vpop.f32.mrb[0].mxu0
    %v742 = vpop.f32.mrb[0].mxu0
    %743 = vdwg.mxu0
    %744 = vmatprep.subr.bf16.mxu0 0
    %745 = vmatpush1.bf16.msra.mxu0 %v576
    %746 = vmatprep.subr.bf16.mxu0 0
    %747 = vmatpush1.bf16.msra.mxu0 %v577
    %748 = vmatprep.subr.bf16.mxu0 0
    %749 = vmatpush1.bf16.msra.mxu0 %v578
    %750 = vmatprep.subr.bf16.mxu0 0
    %751 = vmatpush1.bf16.msra.mxu0 %v579
    %752 = vmatprep.subr.bf16.mxu0 0
    %753 = vmatpush1.bf16.msra.mxu0 %v580
    %754 = vmatprep.subr.bf16.mxu0 0
    %755 = vmatpush1.bf16.msra.mxu0 %v581
    %756 = vmatprep.subr.bf16.mxu0 0
    %757 = vmatpush1.bf16.msra.mxu0 %v582
    %758 = vmatprep.subr.bf16.mxu0 0
    %759 = vmatpush1.bf16.msra.mxu0 %v583
    %760 = vmatprep.subr.bf16.mxu0 0
    %761 = vmatpush1.bf16.msra.mxu0 %v584
    %762 = vmatprep.subr.bf16.mxu0 0
    %763 = vmatpush1.bf16.msra.mxu0 %v585
    %764 = vmatprep.subr.bf16.mxu0 0
    %765 = vmatpush1.bf16.msra.mxu0 %v586
    %766 = vmatprep.subr.bf16.mxu0 0
    %767 = vmatpush1.bf16.msra.mxu0 %v587
    %768 = vmatprep.subr.bf16.mxu0 0
    %769 = vmatpush1.bf16.msra.mxu0 %v588
    %770 = vmatprep.subr.bf16.mxu0 0
    %771 = vmatpush1.bf16.msra.mxu0 %v589
    %772 = vmatprep.subr.bf16.mxu0 0
    %773 = vmatpush1.bf16.msra.mxu0 %v590
    %774 = vmatprep.subr.bf16.mxu0 0
    %775 = vmatpush1.bf16.msra.mxu0 %v591
    %776 = vmatprep.mubr.bf16.mxu0 %v257
    %777 = vmatmul.mubr.bf16.gmra.mrb[0].mxu0 %v256
    %v778 = vpop.f32.mrb[0].mxu0
    %v779 = vadd.f32 %v739, %v778
    %v780 = vpop.f32.mrb[0].mxu0
    %v781 = vpop.f32.mrb[0].mxu0
    %v782 = vpop.f32.mrb[0].mxu0
    %783 = vdwg.mxu0
    %784 = vmatprep.subr.bf16.mxu0 0
    %785 = vmatpush1.bf16.msra.mxu0 %v592
    %786 = vmatprep.subr.bf16.mxu0 0
    %787 = vmatpush1.bf16.msra.mxu0 %v593
    %788 = vmatprep.subr.bf16.mxu0 0
    %789 = vmatpush1.bf16.msra.mxu0 %v594
    %790 = vmatprep.subr.bf16.mxu0 0
    %791 = vmatpush1.bf16.msra.mxu0 %v595
    %792 = vmatprep.subr.bf16.mxu0 0
    %793 = vmatpush1.bf16.msra.mxu0 %v596
    %794 = vmatprep.subr.bf16.mxu0 0
    %795 = vmatpush1.bf16.msra.mxu0 %v597
    %796 = vmatprep.subr.bf16.mxu0 0
    %797 = vmatpush1.bf16.msra.mxu0 %v598
    %798 = vmatprep.subr.bf16.mxu0 0
    %799 = vmatpush1.bf16.msra.mxu0 %v599
    %800 = vmatprep.subr.bf16.mxu0 0
    %801 = vmatpush1.bf16.msra.mxu0 %v600
    %802 = vmatprep.subr.bf16.mxu0 0
    %803 = vmatpush1.bf16.msra.mxu0 %v601
    %804 = vmatprep.subr.bf16.mxu0 0
    %805 = vmatpush1.bf16.msra.mxu0 %v602
    %806 = vmatprep.subr.bf16.mxu0 0
    %807 = vmatpush1.bf16.msra.mxu0 %v603
    %808 = vmatprep.subr.bf16.mxu0 0
    %809 = vmatpush1.bf16.msra.mxu0 %v604
    %810 = vmatprep.subr.bf16.mxu0 0
    %811 = vmatpush1.bf16.msra.mxu0 %v605
    %812 = vmatprep.subr.bf16.mxu0 0
    %813 = vmatpush1.bf16.msra.mxu0 %v606
    %814 = vmatprep.subr.bf16.mxu0 0
    %815 = vmatpush1.bf16.msra.mxu0 %v607
    %816 = vmatprep.mubr.bf16.mxu0 %v259
    %817 = vmatmul.mubr.bf16.gmra.mrb[0].mxu0 %v258
    %v818 = vpop.f32.mrb[0].mxu0
    %v819 = vadd.f32 %v779, %v818
    %v820 = vpop.f32.mrb[0].mxu0
    %v821 = vpop.f32.mrb[0].mxu0
    %v822 = vpop.f32.mrb[0].mxu0
    %823 = vdwg.mxu0
    %824 = vmatprep.subr.bf16.mxu0 0
    %825 = vmatpush1.bf16.msra.mxu0 %v608
    %826 = vmatprep.subr.bf16.mxu0 0
    %827 = vmatpush1.bf16.msra.mxu0 %v609
    %828 = vmatprep.subr.bf16.mxu0 0
    %829 = vmatpush1.bf16.msra.mxu0 %v610
    %830 = vmatprep.subr.bf16.mxu0 0
    %831 = vmatpush1.bf16.msra.mxu0 %v611
    %832 = vmatprep.subr.bf16.mxu0 0
    %833 = vmatpush1.bf16.msra.mxu0 %v612
    %834 = vmatprep.subr.bf16.mxu0 0
    %835 = vmatpush1.bf16.msra.mxu0 %v613
    %836 = vmatprep.subr.bf16.mxu0 0
    %837 = vmatpush1.bf16.msra.mxu0 %v614
    %838 = vmatprep.subr.bf16.mxu0 0
    %839 = vmatpush1.bf16.msra.mxu0 %v615
    %840 = vmatprep.subr.bf16.mxu0 0
    %841 = vmatpush1.bf16.msra.mxu0 %v616
    %842 = vmatprep.subr.bf16.mxu0 0
    %843 = vmatpush1.bf16.msra.mxu0 %v617
    %844 = vmatprep.subr.bf16.mxu0 0
    %845 = vmatpush1.bf16.msra.mxu0 %v618
    %846 = vmatprep.subr.bf16.mxu0 0
    %847 = vmatpush1.bf16.msra.mxu0 %v619
    %848 = vmatprep.subr.bf16.mxu0 0
    %849 = vmatpush1.bf16.msra.mxu0 %v620
    %850 = vmatprep.subr.bf16.mxu0 0
    %851 = vmatpush1.bf16.msra.mxu0 %v621
    %852 = vmatprep.subr.bf16.mxu0 0
    %853 = vmatpush1.bf16.msra.mxu0 %v622
    %854 = vmatprep.subr.bf16.mxu0 0
    %855 = vmatpush1.bf16.msra.mxu0 %v623
    %856 = vmatprep.mubr.bf16.mxu0 %v261
    %857 = vmatmul.mubr.bf16.gmra.mrb[0].mxu0 %v260
    %v858 = vpop.f32.mrb[0].mxu0
    %v859 = vadd.f32 %v819, %v858
    %v860 = vpop.f32.mrb[0].mxu0
    %v861 = vpop.f32.mrb[0].mxu0
    %v862 = vpop.f32.mrb[0].mxu0
    %863 = vdwg.mxu0
    %864 = vmatprep.subr.bf16.mxu0 0
    %865 = vmatpush1.bf16.msra.mxu0 %v624
    %866 = vmatprep.subr.bf16.mxu0 0
    %867 = vmatpush1.bf16.msra.mxu0 %v625
    %868 = vmatprep.subr.bf16.mxu0 0
    %869 = vmatpush1.bf16.msra.mxu0 %v626
    %870 = vmatprep.subr.bf16.mxu0 0
    %871 = vmatpush1.bf16.msra.mxu0 %v627
    %872 = vmatprep.subr.bf16.mxu0 0
    %873 = vmatpush1.bf16.msra.mxu0 %v628
    %874 = vmatprep.subr.bf16.mxu0 0
    %875 = vmatpush1.bf16.msra.mxu0 %v629
    %876 = vmatprep.subr.bf16.mxu0 0
    %877 = vmatpush1.bf16.msra.mxu0 %v630
    %878 = vmatprep.subr.bf16.mxu0 0
    %879 = vmatpush1.bf16.msra.mxu0 %v631
    %880 = vmatprep.subr.bf16.mxu0 0
    %881 = vmatpush1.bf16.msra.mxu0 0
    %882 = vmatprep.subr.bf16.mxu0 0
    %883 = vmatpush1.bf16.msra.mxu0 0
    %884 = vmatprep.subr.bf16.mxu0 0
    %885 = vmatpush1.bf16.msra.mxu0 0
    %886 = vmatprep.subr.bf16.mxu0 0
    %887 = vmatpush1.bf16.msra.mxu0 0
    %888 = vmatprep.subr.bf16.mxu0 0
    %889 = vmatpush1.bf16.msra.mxu0 0
    %890 = vmatprep.subr.bf16.mxu0 0
    %891 = vmatpush1.bf16.msra.mxu0 0
    %892 = vmatprep.subr.bf16.mxu0 0
    %893 = vmatpush1.bf16.msra.mxu0 0
    %894 = vmatprep.subr.bf16.mxu0 0
    %895 = vmatpush1.bf16.msra.mxu0 0
    %896 = vmatprep.mubr.bf16.mxu0 0
    %897 = vmatmul.mubr.bf16.gmra.mrb[0].mxu0 %v262
    %v898 = vpop.f32.mrb[0].mxu0
    %v899 = vadd.f32 %v859, %v898
    %v900 = vpop.f32.mrb[0].mxu0
    %v901 = vpop.f32.mrb[0].mxu0
    %v902 = vpop.f32.mrb[0].mxu0
    %903 = vdwg.mxu0
    %vm904 = vcmp.gt.f32.partialorder %v899, 0.0
    %v905 = vmul.f32 %v899, 0.01
    %v906 = vsel %vm904, %v899, %v905
    %v907 = vpack.c.bf16 %v906, %v906
    %v908 = vld [vmem:[#allocation8] sm:$0xf]
    %v909 = vld [vmem:[#allocation8 + $0x4] sm:$0xf]
    %v910 = vld [vmem:[#allocation8 + $0x8] sm:$0xf]
    %v911 = vld [vmem:[#allocation8 + $0xc] sm:$0xf]
    %v912 = vld [vmem:[#allocation8 + $0x10] sm:$0xf]
    %v913 = vld [vmem:[#allocation8 + $0x14] sm:$0xf]
    %v914 = vld [vmem:[#allocation8 + $0x18] sm:$0xf]
    %v915 = vld [vmem:[#allocation8 + $0x1c] sm:$0xf]
    %v916 = vld [vmem:[#allocation8 + $0x20] sm:$0xf]
    %v917 = vld [vmem:[#allocation8 + $0x24] sm:$0xf]
    %v918 = vld [vmem:[#allocation8 + $0x28] sm:$0xf]
    %v919 = vld [vmem:[#allocation8 + $0x2c] sm:$0xf]
    %v920 = vld [vmem:[#allocation8 + $0x30] sm:$0xf]
    %v921 = vld [vmem:[#allocation8 + $0x34] sm:$0xf]
    %v922 = vld [vmem:[#allocation8 + $0x38] sm:$0xf]
    %v923 = vld [vmem:[#allocation8 + $0x3c] sm:$0xf]
    %v924 = vld [vmem:[#allocation10] sm:$0x1]
    %v926 = vlaneseq
    %v927 = vshrl.u32 %v926, 7
    %v928 = vsub.s32 0, %v927
    %v929 = vrot.slane %v924, %v928
    %v947 = vunpack.c.l.b16 %v908
    %v948 = vunpack.c.l.b16 %v909
    %v949 = vunpack.c.l.b16 %v910
    %v950 = vunpack.c.l.b16 %v911
    %v951 = vunpack.c.l.b16 %v912
    %v952 = vunpack.c.l.b16 %v913
    %v953 = vunpack.c.l.b16 %v914
    %v954 = vunpack.c.l.b16 %v915
    %v955 = vunpack.c.l.b16 %v916
    %v956 = vunpack.c.l.b16 %v917
    %v957 = vunpack.c.l.b16 %v918
    %v958 = vunpack.c.l.b16 %v919
    %v959 = vunpack.c.l.b16 %v920
    %v960 = vunpack.c.l.b16 %v921
    %v961 = vunpack.c.l.b16 %v922
    %v962 = vunpack.c.l.b16 %v923
    %v963 = vpack.c.b16 %v948, %v947
    %v964 = vpack.c.b16 %v950, %v949
    %v965 = vpack.c.b16 %v952, %v951
    %v966 = vpack.c.b16 %v954, %v953
    %v967 = vpack.c.b16 %v956, %v955
    %v968 = vpack.c.b16 %v958, %v957
    %v969 = vpack.c.b16 %v960, %v959
    %v970 = vpack.c.b16 %v962, %v961
    %979 = vmatprep.subr.bf16.mxu0 0
    %980 = vmatpush1.bf16.msra.mxu0 %v963
    %981 = vmatprep.subr.bf16.mxu0 0
    %982 = vmatpush1.bf16.msra.mxu0 %v964
    %983 = vmatprep.subr.bf16.mxu0 0
    %984 = vmatpush1.bf16.msra.mxu0 %v965
    %985 = vmatprep.subr.bf16.mxu0 0
    %986 = vmatpush1.bf16.msra.mxu0 %v966
    %987 = vmatprep.subr.bf16.mxu0 0
    %988 = vmatpush1.bf16.msra.mxu0 %v967
    %989 = vmatprep.subr.bf16.mxu0 0
    %990 = vmatpush1.bf16.msra.mxu0 %v968
    %991 = vmatprep.subr.bf16.mxu0 0
    %992 = vmatpush1.bf16.msra.mxu0 %v969
    %993 = vmatprep.subr.bf16.mxu0 0
    %994 = vmatpush1.bf16.msra.mxu0 %v970
    %995 = vmatprep.subr.bf16.mxu0 0
    %996 = vmatpush1.bf16.msra.mxu0 0
    %997 = vmatprep.subr.bf16.mxu0 0
    %998 = vmatpush1.bf16.msra.mxu0 0
    %999 = vmatprep.subr.bf16.mxu0 0
    %1000 = vmatpush1.bf16.msra.mxu0 0
    %1001 = vmatprep.subr.bf16.mxu0 0
    %1002 = vmatpush1.bf16.msra.mxu0 0
    %1003 = vmatprep.subr.bf16.mxu0 0
    %1004 = vmatpush1.bf16.msra.mxu0 0
    %1005 = vmatprep.subr.bf16.mxu0 0
    %1006 = vmatpush1.bf16.msra.mxu0 0
    %1007 = vmatprep.subr.bf16.mxu0 0
    %1008 = vmatpush1.bf16.msra.mxu0 0
    %1009 = vmatprep.subr.bf16.mxu0 0
    %1010 = vmatpush1.bf16.msra.mxu0 0
    %1011 = vmatprep.mubr.bf16.mxu0 0
    %1012 = vmatmul.mubr.bf16.gmra.mrb[0].mxu0 %v907
    %v1013 = vpop.f32.mrb[0].mxu0
    %v1014 = vadd.f32 %v929, %v1013
    %v1015 = vpop.f32.mrb[0].mxu0
    %v1016 = vpop.f32.mrb[0].mxu0
    %v1017 = vpop.f32.mrb[0].mxu0
    %1018 = vdwg.mxu0
    %1019 = vst [vmem:[#allocation11] sm:$0xff] %v1014
    // Predicated region
    $region42: #{_lambda_.7} parent=1 // pred_check
      _
    $region43: #{_lambda_.7} parent=1 // pred_check_branch
      %1021 = sbr.rel (0) target = $region45
    $region44: #{_lambda_.7} parent=1 // pred_region
      %s1023 = ssub.s32 128, 128
      %1024 = vsyncadd [#allocation4], %s1023
      %s1026 = sshll.u32 [#allocation11], 4
      %s1027 = int_to_ptr.vmem [resolvable:$true] %s1026
      %1029 = dma.vmem_to_hbm [thread:$0]  %s1027, 128, %s5, [#allocation4]
    $region45: #{_lambda_.7} parent=1 // pred_fallthru
      _
    // Predicated region
    $region46: #{_lambda_.7} parent=1 // pred_check
      _
    $region47: #{_lambda_.7} parent=1 // pred_check_branch
      %1031 = sbr.rel (0) target = $region49
    $region48: #{_lambda_.7} parent=1 // pred_region
      %1032 = dma.done [#allocation4], 128
    $region49: #{_lambda_.7} parent=1 // pred_fallthru
      _
    %1033 = vsyncpa [#allocation3], 1
    %1034 = vsyncpa [#allocation6], 1
    %1035 = vsyncpa [#allocation9], 1
    %1036 = vsyncpa [#allocation4], 1

</llo_original>
